<compile_context>
chip_gen: v5e
topology: v5e:2x2
jax: 0.10.0
libtpu: 0.0.40
codegen_flags: <defaults>
</compile_context>

<pallas_src>
import math
import numpy as np
import jax
import jax.numpy as jnp
from jax.experimental import pallas as pl
from jax.experimental.pallas import tpu as pltpu


# ----------------------------- small helpers ------------------------------- #

def _round_up(n, m):
    return (n + m - 1) // m * m


def _to_lanes(x, lpad):
    """(N, C, H, W) -> (C, lpad) f32: batch+spatial flattened into lanes, zero lane padding."""
    N, C, H, W = x.shape
    flat = jnp.transpose(x, (1, 0, 2, 3)).reshape(C, N * H * W).astype(jnp.float32)
    return jnp.pad(flat, ((0, 0), (0, lpad - N * H * W)))


def _from_lanes(y, N, C, H, W):
    """(C, lpad) -> (N, C, H, W)."""
    return jnp.transpose(y[:, :N * H * W].reshape(C, N, H, W), (1, 0, 2, 3))


# ----------------------- structured constant tensors ----------------------- #

def _tap_masks_np(H, W, N, lpad):
    """(9, 1, lpad) 0/1 masks.  Tap t=(dy,dx) of a 3x3/pad=1 conv is valid at output pixel (y,x)
    iff its source pixel (y+dy-1, x+dx-1) lies inside the image.  Zero on the lane padding, which
    also kills the cross-image wrap of the lane rolls."""
    yy, xx = np.meshgrid(np.arange(H), np.arange(W), indexing="ij")
    m = np.zeros((9, 1, lpad), np.float32)
    for t in range(9):
        dy, dx = t // 3, t % 3
        valid = ((yy + dy - 1 >= 0) & (yy + dy - 1 < H) &
                 (xx + dx - 1 >= 0) & (xx + dx - 1 < W)).reshape(-1).astype(np.float32)
        m[t, 0, :N * H * W] = np.tile(valid, N)
    return m


def _bilinear_w1d_np(f):
    """1-D factor of fill_up_weights: w2d[i, j] = w1d[i] * w1d[j]."""
    K = 2 * f
    fc = math.ceil(K / 2)
    c = (2 * fc - 1 - fc % 2) / (2.0 * fc)
    return np.array([1.0 - abs(k / fc - c) for k in range(K)], np.float32)


def _upsample_matrix_np(Hi, Wi, f):
    """U (Hi*Wi, OH*OW): y_flat @ U == ConvTranspose2d(o, o, 2f, stride=f, padding=f//2,
    groups=o, bias=False) with fill_up_weights, applied per channel (row-major flattening)."""
    K, pad = 2 * f, f // 2
    w1 = _bilinear_w1d_np(f)
    OH = (Hi - 1) * f - 2 * pad + K
    OW = (Wi - 1) * f - 2 * pad + K

    def interp(n_in, n_out):
        A = np.zeros((n_out, n_in), np.float32)
        for op in range(n_out):
            for ip in range(n_in):
                k = op + pad - ip * f          # exact transposed-conv placement
                if 0 <= k < K:
                    A[op, ip] = w1[k]
        return A

    U = np.kron(interp(Hi, OH), interp(Wi, OW)).T.astype(np.float32)
    return U, OH, OW


# ------------------------------ Pallas kernel ------------------------------ #

def _conv3x3_relu(x, w_ref, b_ref, m_ref, w_img):
    """Zero-offset-DCN 3x3 conv (+ folded-BN bias) + ReLU on lane-flattened activations.

    x:     (Cin, L)       activations in the matmul compute dtype (L = padded N*H*W lanes)
    w_ref: (9, Cout, Cin)  tap-major folded weights
    b_ref: (Cout, 1)       folded bias (f32)
    m_ref: (9, 1, L)       per-tap boundary masks
    w_img: image width W (lane distance between rows)
    Returns (Cout, L) f32.
    """
    L = x.shape[-1]
    acc = None
    for t in range(9):
        dy, dx = t // 3, t % 3
        off = (dy - 1) * w_img + (dx - 1)               # lane offset of this tap's source pixel
        xt = x if off == 0 else pltpu.roll(x, shift=(-off) % L, axis=1)   # XLU lane rotation
        xt = xt * m_ref[t]                              # zero taps whose source is off-image
        p = jnp.dot(w_ref[t], xt, preferred_element_type=jnp.float32)     # MXU, f32 accumulate
        acc = p if acc is None else acc + p
    return jnp.maximum(acc + b_ref[...], 0.0)           # f32 bias + ReLU epilogue (v5e-safe)


def _build_fused_kernel(widths_in, width_out, n_steps, compute_dtype):
    """Kernel for the whole IDAUp chain.  Ref order:
       [ skip0 (o,Lo) f32, mask_out (9,1,Lo),
         per step s: x_s, wp_s, bp_s, up_s, wn_s, bn_s, min_s,
         out_0 .. out_{n_steps-1} ]"""
    n_in = 2 + 7 * n_steps

    def kernel(*refs):
        mout_ref = refs[1]
        out_refs = refs[n_in:]
        skip = refs[0][...]                              # (o, Lo) f32 = layers[startp]
        for s in range(n_steps):
            x_ref, wp_ref, bp_ref, up_ref, wn_ref, bn_ref, min_ref = \
                refs[2 + 7 * s: 2 + 7 * (s + 1)]
            # proj DeformConv (zero-offset DCN 3x3 + folded BN + ReLU)
            x = x_ref[...].astype(compute_dtype)
            y = _conv3x3_relu(x, wp_ref, bp_ref, min_ref, widths_in[s])
            # bilinear depthwise ConvTranspose2d == one interpolation matmul (batch block-diag U)
            z = jnp.dot(y.astype(compute_dtype), up_ref[...],
                        preferred_element_type=jnp.float32)
            # skip add (stays in VMEM) + node DeformConv
            h = z + skip
            out = _conv3x3_relu(h.astype(compute_dtype), wn_ref, bn_ref, mout_ref, width_out)
            out_refs[s][...] = out
            skip = out                                   # next step's skip, no HBM round trip
    return kernel


# --------------------------------- module ---------------------------------- #

class IDAUpPallas:
    """Pallas port of IDAUp: layers[i] = node(up(proj(layers[i])) + layers[i-1])."""

    def __init__(self, o, channels, up_f, key, eps=1e-5):
        self.o = o
        self.params = {}
        self._const_cache = {}    # (Hi, Wi, f, N) -> dict of numpy constants
        for i in range(1, len(channels)):
            c = channels[i]
            f = int(up_f[i])
            key, k1, k2, k3, k4 = jax.random.split(key, 5)
            proj_w = jax.random.normal(k1, (9, o, c), jnp.float32) * 0.1   # tap-major 3x3 weights
            proj_cb = jax.random.normal(k2, (o,), jnp.float32) * 0.1
            node_w = jax.random.normal(k3, (9, o, o), jnp.float32) * 0.1
            node_cb = jax.random.normal(k4, (o,), jnp.float32) * 0.1
            # BatchNorm2d (inference stats), folded into the conv parameters at build time.
            gamma = jnp.linspace(0.8, 1.2, o, dtype=jnp.float32)
            beta = jnp.linspace(-0.05, 0.05, o, dtype=jnp.float32)
            mean = jnp.zeros((o,), jnp.float32)
            var = jnp.ones((o,), jnp.float32)
            scale = gamma / jnp.sqrt(var + eps)
            self.params[i] = dict(
                f=f,
                wp=proj_w * scale[None, :, None],
                bp=(beta + scale * (proj_cb - mean)).reshape(o, 1),
                wn=node_w * scale[None, :, None],
                bn=(beta + scale * (node_cb - mean)).reshape(o, 1),
            )

    def _step_constants(self, Hi, Wi, f, N):
        """Boundary masks + batched interpolation matrix for one step geometry (numpy, cached)."""
        key = (Hi, Wi, f, N)
        if key not in self._const_cache:
            U, OH, OW = _upsample_matrix_np(Hi, Wi, f)
            li = _round_up(N * Hi * Wi, 128)             # lane-padded input / output widths
            lo = _round_up(N * OH * OW, 128)
            Ub = np.zeros((li, lo), np.float32)          # block-diagonal over batch; zero rows/
            for n in range(N):                           # cols on the lane padding
                Ub[n * Hi * Wi:(n + 1) * Hi * Wi, n * OH * OW:(n + 1) * OH * OW] = U
            self._const_cache[key] = dict(
                mask_in=_tap_masks_np(Hi, Wi, N, li),
                up=Ub,
                mask_out=_tap_masks_np(OH, OW, N, lo),
                OH=OH, OW=OW, li=li, lo=lo,
            )
        return self._const_cache[key]

    def __call__(self, layers, startp, endp, compute_dtype=jnp.bfloat16):
        """Run the fused IDAUp chain.  layers: list of NCHW arrays.  Returns the updated list."""
        layers = list(layers)
        steps = list(range(startp + 1, endp))
        if not steps:
            return layers
        o, cdt = self.o, compute_dtype
        N = layers[startp].shape[0]

        widths_in, step_args = [], []
        OH = OW = Lo = None
        mask_out = None
        for i in steps:
            p = self.params[i - startp]
            x = layers[i]
            _, Ci, Hi, Wi = x.shape
            g = self._step_constants(Hi, Wi, p["f"], N)
            if OH is None:
                OH, OW, Lo = g["OH"], g["OW"], g["lo"]
                mask_out = jnp.asarray(g["mask_out"], cdt)
                assert layers[startp].shape == (N, o, OH, OW), \
                    (layers[startp].shape, (N, o, OH, OW))
            assert (g["OH"], g["OW"]) == (OH, OW), \
                "every IDAUp step must upsample to layers[startp]'s spatial size"
            widths_in.append(Wi)
            step_args += [
                _to_lanes(x, g["li"]),                 # x_s      (Ci, Li) f32
                jnp.asarray(p["wp"], cdt),             # wp_s     (9, o, Ci)  BN folded
                p["bp"],                               # bp_s     (o, 1)      f32
                jnp.asarray(g["up"], cdt),             # up_s     (Li, Lo)    bilinear interp
                jnp.asarray(p["wn"], cdt),             # wn_s     (9, o, o)   BN folded
                p["bn"],                               # bn_s     (o, 1)      f32
                jnp.asarray(g["mask_in"], cdt),        # min_s    (9, 1, Li)  tap masks
            ]

        kernel = _build_fused_kernel(tuple(widths_in), OW, len(steps), cdt)
        outs = pl.pallas_call(
            kernel,
            out_shape=tuple(jax.ShapeDtypeStruct((o, Lo), jnp.float32) for _ in steps),
        )(_to_lanes(layers[startp], Lo), mask_out, *step_args)
        if not isinstance(outs, (tuple, list)):
            outs = (outs,)
        for s, i in enumerate(steps):
            layers[i] = _from_lanes(outs[s], N, o, OH, OW)
        return layers

    # ---------- pure-JAX (XLA) reference of the same forward pass ---------- #
    def reference(self, layers, startp, endp):
        layers = list(layers)
        for i in range(startp + 1, endp):
            p = self.params[i - startp]
            y = _conv3x3_ref(layers[i], p["wp"], p["bp"])
            z = _bilinear_convT_ref(y, p["f"])
            layers[i] = _conv3x3_ref(z + layers[i - 1], p["wn"], p["bn"])
        return layers


def _conv3x3_ref(x, w_tap, bias):
    o, ci = w_tap.shape[1], w_tap.shape[2]
    w = jnp.transpose(w_tap.reshape(3, 3, o, ci), (2, 3, 0, 1))   # OIHW
    y = jax.lax.conv_general_dilated(
        x, w, window_strides=(1, 1), padding=[(1, 1), (1, 1)],
        dimension_numbers=("NCHW", "OIHW", "NCHW"),
        precision=jax.lax.Precision.HIGHEST)
    return jnp.maximum(y + bias.reshape(1, o, 1, 1), 0.0)


def _bilinear_convT_ref(x, f):
    N, C, H, W = x.shape
    K, pad = 2 * f, f // 2
    w1 = _bilinear_w1d_np(f)
    w2 = np.outer(w1, w1)
    full = jnp.zeros((N, C, (H - 1) * f + K, (W - 1) * f + K), x.dtype)
    for ky in range(K):
        for kx in range(K):
            full = full.at[:, :, ky:ky + (H - 1) * f + 1:f,
                                 kx:kx + (W - 1) * f + 1:f].add(x * float(w2[ky, kx]))
    OH = (H - 1) * f - 2 * pad + K
    OW = (W - 1) * f - 2 * pad + K
    return full[:, :, pad:pad + OH, pad:pad + OW]


# ----------------------------------- main ----------------------------------- #

if __name__ == "__main__":
    key = jax.random.PRNGKey(0)
    o = 4
    channels = [4, 8, 16]
    up_f = [1, 2, 4]
    N = 2

    kp, k0, k1, k2 = jax.random.split(key, 4)
    # NCHW inputs (small DLA-style pyramid), matching the PyTorch reference layout.
    layers = [
        jax.random.normal(k0, (N, channels[0], 16, 16), jnp.float32),
        jax.random.normal(k1, (N, channels[1], 8, 8), jnp.float32),
        jax.random.normal(k2, (N, channels[2], 4, 4), jnp.float32),
    ]

    ida = IDAUpPallas(o, channels, up_f, kp)
    ref = ida.reference(layers, startp=0, endp=len(channels))

    # f32 compute path: tight tolerance (review: old 5e-2 was far looser than the actual error).
    out_f32 = ida(layers, startp=0, endp=len(channels), compute_dtype=jnp.float32)
    for t in out_f32:
        jax.block_until_ready(t)
    assert out_f32[1].shape == (N, o, 16, 16)
    assert out_f32[2].shape == (N, o, 16, 16)
    for a, b in zip(out_f32[1:], ref[1:]):
        np.testing.assert_allclose(np.asarray(a), np.asarray(b), rtol=1e-3, atol=1e-3)

    # default bf16-MXU-operand path (f32 accumulation + f32 epilogue): tolerance sized for bf16
    # operand rounding through two conv stages (~1e-2 expected worst case).
    out_bf16 = ida(layers, startp=0, endp=len(channels))
    for t in out_bf16:
        jax.block_until_ready(t)
    for a, b in zip(out_bf16[1:], ref[1:]):
        np.testing.assert_allclose(np.asarray(a), np.asarray(b), rtol=5e-2, atol=5e-2)

    print("KERNEL_OK")
</pallas_src>

<mosaic_0001>
module attributes {stable_mosaic.version = 11 : i64} {
  func.func @kernel(%arg0: memref<4x512xf32, #tpu.memory_space<vmem>>, %arg1: memref<9x1x512xf32, #tpu.memory_space<vmem>>, %arg2: memref<8x128xf32, #tpu.memory_space<vmem>>, %arg3: memref<9x4x8xf32, #tpu.memory_space<vmem>>, %arg4: memref<4x1xf32, #tpu.memory_space<vmem>>, %arg5: memref<128x512xf32, #tpu.memory_space<vmem>>, %arg6: memref<9x4x4xf32, #tpu.memory_space<vmem>>, %arg7: memref<4x1xf32, #tpu.memory_space<vmem>>, %arg8: memref<9x1x128xf32, #tpu.memory_space<vmem>>, %arg9: memref<16x128xf32, #tpu.memory_space<vmem>>, %arg10: memref<9x4x16xf32, #tpu.memory_space<vmem>>, %arg11: memref<4x1xf32, #tpu.memory_space<vmem>>, %arg12: memref<128x512xf32, #tpu.memory_space<vmem>>, %arg13: memref<9x4x4xf32, #tpu.memory_space<vmem>>, %arg14: memref<4x1xf32, #tpu.memory_space<vmem>>, %arg15: memref<9x1x128xf32, #tpu.memory_space<vmem>>, %arg16: memref<4x512xf32, #tpu.memory_space<vmem>>, %arg17: memref<4x512xf32, #tpu.memory_space<vmem>>) attributes {dimension_semantics = [], scalar_prefetch = 0 : i64, scratch_operands = 0 : i64, tpu.core_type = #tpu.core_type<tc>} {
    %c0 = arith.constant 0 : index
    %c0_0 = arith.constant 0 : index
    %0 = vector.load %arg0[%c0, %c0_0] : memref<4x512xf32, #tpu.memory_space<vmem>>, vector<4x512xf32>
    %c0_1 = arith.constant 0 : index
    %c0_2 = arith.constant 0 : index
    %1 = vector.load %arg2[%c0_1, %c0_2] : memref<8x128xf32, #tpu.memory_space<vmem>>, vector<8x128xf32>
    %c9_i32 = arith.constant 9 : i32
    %2 = tpu.dynamic_rotate %1 by %c9_i32 dim 1 : vector<8x128xf32>, i32 -> vector<8x128xf32>
    %c0_3 = arith.constant 0 : index
    %c0_4 = arith.constant 0 : index
    %c0_5 = arith.constant 0 : index
    %3 = vector.load %arg8[%c0_3, %c0_4, %c0_5] : memref<9x1x128xf32, #tpu.memory_space<vmem>>, vector<1x1x128xf32>
    %4 = vector.shape_cast %3 : vector<1x1x128xf32> to vector<1x128xf32>
    %5 = vector.broadcast %4 : vector<1x128xf32> to vector<8x128xf32>
    %6 = arith.mulf %2, %5 : vector<8x128xf32>
    %c0_6 = arith.constant 0 : index
    %c0_7 = arith.constant 0 : index
    %c0_8 = arith.constant 0 : index
    %7 = vector.load %arg3[%c0_6, %c0_7, %c0_8] : memref<9x4x8xf32, #tpu.memory_space<vmem>>, vector<1x4x8xf32>
    %8 = vector.shape_cast %7 : vector<1x4x8xf32> to vector<4x8xf32>
    %cst = arith.constant dense<0.000000e+00> : vector<4x128xf32>
    %9 = tpu.matmul %8, %6, %cst {dimension_numbers = #tpu.dot_dimension_numbers<[1], [0], [0], [1], [0, 0, 1, 1], [], []>} : vector<4x8xf32>, vector<8x128xf32>, vector<4x128xf32> -> vector<4x128xf32>
    %c8_i32 = arith.constant 8 : i32
    %10 = tpu.dynamic_rotate %1 by %c8_i32 dim 1 : vector<8x128xf32>, i32 -> vector<8x128xf32>
    %c1 = arith.constant 1 : index
    %c0_9 = arith.constant 0 : index
    %c0_10 = arith.constant 0 : index
    %11 = vector.load %arg8[%c1, %c0_9, %c0_10] : memref<9x1x128xf32, #tpu.memory_space<vmem>>, vector<1x1x128xf32>
    %12 = vector.shape_cast %11 : vector<1x1x128xf32> to vector<1x128xf32>
    %13 = vector.broadcast %12 : vector<1x128xf32> to vector<8x128xf32>
    %14 = arith.mulf %10, %13 : vector<8x128xf32>
    %c1_11 = arith.constant 1 : index
    %c0_12 = arith.constant 0 : index
    %c0_13 = arith.constant 0 : index
    %15 = vector.load %arg3[%c1_11, %c0_12, %c0_13] : memref<9x4x8xf32, #tpu.memory_space<vmem>>, vector<1x4x8xf32>
    %16 = vector.shape_cast %15 : vector<1x4x8xf32> to vector<4x8xf32>
    %cst_14 = arith.constant dense<0.000000e+00> : vector<4x128xf32>
    %17 = tpu.matmul %16, %14, %cst_14 {dimension_numbers = #tpu.dot_dimension_numbers<[1], [0], [0], [1], [0, 0, 1, 1], [], []>} : vector<4x8xf32>, vector<8x128xf32>, vector<4x128xf32> -> vector<4x128xf32>
    %18 = arith.addf %9, %17 : vector<4x128xf32>
    %c7_i32 = arith.constant 7 : i32
    %19 = tpu.dynamic_rotate %1 by %c7_i32 dim 1 : vector<8x128xf32>, i32 -> vector<8x128xf32>
    %c2 = arith.constant 2 : index
    %c0_15 = arith.constant 0 : index
    %c0_16 = arith.constant 0 : index
    %20 = vector.load %arg8[%c2, %c0_15, %c0_16] : memref<9x1x128xf32, #tpu.memory_space<vmem>>, vector<1x1x128xf32>
    %21 = vector.shape_cast %20 : vector<1x1x128xf32> to vector<1x128xf32>
    %22 = vector.broadcast %21 : vector<1x128xf32> to vector<8x128xf32>
    %23 = arith.mulf %19, %22 : vector<8x128xf32>
    %c2_17 = arith.constant 2 : index
    %c0_18 = arith.constant 0 : index
    %c0_19 = arith.constant 0 : index
    %24 = vector.load %arg3[%c2_17, %c0_18, %c0_19] : memref<9x4x8xf32, #tpu.memory_space<vmem>>, vector<1x4x8xf32>
    %25 = vector.shape_cast %24 : vector<1x4x8xf32> to vector<4x8xf32>
    %cst_20 = arith.constant dense<0.000000e+00> : vector<4x128xf32>
    %26 = tpu.matmul %25, %23, %cst_20 {dimension_numbers = #tpu.dot_dimension_numbers<[1], [0], [0], [1], [0, 0, 1, 1], [], []>} : vector<4x8xf32>, vector<8x128xf32>, vector<4x128xf32> -> vector<4x128xf32>
    %27 = arith.addf %18, %26 : vector<4x128xf32>
    %c1_i32 = arith.constant 1 : i32
    %28 = tpu.dynamic_rotate %1 by %c1_i32 dim 1 : vector<8x128xf32>, i32 -> vector<8x128xf32>
    %c3 = arith.constant 3 : index
    %c0_21 = arith.constant 0 : index
    %c0_22 = arith.constant 0 : index
    %29 = vector.load %arg8[%c3, %c0_21, %c0_22] : memref<9x1x128xf32, #tpu.memory_space<vmem>>, vector<1x1x128xf32>
    %30 = vector.shape_cast %29 : vector<1x1x128xf32> to vector<1x128xf32>
    %31 = vector.broadcast %30 : vector<1x128xf32> to vector<8x128xf32>
    %32 = arith.mulf %28, %31 : vector<8x128xf32>
    %c3_23 = arith.constant 3 : index
    %c0_24 = arith.constant 0 : index
    %c0_25 = arith.constant 0 : index
    %33 = vector.load %arg3[%c3_23, %c0_24, %c0_25] : memref<9x4x8xf32, #tpu.memory_space<vmem>>, vector<1x4x8xf32>
    %34 = vector.shape_cast %33 : vector<1x4x8xf32> to vector<4x8xf32>
    %cst_26 = arith.constant dense<0.000000e+00> : vector<4x128xf32>
    %35 = tpu.matmul %34, %32, %cst_26 {dimension_numbers = #tpu.dot_dimension_numbers<[1], [0], [0], [1], [0, 0, 1, 1], [], []>} : vector<4x8xf32>, vector<8x128xf32>, vector<4x128xf32> -> vector<4x128xf32>
    %36 = arith.addf %27, %35 : vector<4x128xf32>
    %c4 = arith.constant 4 : index
    %c0_27 = arith.constant 0 : index
    %c0_28 = arith.constant 0 : index
    %37 = vector.load %arg8[%c4, %c0_27, %c0_28] : memref<9x1x128xf32, #tpu.memory_space<vmem>>, vector<1x1x128xf32>
    %38 = vector.shape_cast %37 : vector<1x1x128xf32> to vector<1x128xf32>
    %39 = vector.broadcast %38 : vector<1x128xf32> to vector<8x128xf32>
    %40 = arith.mulf %1, %39 : vector<8x128xf32>
    %c4_29 = arith.constant 4 : index
    %c0_30 = arith.constant 0 : index
    %c0_31 = arith.constant 0 : index
    %41 = vector.load %arg3[%c4_29, %c0_30, %c0_31] : memref<9x4x8xf32, #tpu.memory_space<vmem>>, vector<1x4x8xf32>
    %42 = vector.shape_cast %41 : vector<1x4x8xf32> to vector<4x8xf32>
    %cst_32 = arith.constant dense<0.000000e+00> : vector<4x128xf32>
    %43 = tpu.matmul %42, %40, %cst_32 {dimension_numbers = #tpu.dot_dimension_numbers<[1], [0], [0], [1], [0, 0, 1, 1], [], []>} : vector<4x8xf32>, vector<8x128xf32>, vector<4x128xf32> -> vector<4x128xf32>
    %44 = arith.addf %36, %43 : vector<4x128xf32>
    %c127_i32 = arith.constant 127 : i32
    %45 = tpu.dynamic_rotate %1 by %c127_i32 dim 1 : vector<8x128xf32>, i32 -> vector<8x128xf32>
    %c5 = arith.constant 5 : index
    %c0_33 = arith.constant 0 : index
    %c0_34 = arith.constant 0 : index
    %46 = vector.load %arg8[%c5, %c0_33, %c0_34] : memref<9x1x128xf32, #tpu.memory_space<vmem>>, vector<1x1x128xf32>
    %47 = vector.shape_cast %46 : vector<1x1x128xf32> to vector<1x128xf32>
    %48 = vector.broadcast %47 : vector<1x128xf32> to vector<8x128xf32>
    %49 = arith.mulf %45, %48 : vector<8x128xf32>
    %c5_35 = arith.constant 5 : index
    %c0_36 = arith.constant 0 : index
    %c0_37 = arith.constant 0 : index
    %50 = vector.load %arg3[%c5_35, %c0_36, %c0_37] : memref<9x4x8xf32, #tpu.memory_space<vmem>>, vector<1x4x8xf32>
    %51 = vector.shape_cast %50 : vector<1x4x8xf32> to vector<4x8xf32>
    %cst_38 = arith.constant dense<0.000000e+00> : vector<4x128xf32>
    %52 = tpu.matmul %51, %49, %cst_38 {dimension_numbers = #tpu.dot_dimension_numbers<[1], [0], [0], [1], [0, 0, 1, 1], [], []>} : vector<4x8xf32>, vector<8x128xf32>, vector<4x128xf32> -> vector<4x128xf32>
    %53 = arith.addf %44, %52 : vector<4x128xf32>
    %c121_i32 = arith.constant 121 : i32
    %54 = tpu.dynamic_rotate %1 by %c121_i32 dim 1 : vector<8x128xf32>, i32 -> vector<8x128xf32>
    %c6 = arith.constant 6 : index
    %c0_39 = arith.constant 0 : index
    %c0_40 = arith.constant 0 : index
    %55 = vector.load %arg8[%c6, %c0_39, %c0_40] : memref<9x1x128xf32, #tpu.memory_space<vmem>>, vector<1x1x128xf32>
    %56 = vector.shape_cast %55 : vector<1x1x128xf32> to vector<1x128xf32>
    %57 = vector.broadcast %56 : vector<1x128xf32> to vector<8x128xf32>
    %58 = arith.mulf %54, %57 : vector<8x128xf32>
    %c6_41 = arith.constant 6 : index
    %c0_42 = arith.constant 0 : index
    %c0_43 = arith.constant 0 : index
    %59 = vector.load %arg3[%c6_41, %c0_42, %c0_43] : memref<9x4x8xf32, #tpu.memory_space<vmem>>, vector<1x4x8xf32>
    %60 = vector.shape_cast %59 : vector<1x4x8xf32> to vector<4x8xf32>
    %cst_44 = arith.constant dense<0.000000e+00> : vector<4x128xf32>
    %61 = tpu.matmul %60, %58, %cst_44 {dimension_numbers = #tpu.dot_dimension_numbers<[1], [0], [0], [1], [0, 0, 1, 1], [], []>} : vector<4x8xf32>, vector<8x128xf32>, vector<4x128xf32> -> vector<4x128xf32>
    %62 = arith.addf %53, %61 : vector<4x128xf32>
    %c120_i32 = arith.constant 120 : i32
    %63 = tpu.dynamic_rotate %1 by %c120_i32 dim 1 : vector<8x128xf32>, i32 -> vector<8x128xf32>
    %c7 = arith.constant 7 : index
    %c0_45 = arith.constant 0 : index
    %c0_46 = arith.constant 0 : index
    %64 = vector.load %arg8[%c7, %c0_45, %c0_46] : memref<9x1x128xf32, #tpu.memory_space<vmem>>, vector<1x1x128xf32>
    %65 = vector.shape_cast %64 : vector<1x1x128xf32> to vector<1x128xf32>
    %66 = vector.broadcast %65 : vector<1x128xf32> to vector<8x128xf32>
    %67 = arith.mulf %63, %66 : vector<8x128xf32>
    %c7_47 = arith.constant 7 : index
    %c0_48 = arith.constant 0 : index
    %c0_49 = arith.constant 0 : index
    %68 = vector.load %arg3[%c7_47, %c0_48, %c0_49] : memref<9x4x8xf32, #tpu.memory_space<vmem>>, vector<1x4x8xf32>
    %69 = vector.shape_cast %68 : vector<1x4x8xf32> to vector<4x8xf32>
    %cst_50 = arith.constant dense<0.000000e+00> : vector<4x128xf32>
    %70 = tpu.matmul %69, %67, %cst_50 {dimension_numbers = #tpu.dot_dimension_numbers<[1], [0], [0], [1], [0, 0, 1, 1], [], []>} : vector<4x8xf32>, vector<8x128xf32>, vector<4x128xf32> -> vector<4x128xf32>
    %71 = arith.addf %62, %70 : vector<4x128xf32>
    %c119_i32 = arith.constant 119 : i32
    %72 = tpu.dynamic_rotate %1 by %c119_i32 dim 1 : vector<8x128xf32>, i32 -> vector<8x128xf32>
    %c8 = arith.constant 8 : index
    %c0_51 = arith.constant 0 : index
    %c0_52 = arith.constant 0 : index
    %73 = vector.load %arg8[%c8, %c0_51, %c0_52] : memref<9x1x128xf32, #tpu.memory_space<vmem>>, vector<1x1x128xf32>
    %74 = vector.shape_cast %73 : vector<1x1x128xf32> to vector<1x128xf32>
    %75 = vector.broadcast %74 : vector<1x128xf32> to vector<8x128xf32>
    %76 = arith.mulf %72, %75 : vector<8x128xf32>
    %c8_53 = arith.constant 8 : index
    %c0_54 = arith.constant 0 : index
    %c0_55 = arith.constant 0 : index
    %77 = vector.load %arg3[%c8_53, %c0_54, %c0_55] : memref<9x4x8xf32, #tpu.memory_space<vmem>>, vector<1x4x8xf32>
    %78 = vector.shape_cast %77 : vector<1x4x8xf32> to vector<4x8xf32>
    %cst_56 = arith.constant dense<0.000000e+00> : vector<4x128xf32>
    %79 = tpu.matmul %78, %76, %cst_56 {dimension_numbers = #tpu.dot_dimension_numbers<[1], [0], [0], [1], [0, 0, 1, 1], [], []>} : vector<4x8xf32>, vector<8x128xf32>, vector<4x128xf32> -> vector<4x128xf32>
    %80 = arith.addf %71, %79 : vector<4x128xf32>
    %c0_57 = arith.constant 0 : index
    %c0_58 = arith.constant 0 : index
    %81 = vector.load %arg4[%c0_57, %c0_58] : memref<4x1xf32, #tpu.memory_space<vmem>>, vector<4x1xf32>
    %82 = vector.broadcast %81 : vector<4x1xf32> to vector<4x128xf32>
    %83 = arith.addf %80, %82 : vector<4x128xf32>
    %cst_59 = arith.constant 0.000000e+00 : f32
    %84 = vector.broadcast %cst_59 : f32 to vector<4x128xf32>
    %85 = arith.maximumf %83, %84 : vector<4x128xf32>
    %c0_60 = arith.constant 0 : index
    %c0_61 = arith.constant 0 : index
    %86 = vector.load %arg5[%c0_60, %c0_61] : memref<128x512xf32, #tpu.memory_space<vmem>>, vector<128x512xf32>
    %cst_62 = arith.constant dense<0.000000e+00> : vector<4x512xf32>
    %87 = tpu.matmul %85, %86, %cst_62 {dimension_numbers = #tpu.dot_dimension_numbers<[1], [0], [0], [1], [0, 0, 1, 1], [], []>} : vector<4x128xf32>, vector<128x512xf32>, vector<4x512xf32> -> vector<4x512xf32>
    %88 = arith.addf %87, %0 : vector<4x512xf32>
    %c17_i32 = arith.constant 17 : i32
    %89 = tpu.dynamic_rotate %88 by %c17_i32 dim 1 : vector<4x512xf32>, i32 -> vector<4x512xf32>
    %c0_63 = arith.constant 0 : index
    %c0_64 = arith.constant 0 : index
    %c0_65 = arith.constant 0 : index
    %90 = vector.load %arg1[%c0_63, %c0_64, %c0_65] : memref<9x1x512xf32, #tpu.memory_space<vmem>>, vector<1x1x512xf32>
    %91 = vector.shape_cast %90 : vector<1x1x512xf32> to vector<1x512xf32>
    %92 = vector.broadcast %91 : vector<1x512xf32> to vector<4x512xf32>
    %93 = arith.mulf %89, %92 : vector<4x512xf32>
    %c0_66 = arith.constant 0 : index
    %c0_67 = arith.constant 0 : index
    %c0_68 = arith.constant 0 : index
    %94 = vector.load %arg6[%c0_66, %c0_67, %c0_68] : memref<9x4x4xf32, #tpu.memory_space<vmem>>, vector<1x4x4xf32>
    %95 = vector.shape_cast %94 : vector<1x4x4xf32> to vector<4x4xf32>
    %cst_69 = arith.constant dense<0.000000e+00> : vector<4x512xf32>
    %96 = tpu.matmul %95, %93, %cst_69 {dimension_numbers = #tpu.dot_dimension_numbers<[1], [0], [0], [1], [0, 0, 1, 1], [], []>} : vector<4x4xf32>, vector<4x512xf32>, vector<4x512xf32> -> vector<4x512xf32>
    %c16_i32 = arith.constant 16 : i32
    %97 = tpu.dynamic_rotate %88 by %c16_i32 dim 1 : vector<4x512xf32>, i32 -> vector<4x512xf32>
    %c1_70 = arith.constant 1 : index
    %c0_71 = arith.constant 0 : index
    %c0_72 = arith.constant 0 : index
    %98 = vector.load %arg1[%c1_70, %c0_71, %c0_72] : memref<9x1x512xf32, #tpu.memory_space<vmem>>, vector<1x1x512xf32>
    %99 = vector.shape_cast %98 : vector<1x1x512xf32> to vector<1x512xf32>
    %100 = vector.broadcast %99 : vector<1x512xf32> to vector<4x512xf32>
    %101 = arith.mulf %97, %100 : vector<4x512xf32>
    %c1_73 = arith.constant 1 : index
    %c0_74 = arith.constant 0 : index
    %c0_75 = arith.constant 0 : index
    %102 = vector.load %arg6[%c1_73, %c0_74, %c0_75] : memref<9x4x4xf32, #tpu.memory_space<vmem>>, vector<1x4x4xf32>
    %103 = vector.shape_cast %102 : vector<1x4x4xf32> to vector<4x4xf32>
    %cst_76 = arith.constant dense<0.000000e+00> : vector<4x512xf32>
    %104 = tpu.matmul %103, %101, %cst_76 {dimension_numbers = #tpu.dot_dimension_numbers<[1], [0], [0], [1], [0, 0, 1, 1], [], []>} : vector<4x4xf32>, vector<4x512xf32>, vector<4x512xf32> -> vector<4x512xf32>
    %105 = arith.addf %96, %104 : vector<4x512xf32>
    %c15_i32 = arith.constant 15 : i32
    %106 = tpu.dynamic_rotate %88 by %c15_i32 dim 1 : vector<4x512xf32>, i32 -> vector<4x512xf32>
    %c2_77 = arith.constant 2 : index
    %c0_78 = arith.constant 0 : index
    %c0_79 = arith.constant 0 : index
    %107 = vector.load %arg1[%c2_77, %c0_78, %c0_79] : memref<9x1x512xf32, #tpu.memory_space<vmem>>, vector<1x1x512xf32>
    %108 = vector.shape_cast %107 : vector<1x1x512xf32> to vector<1x512xf32>
    %109 = vector.broadcast %108 : vector<1x512xf32> to vector<4x512xf32>
    %110 = arith.mulf %106, %109 : vector<4x512xf32>
    %c2_80 = arith.constant 2 : index
    %c0_81 = arith.constant 0 : index
    %c0_82 = arith.constant 0 : index
    %111 = vector.load %arg6[%c2_80, %c0_81, %c0_82] : memref<9x4x4xf32, #tpu.memory_space<vmem>>, vector<1x4x4xf32>
    %112 = vector.shape_cast %111 : vector<1x4x4xf32> to vector<4x4xf32>
    %cst_83 = arith.constant dense<0.000000e+00> : vector<4x512xf32>
    %113 = tpu.matmul %112, %110, %cst_83 {dimension_numbers = #tpu.dot_dimension_numbers<[1], [0], [0], [1], [0, 0, 1, 1], [], []>} : vector<4x4xf32>, vector<4x512xf32>, vector<4x512xf32> -> vector<4x512xf32>
    %114 = arith.addf %105, %113 : vector<4x512xf32>
    %c1_i32_84 = arith.constant 1 : i32
    %115 = tpu.dynamic_rotate %88 by %c1_i32_84 dim 1 : vector<4x512xf32>, i32 -> vector<4x512xf32>
    %c3_85 = arith.constant 3 : index
    %c0_86 = arith.constant 0 : index
    %c0_87 = arith.constant 0 : index
    %116 = vector.load %arg1[%c3_85, %c0_86, %c0_87] : memref<9x1x512xf32, #tpu.memory_space<vmem>>, vector<1x1x512xf32>
    %117 = vector.shape_cast %116 : vector<1x1x512xf32> to vector<1x512xf32>
    %118 = vector.broadcast %117 : vector<1x512xf32> to vector<4x512xf32>
    %119 = arith.mulf %115, %118 : vector<4x512xf32>
    %c3_88 = arith.constant 3 : index
    %c0_89 = arith.constant 0 : index
    %c0_90 = arith.constant 0 : index
    %120 = vector.load %arg6[%c3_88, %c0_89, %c0_90] : memref<9x4x4xf32, #tpu.memory_space<vmem>>, vector<1x4x4xf32>
    %121 = vector.shape_cast %120 : vector<1x4x4xf32> to vector<4x4xf32>
    %cst_91 = arith.constant dense<0.000000e+00> : vector<4x512xf32>
    %122 = tpu.matmul %121, %119, %cst_91 {dimension_numbers = #tpu.dot_dimension_numbers<[1], [0], [0], [1], [0, 0, 1, 1], [], []>} : vector<4x4xf32>, vector<4x512xf32>, vector<4x512xf32> -> vector<4x512xf32>
    %123 = arith.addf %114, %122 : vector<4x512xf32>
    %c4_92 = arith.constant 4 : index
    %c0_93 = arith.constant 0 : index
    %c0_94 = arith.constant 0 : index
    %124 = vector.load %arg1[%c4_92, %c0_93, %c0_94] : memref<9x1x512xf32, #tpu.memory_space<vmem>>, vector<1x1x512xf32>
    %125 = vector.shape_cast %124 : vector<1x1x512xf32> to vector<1x512xf32>
    %126 = vector.broadcast %125 : vector<1x512xf32> to vector<4x512xf32>
    %127 = arith.mulf %88, %126 : vector<4x512xf32>
    %c4_95 = arith.constant 4 : index
    %c0_96 = arith.constant 0 : index
    %c0_97 = arith.constant 0 : index
    %128 = vector.load %arg6[%c4_95, %c0_96, %c0_97] : memref<9x4x4xf32, #tpu.memory_space<vmem>>, vector<1x4x4xf32>
    %129 = vector.shape_cast %128 : vector<1x4x4xf32> to vector<4x4xf32>
    %cst_98 = arith.constant dense<0.000000e+00> : vector<4x512xf32>
    %130 = tpu.matmul %129, %127, %cst_98 {dimension_numbers = #tpu.dot_dimension_numbers<[1], [0], [0], [1], [0, 0, 1, 1], [], []>} : vector<4x4xf32>, vector<4x512xf32>, vector<4x512xf32> -> vector<4x512xf32>
    %131 = arith.addf %123, %130 : vector<4x512xf32>
    %c511_i32 = arith.constant 511 : i32
    %132 = tpu.dynamic_rotate %88 by %c511_i32 dim 1 : vector<4x512xf32>, i32 -> vector<4x512xf32>
    %c5_99 = arith.constant 5 : index
    %c0_100 = arith.constant 0 : index
    %c0_101 = arith.constant 0 : index
    %133 = vector.load %arg1[%c5_99, %c0_100, %c0_101] : memref<9x1x512xf32, #tpu.memory_space<vmem>>, vector<1x1x512xf32>
    %134 = vector.shape_cast %133 : vector<1x1x512xf32> to vector<1x512xf32>
    %135 = vector.broadcast %134 : vector<1x512xf32> to vector<4x512xf32>
    %136 = arith.mulf %132, %135 : vector<4x512xf32>
    %c5_102 = arith.constant 5 : index
    %c0_103 = arith.constant 0 : index
    %c0_104 = arith.constant 0 : index
    %137 = vector.load %arg6[%c5_102, %c0_103, %c0_104] : memref<9x4x4xf32, #tpu.memory_space<vmem>>, vector<1x4x4xf32>
    %138 = vector.shape_cast %137 : vector<1x4x4xf32> to vector<4x4xf32>
    %cst_105 = arith.constant dense<0.000000e+00> : vector<4x512xf32>
    %139 = tpu.matmul %138, %136, %cst_105 {dimension_numbers = #tpu.dot_dimension_numbers<[1], [0], [0], [1], [0, 0, 1, 1], [], []>} : vector<4x4xf32>, vector<4x512xf32>, vector<4x512xf32> -> vector<4x512xf32>
    %140 = arith.addf %131, %139 : vector<4x512xf32>
    %c497_i32 = arith.constant 497 : i32
    %141 = tpu.dynamic_rotate %88 by %c497_i32 dim 1 : vector<4x512xf32>, i32 -> vector<4x512xf32>
    %c6_106 = arith.constant 6 : index
    %c0_107 = arith.constant 0 : index
    %c0_108 = arith.constant 0 : index
    %142 = vector.load %arg1[%c6_106, %c0_107, %c0_108] : memref<9x1x512xf32, #tpu.memory_space<vmem>>, vector<1x1x512xf32>
    %143 = vector.shape_cast %142 : vector<1x1x512xf32> to vector<1x512xf32>
    %144 = vector.broadcast %143 : vector<1x512xf32> to vector<4x512xf32>
    %145 = arith.mulf %141, %144 : vector<4x512xf32>
    %c6_109 = arith.constant 6 : index
    %c0_110 = arith.constant 0 : index
    %c0_111 = arith.constant 0 : index
    %146 = vector.load %arg6[%c6_109, %c0_110, %c0_111] : memref<9x4x4xf32, #tpu.memory_space<vmem>>, vector<1x4x4xf32>
    %147 = vector.shape_cast %146 : vector<1x4x4xf32> to vector<4x4xf32>
    %cst_112 = arith.constant dense<0.000000e+00> : vector<4x512xf32>
    %148 = tpu.matmul %147, %145, %cst_112 {dimension_numbers = #tpu.dot_dimension_numbers<[1], [0], [0], [1], [0, 0, 1, 1], [], []>} : vector<4x4xf32>, vector<4x512xf32>, vector<4x512xf32> -> vector<4x512xf32>
    %149 = arith.addf %140, %148 : vector<4x512xf32>
    %c496_i32 = arith.constant 496 : i32
    %150 = tpu.dynamic_rotate %88 by %c496_i32 dim 1 : vector<4x512xf32>, i32 -> vector<4x512xf32>
    %c7_113 = arith.constant 7 : index
    %c0_114 = arith.constant 0 : index
    %c0_115 = arith.constant 0 : index
    %151 = vector.load %arg1[%c7_113, %c0_114, %c0_115] : memref<9x1x512xf32, #tpu.memory_space<vmem>>, vector<1x1x512xf32>
    %152 = vector.shape_cast %151 : vector<1x1x512xf32> to vector<1x512xf32>
    %153 = vector.broadcast %152 : vector<1x512xf32> to vector<4x512xf32>
    %154 = arith.mulf %150, %153 : vector<4x512xf32>
    %c7_116 = arith.constant 7 : index
    %c0_117 = arith.constant 0 : index
    %c0_118 = arith.constant 0 : index
    %155 = vector.load %arg6[%c7_116, %c0_117, %c0_118] : memref<9x4x4xf32, #tpu.memory_space<vmem>>, vector<1x4x4xf32>
    %156 = vector.shape_cast %155 : vector<1x4x4xf32> to vector<4x4xf32>
    %cst_119 = arith.constant dense<0.000000e+00> : vector<4x512xf32>
    %157 = tpu.matmul %156, %154, %cst_119 {dimension_numbers = #tpu.dot_dimension_numbers<[1], [0], [0], [1], [0, 0, 1, 1], [], []>} : vector<4x4xf32>, vector<4x512xf32>, vector<4x512xf32> -> vector<4x512xf32>
    %158 = arith.addf %149, %157 : vector<4x512xf32>
    %c495_i32 = arith.constant 495 : i32
    %159 = tpu.dynamic_rotate %88 by %c495_i32 dim 1 : vector<4x512xf32>, i32 -> vector<4x512xf32>
    %c8_120 = arith.constant 8 : index
    %c0_121 = arith.constant 0 : index
    %c0_122 = arith.constant 0 : index
    %160 = vector.load %arg1[%c8_120, %c0_121, %c0_122] : memref<9x1x512xf32, #tpu.memory_space<vmem>>, vector<1x1x512xf32>
    %161 = vector.shape_cast %160 : vector<1x1x512xf32> to vector<1x512xf32>
    %162 = vector.broadcast %161 : vector<1x512xf32> to vector<4x512xf32>
    %163 = arith.mulf %159, %162 : vector<4x512xf32>
    %c8_123 = arith.constant 8 : index
    %c0_124 = arith.constant 0 : index
    %c0_125 = arith.constant 0 : index
    %164 = vector.load %arg6[%c8_123, %c0_124, %c0_125] : memref<9x4x4xf32, #tpu.memory_space<vmem>>, vector<1x4x4xf32>
    %165 = vector.shape_cast %164 : vector<1x4x4xf32> to vector<4x4xf32>
    %cst_126 = arith.constant dense<0.000000e+00> : vector<4x512xf32>
    %166 = tpu.matmul %165, %163, %cst_126 {dimension_numbers = #tpu.dot_dimension_numbers<[1], [0], [0], [1], [0, 0, 1, 1], [], []>} : vector<4x4xf32>, vector<4x512xf32>, vector<4x512xf32> -> vector<4x512xf32>
    %167 = arith.addf %158, %166 : vector<4x512xf32>
    %c0_127 = arith.constant 0 : index
    %c0_128 = arith.constant 0 : index
    %168 = vector.load %arg7[%c0_127, %c0_128] : memref<4x1xf32, #tpu.memory_space<vmem>>, vector<4x1xf32>
    %169 = vector.broadcast %168 : vector<4x1xf32> to vector<4x512xf32>
    %170 = arith.addf %167, %169 : vector<4x512xf32>
    %cst_129 = arith.constant 0.000000e+00 : f32
    %171 = vector.broadcast %cst_129 : f32 to vector<4x512xf32>
    %172 = arith.maximumf %170, %171 : vector<4x512xf32>
    %c0_130 = arith.constant 0 : index
    %c0_131 = arith.constant 0 : index
    %173 = vector.load %arg16[%c0_130, %c0_131] : memref<4x512xf32, #tpu.memory_space<vmem>>, vector<4x512xf32>
    tpu.vector_store %arg16[%c0_130, %c0_131], %172 {strides = array<i32>} : memref<4x512xf32, #tpu.memory_space<vmem>>, vector<4x512xf32>,
    %c0_132 = arith.constant 0 : index
    %c0_133 = arith.constant 0 : index
    %174 = vector.load %arg9[%c0_132, %c0_133] : memref<16x128xf32, #tpu.memory_space<vmem>>, vector<16x128xf32>
    %c5_i32 = arith.constant 5 : i32
    %175 = tpu.dynamic_rotate %174 by %c5_i32 dim 1 : vector<16x128xf32>, i32 -> vector<16x128xf32>
    %c0_134 = arith.constant 0 : index
    %c0_135 = arith.constant 0 : index
    %c0_136 = arith.constant 0 : index
    %176 = vector.load %arg15[%c0_134, %c0_135, %c0_136] : memref<9x1x128xf32, #tpu.memory_space<vmem>>, vector<1x1x128xf32>
    %177 = vector.shape_cast %176 : vector<1x1x128xf32> to vector<1x128xf32>
    %178 = vector.broadcast %177 : vector<1x128xf32> to vector<16x128xf32>
    %179 = arith.mulf %175, %178 : vector<16x128xf32>
    %c0_137 = arith.constant 0 : index
    %c0_138 = arith.constant 0 : index
    %c0_139 = arith.constant 0 : index
    %180 = vector.load %arg10[%c0_137, %c0_138, %c0_139] : memref<9x4x16xf32, #tpu.memory_space<vmem>>, vector<1x4x16xf32>
    %181 = vector.shape_cast %180 : vector<1x4x16xf32> to vector<4x16xf32>
    %cst_140 = arith.constant dense<0.000000e+00> : vector<4x128xf32>
    %182 = tpu.matmul %181, %179, %cst_140 {dimension_numbers = #tpu.dot_dimension_numbers<[1], [0], [0], [1], [0, 0, 1, 1], [], []>} : vector<4x16xf32>, vector<16x128xf32>, vector<4x128xf32> -> vector<4x128xf32>
    %c4_i32 = arith.constant 4 : i32
    %183 = tpu.dynamic_rotate %174 by %c4_i32 dim 1 : vector<16x128xf32>, i32 -> vector<16x128xf32>
    %c1_141 = arith.constant 1 : index
    %c0_142 = arith.constant 0 : index
    %c0_143 = arith.constant 0 : index
    %184 = vector.load %arg15[%c1_141, %c0_142, %c0_143] : memref<9x1x128xf32, #tpu.memory_space<vmem>>, vector<1x1x128xf32>
    %185 = vector.shape_cast %184 : vector<1x1x128xf32> to vector<1x128xf32>
    %186 = vector.broadcast %185 : vector<1x128xf32> to vector<16x128xf32>
    %187 = arith.mulf %183, %186 : vector<16x128xf32>
    %c1_144 = arith.constant 1 : index
    %c0_145 = arith.constant 0 : index
    %c0_146 = arith.constant 0 : index
    %188 = vector.load %arg10[%c1_144, %c0_145, %c0_146] : memref<9x4x16xf32, #tpu.memory_space<vmem>>, vector<1x4x16xf32>
    %189 = vector.shape_cast %188 : vector<1x4x16xf32> to vector<4x16xf32>
    %cst_147 = arith.constant dense<0.000000e+00> : vector<4x128xf32>
    %190 = tpu.matmul %189, %187, %cst_147 {dimension_numbers = #tpu.dot_dimension_numbers<[1], [0], [0], [1], [0, 0, 1, 1], [], []>} : vector<4x16xf32>, vector<16x128xf32>, vector<4x128xf32> -> vector<4x128xf32>
    %191 = arith.addf %182, %190 : vector<4x128xf32>
    %c3_i32 = arith.constant 3 : i32
    %192 = tpu.dynamic_rotate %174 by %c3_i32 dim 1 : vector<16x128xf32>, i32 -> vector<16x128xf32>
    %c2_148 = arith.constant 2 : index
    %c0_149 = arith.constant 0 : index
    %c0_150 = arith.constant 0 : index
    %193 = vector.load %arg15[%c2_148, %c0_149, %c0_150] : memref<9x1x128xf32, #tpu.memory_space<vmem>>, vector<1x1x128xf32>
    %194 = vector.shape_cast %193 : vector<1x1x128xf32> to vector<1x128xf32>
    %195 = vector.broadcast %194 : vector<1x128xf32> to vector<16x128xf32>
    %196 = arith.mulf %192, %195 : vector<16x128xf32>
    %c2_151 = arith.constant 2 : index
    %c0_152 = arith.constant 0 : index
    %c0_153 = arith.constant 0 : index
    %197 = vector.load %arg10[%c2_151, %c0_152, %c0_153] : memref<9x4x16xf32, #tpu.memory_space<vmem>>, vector<1x4x16xf32>
    %198 = vector.shape_cast %197 : vector<1x4x16xf32> to vector<4x16xf32>
    %cst_154 = arith.constant dense<0.000000e+00> : vector<4x128xf32>
    %199 = tpu.matmul %198, %196, %cst_154 {dimension_numbers = #tpu.dot_dimension_numbers<[1], [0], [0], [1], [0, 0, 1, 1], [], []>} : vector<4x16xf32>, vector<16x128xf32>, vector<4x128xf32> -> vector<4x128xf32>
    %200 = arith.addf %191, %199 : vector<4x128xf32>
    %c1_i32_155 = arith.constant 1 : i32
    %201 = tpu.dynamic_rotate %174 by %c1_i32_155 dim 1 : vector<16x128xf32>, i32 -> vector<16x128xf32>
    %c3_156 = arith.constant 3 : index
    %c0_157 = arith.constant 0 : index
    %c0_158 = arith.constant 0 : index
    %202 = vector.load %arg15[%c3_156, %c0_157, %c0_158] : memref<9x1x128xf32, #tpu.memory_space<vmem>>, vector<1x1x128xf32>
    %203 = vector.shape_cast %202 : vector<1x1x128xf32> to vector<1x128xf32>
    %204 = vector.broadcast %203 : vector<1x128xf32> to vector<16x128xf32>
    %205 = arith.mulf %201, %204 : vector<16x128xf32>
    %c3_159 = arith.constant 3 : index
    %c0_160 = arith.constant 0 : index
    %c0_161 = arith.constant 0 : index
    %206 = vector.load %arg10[%c3_159, %c0_160, %c0_161] : memref<9x4x16xf32, #tpu.memory_space<vmem>>, vector<1x4x16xf32>
    %207 = vector.shape_cast %206 : vector<1x4x16xf32> to vector<4x16xf32>
    %cst_162 = arith.constant dense<0.000000e+00> : vector<4x128xf32>
    %208 = tpu.matmul %207, %205, %cst_162 {dimension_numbers = #tpu.dot_dimension_numbers<[1], [0], [0], [1], [0, 0, 1, 1], [], []>} : vector<4x16xf32>, vector<16x128xf32>, vector<4x128xf32> -> vector<4x128xf32>
    %209 = arith.addf %200, %208 : vector<4x128xf32>
    %c4_163 = arith.constant 4 : index
    %c0_164 = arith.constant 0 : index
    %c0_165 = arith.constant 0 : index
    %210 = vector.load %arg15[%c4_163, %c0_164, %c0_165] : memref<9x1x128xf32, #tpu.memory_space<vmem>>, vector<1x1x128xf32>
    %211 = vector.shape_cast %210 : vector<1x1x128xf32> to vector<1x128xf32>
    %212 = vector.broadcast %211 : vector<1x128xf32> to vector<16x128xf32>
    %213 = arith.mulf %174, %212 : vector<16x128xf32>
    %c4_166 = arith.constant 4 : index
    %c0_167 = arith.constant 0 : index
    %c0_168 = arith.constant 0 : index
    %214 = vector.load %arg10[%c4_166, %c0_167, %c0_168] : memref<9x4x16xf32, #tpu.memory_space<vmem>>, vector<1x4x16xf32>
    %215 = vector.shape_cast %214 : vector<1x4x16xf32> to vector<4x16xf32>
    %cst_169 = arith.constant dense<0.000000e+00> : vector<4x128xf32>
    %216 = tpu.matmul %215, %213, %cst_169 {dimension_numbers = #tpu.dot_dimension_numbers<[1], [0], [0], [1], [0, 0, 1, 1], [], []>} : vector<4x16xf32>, vector<16x128xf32>, vector<4x128xf32> -> vector<4x128xf32>
    %217 = arith.addf %209, %216 : vector<4x128xf32>
    %c127_i32_170 = arith.constant 127 : i32
    %218 = tpu.dynamic_rotate %174 by %c127_i32_170 dim 1 : vector<16x128xf32>, i32 -> vector<16x128xf32>
    %c5_171 = arith.constant 5 : index
    %c0_172 = arith.constant 0 : index
    %c0_173 = arith.constant 0 : index
    %219 = vector.load %arg15[%c5_171, %c0_172, %c0_173] : memref<9x1x128xf32, #tpu.memory_space<vmem>>, vector<1x1x128xf32>
    %220 = vector.shape_cast %219 : vector<1x1x128xf32> to vector<1x128xf32>
    %221 = vector.broadcast %220 : vector<1x128xf32> to vector<16x128xf32>
    %222 = arith.mulf %218, %221 : vector<16x128xf32>
    %c5_174 = arith.constant 5 : index
    %c0_175 = arith.constant 0 : index
    %c0_176 = arith.constant 0 : index
    %223 = vector.load %arg10[%c5_174, %c0_175, %c0_176] : memref<9x4x16xf32, #tpu.memory_space<vmem>>, vector<1x4x16xf32>
    %224 = vector.shape_cast %223 : vector<1x4x16xf32> to vector<4x16xf32>
    %cst_177 = arith.constant dense<0.000000e+00> : vector<4x128xf32>
    %225 = tpu.matmul %224, %222, %cst_177 {dimension_numbers = #tpu.dot_dimension_numbers<[1], [0], [0], [1], [0, 0, 1, 1], [], []>} : vector<4x16xf32>, vector<16x128xf32>, vector<4x128xf32> -> vector<4x128xf32>
    %226 = arith.addf %217, %225 : vector<4x128xf32>
    %c125_i32 = arith.constant 125 : i32
    %227 = tpu.dynamic_rotate %174 by %c125_i32 dim 1 : vector<16x128xf32>, i32 -> vector<16x128xf32>
    %c6_178 = arith.constant 6 : index
    %c0_179 = arith.constant 0 : index
    %c0_180 = arith.constant 0 : index
    %228 = vector.load %arg15[%c6_178, %c0_179, %c0_180] : memref<9x1x128xf32, #tpu.memory_space<vmem>>, vector<1x1x128xf32>
    %229 = vector.shape_cast %228 : vector<1x1x128xf32> to vector<1x128xf32>
    %230 = vector.broadcast %229 : vector<1x128xf32> to vector<16x128xf32>
    %231 = arith.mulf %227, %230 : vector<16x128xf32>
    %c6_181 = arith.constant 6 : index
    %c0_182 = arith.constant 0 : index
    %c0_183 = arith.constant 0 : index
    %232 = vector.load %arg10[%c6_181, %c0_182, %c0_183] : memref<9x4x16xf32, #tpu.memory_space<vmem>>, vector<1x4x16xf32>
    %233 = vector.shape_cast %232 : vector<1x4x16xf32> to vector<4x16xf32>
    %cst_184 = arith.constant dense<0.000000e+00> : vector<4x128xf32>
    %234 = tpu.matmul %233, %231, %cst_184 {dimension_numbers = #tpu.dot_dimension_numbers<[1], [0], [0], [1], [0, 0, 1, 1], [], []>} : vector<4x16xf32>, vector<16x128xf32>, vector<4x128xf32> -> vector<4x128xf32>
    %235 = arith.addf %226, %234 : vector<4x128xf32>
    %c124_i32 = arith.constant 124 : i32
    %236 = tpu.dynamic_rotate %174 by %c124_i32 dim 1 : vector<16x128xf32>, i32 -> vector<16x128xf32>
    %c7_185 = arith.constant 7 : index
    %c0_186 = arith.constant 0 : index
    %c0_187 = arith.constant 0 : index
    %237 = vector.load %arg15[%c7_185, %c0_186, %c0_187] : memref<9x1x128xf32, #tpu.memory_space<vmem>>, vector<1x1x128xf32>
    %238 = vector.shape_cast %237 : vector<1x1x128xf32> to vector<1x128xf32>
    %239 = vector.broadcast %238 : vector<1x128xf32> to vector<16x128xf32>
    %240 = arith.mulf %236, %239 : vector<16x128xf32>
    %c7_188 = arith.constant 7 : index
    %c0_189 = arith.constant 0 : index
    %c0_190 = arith.constant 0 : index
    %241 = vector.load %arg10[%c7_188, %c0_189, %c0_190] : memref<9x4x16xf32, #tpu.memory_space<vmem>>, vector<1x4x16xf32>
    %242 = vector.shape_cast %241 : vector<1x4x16xf32> to vector<4x16xf32>
    %cst_191 = arith.constant dense<0.000000e+00> : vector<4x128xf32>
    %243 = tpu.matmul %242, %240, %cst_191 {dimension_numbers = #tpu.dot_dimension_numbers<[1], [0], [0], [1], [0, 0, 1, 1], [], []>} : vector<4x16xf32>, vector<16x128xf32>, vector<4x128xf32> -> vector<4x128xf32>
    %244 = arith.addf %235, %243 : vector<4x128xf32>
    %c123_i32 = arith.constant 123 : i32
    %245 = tpu.dynamic_rotate %174 by %c123_i32 dim 1 : vector<16x128xf32>, i32 -> vector<16x128xf32>
    %c8_192 = arith.constant 8 : index
    %c0_193 = arith.constant 0 : index
    %c0_194 = arith.constant 0 : index
    %246 = vector.load %arg15[%c8_192, %c0_193, %c0_194] : memref<9x1x128xf32, #tpu.memory_space<vmem>>, vector<1x1x128xf32>
    %247 = vector.shape_cast %246 : vector<1x1x128xf32> to vector<1x128xf32>
    %248 = vector.broadcast %247 : vector<1x128xf32> to vector<16x128xf32>
    %249 = arith.mulf %245, %248 : vector<16x128xf32>
    %c8_195 = arith.constant 8 : index
    %c0_196 = arith.constant 0 : index
    %c0_197 = arith.constant 0 : index
    %250 = vector.load %arg10[%c8_195, %c0_196, %c0_197] : memref<9x4x16xf32, #tpu.memory_space<vmem>>, vector<1x4x16xf32>
    %251 = vector.shape_cast %250 : vector<1x4x16xf32> to vector<4x16xf32>
    %cst_198 = arith.constant dense<0.000000e+00> : vector<4x128xf32>
    %252 = tpu.matmul %251, %249, %cst_198 {dimension_numbers = #tpu.dot_dimension_numbers<[1], [0], [0], [1], [0, 0, 1, 1], [], []>} : vector<4x16xf32>, vector<16x128xf32>, vector<4x128xf32> -> vector<4x128xf32>
    %253 = arith.addf %244, %252 : vector<4x128xf32>
    %c0_199 = arith.constant 0 : index
    %c0_200 = arith.constant 0 : index
    %254 = vector.load %arg11[%c0_199, %c0_200] : memref<4x1xf32, #tpu.memory_space<vmem>>, vector<4x1xf32>
    %255 = vector.broadcast %254 : vector<4x1xf32> to vector<4x128xf32>
    %256 = arith.addf %253, %255 : vector<4x128xf32>
    %cst_201 = arith.constant 0.000000e+00 : f32
    %257 = vector.broadcast %cst_201 : f32 to vector<4x128xf32>
    %258 = arith.maximumf %256, %257 : vector<4x128xf32>
    %c0_202 = arith.constant 0 : index
    %c0_203 = arith.constant 0 : index
    %259 = vector.load %arg12[%c0_202, %c0_203] : memref<128x512xf32, #tpu.memory_space<vmem>>, vector<128x512xf32>
    %cst_204 = arith.constant dense<0.000000e+00> : vector<4x512xf32>
    %260 = tpu.matmul %258, %259, %cst_204 {dimension_numbers = #tpu.dot_dimension_numbers<[1], [0], [0], [1], [0, 0, 1, 1], [], []>} : vector<4x128xf32>, vector<128x512xf32>, vector<4x512xf32> -> vector<4x512xf32>
    %261 = arith.addf %260, %172 : vector<4x512xf32>
    %c17_i32_205 = arith.constant 17 : i32
    %262 = tpu.dynamic_rotate %261 by %c17_i32_205 dim 1 : vector<4x512xf32>, i32 -> vector<4x512xf32>
    %c0_206 = arith.constant 0 : index
    %c0_207 = arith.constant 0 : index
    %c0_208 = arith.constant 0 : index
    %263 = vector.load %arg1[%c0_206, %c0_207, %c0_208] : memref<9x1x512xf32, #tpu.memory_space<vmem>>, vector<1x1x512xf32>
    %264 = vector.shape_cast %263 : vector<1x1x512xf32> to vector<1x512xf32>
    %265 = vector.broadcast %264 : vector<1x512xf32> to vector<4x512xf32>
    %266 = arith.mulf %262, %265 : vector<4x512xf32>
    %c0_209 = arith.constant 0 : index
    %c0_210 = arith.constant 0 : index
    %c0_211 = arith.constant 0 : index
    %267 = vector.load %arg13[%c0_209, %c0_210, %c0_211] : memref<9x4x4xf32, #tpu.memory_space<vmem>>, vector<1x4x4xf32>
    %268 = vector.shape_cast %267 : vector<1x4x4xf32> to vector<4x4xf32>
    %cst_212 = arith.constant dense<0.000000e+00> : vector<4x512xf32>
    %269 = tpu.matmul %268, %266, %cst_212 {dimension_numbers = #tpu.dot_dimension_numbers<[1], [0], [0], [1], [0, 0, 1, 1], [], []>} : vector<4x4xf32>, vector<4x512xf32>, vector<4x512xf32> -> vector<4x512xf32>
    %c16_i32_213 = arith.constant 16 : i32
    %270 = tpu.dynamic_rotate %261 by %c16_i32_213 dim 1 : vector<4x512xf32>, i32 -> vector<4x512xf32>
    %c1_214 = arith.constant 1 : index
    %c0_215 = arith.constant 0 : index
    %c0_216 = arith.constant 0 : index
    %271 = vector.load %arg1[%c1_214, %c0_215, %c0_216] : memref<9x1x512xf32, #tpu.memory_space<vmem>>, vector<1x1x512xf32>
    %272 = vector.shape_cast %271 : vector<1x1x512xf32> to vector<1x512xf32>
    %273 = vector.broadcast %272 : vector<1x512xf32> to vector<4x512xf32>
    %274 = arith.mulf %270, %273 : vector<4x512xf32>
    %c1_217 = arith.constant 1 : index
    %c0_218 = arith.constant 0 : index
    %c0_219 = arith.constant 0 : index
    %275 = vector.load %arg13[%c1_217, %c0_218, %c0_219] : memref<9x4x4xf32, #tpu.memory_space<vmem>>, vector<1x4x4xf32>
    %276 = vector.shape_cast %275 : vector<1x4x4xf32> to vector<4x4xf32>
    %cst_220 = arith.constant dense<0.000000e+00> : vector<4x512xf32>
    %277 = tpu.matmul %276, %274, %cst_220 {dimension_numbers = #tpu.dot_dimension_numbers<[1], [0], [0], [1], [0, 0, 1, 1], [], []>} : vector<4x4xf32>, vector<4x512xf32>, vector<4x512xf32> -> vector<4x512xf32>
    %278 = arith.addf %269, %277 : vector<4x512xf32>
    %c15_i32_221 = arith.constant 15 : i32
    %279 = tpu.dynamic_rotate %261 by %c15_i32_221 dim 1 : vector<4x512xf32>, i32 -> vector<4x512xf32>
    %c2_222 = arith.constant 2 : index
    %c0_223 = arith.constant 0 : index
    %c0_224 = arith.constant 0 : index
    %280 = vector.load %arg1[%c2_222, %c0_223, %c0_224] : memref<9x1x512xf32, #tpu.memory_space<vmem>>, vector<1x1x512xf32>
    %281 = vector.shape_cast %280 : vector<1x1x512xf32> to vector<1x512xf32>
    %282 = vector.broadcast %281 : vector<1x512xf32> to vector<4x512xf32>
    %283 = arith.mulf %279, %282 : vector<4x512xf32>
    %c2_225 = arith.constant 2 : index
    %c0_226 = arith.constant 0 : index
    %c0_227 = arith.constant 0 : index
    %284 = vector.load %arg13[%c2_225, %c0_226, %c0_227] : memref<9x4x4xf32, #tpu.memory_space<vmem>>, vector<1x4x4xf32>
    %285 = vector.shape_cast %284 : vector<1x4x4xf32> to vector<4x4xf32>
    %cst_228 = arith.constant dense<0.000000e+00> : vector<4x512xf32>
    %286 = tpu.matmul %285, %283, %cst_228 {dimension_numbers = #tpu.dot_dimension_numbers<[1], [0], [0], [1], [0, 0, 1, 1], [], []>} : vector<4x4xf32>, vector<4x512xf32>, vector<4x512xf32> -> vector<4x512xf32>
    %287 = arith.addf %278, %286 : vector<4x512xf32>
    %c1_i32_229 = arith.constant 1 : i32
    %288 = tpu.dynamic_rotate %261 by %c1_i32_229 dim 1 : vector<4x512xf32>, i32 -> vector<4x512xf32>
    %c3_230 = arith.constant 3 : index
    %c0_231 = arith.constant 0 : index
    %c0_232 = arith.constant 0 : index
    %289 = vector.load %arg1[%c3_230, %c0_231, %c0_232] : memref<9x1x512xf32, #tpu.memory_space<vmem>>, vector<1x1x512xf32>
    %290 = vector.shape_cast %289 : vector<1x1x512xf32> to vector<1x512xf32>
    %291 = vector.broadcast %290 : vector<1x512xf32> to vector<4x512xf32>
    %292 = arith.mulf %288, %291 : vector<4x512xf32>
    %c3_233 = arith.constant 3 : index
    %c0_234 = arith.constant 0 : index
    %c0_235 = arith.constant 0 : index
    %293 = vector.load %arg13[%c3_233, %c0_234, %c0_235] : memref<9x4x4xf32, #tpu.memory_space<vmem>>, vector<1x4x4xf32>
    %294 = vector.shape_cast %293 : vector<1x4x4xf32> to vector<4x4xf32>
    %cst_236 = arith.constant dense<0.000000e+00> : vector<4x512xf32>
    %295 = tpu.matmul %294, %292, %cst_236 {dimension_numbers = #tpu.dot_dimension_numbers<[1], [0], [0], [1], [0, 0, 1, 1], [], []>} : vector<4x4xf32>, vector<4x512xf32>, vector<4x512xf32> -> vector<4x512xf32>
    %296 = arith.addf %287, %295 : vector<4x512xf32>
    %c4_237 = arith.constant 4 : index
    %c0_238 = arith.constant 0 : index
    %c0_239 = arith.constant 0 : index
    %297 = vector.load %arg1[%c4_237, %c0_238, %c0_239] : memref<9x1x512xf32, #tpu.memory_space<vmem>>, vector<1x1x512xf32>
    %298 = vector.shape_cast %297 : vector<1x1x512xf32> to vector<1x512xf32>
    %299 = vector.broadcast %298 : vector<1x512xf32> to vector<4x512xf32>
    %300 = arith.mulf %261, %299 : vector<4x512xf32>
    %c4_240 = arith.constant 4 : index
    %c0_241 = arith.constant 0 : index
    %c0_242 = arith.constant 0 : index
    %301 = vector.load %arg13[%c4_240, %c0_241, %c0_242] : memref<9x4x4xf32, #tpu.memory_space<vmem>>, vector<1x4x4xf32>
    %302 = vector.shape_cast %301 : vector<1x4x4xf32> to vector<4x4xf32>
    %cst_243 = arith.constant dense<0.000000e+00> : vector<4x512xf32>
    %303 = tpu.matmul %302, %300, %cst_243 {dimension_numbers = #tpu.dot_dimension_numbers<[1], [0], [0], [1], [0, 0, 1, 1], [], []>} : vector<4x4xf32>, vector<4x512xf32>, vector<4x512xf32> -> vector<4x512xf32>
    %304 = arith.addf %296, %303 : vector<4x512xf32>
    %c511_i32_244 = arith.constant 511 : i32
    %305 = tpu.dynamic_rotate %261 by %c511_i32_244 dim 1 : vector<4x512xf32>, i32 -> vector<4x512xf32>
    %c5_245 = arith.constant 5 : index
    %c0_246 = arith.constant 0 : index
    %c0_247 = arith.constant 0 : index
    %306 = vector.load %arg1[%c5_245, %c0_246, %c0_247] : memref<9x1x512xf32, #tpu.memory_space<vmem>>, vector<1x1x512xf32>
    %307 = vector.shape_cast %306 : vector<1x1x512xf32> to vector<1x512xf32>
    %308 = vector.broadcast %307 : vector<1x512xf32> to vector<4x512xf32>
    %309 = arith.mulf %305, %308 : vector<4x512xf32>
    %c5_248 = arith.constant 5 : index
    %c0_249 = arith.constant 0 : index
    %c0_250 = arith.constant 0 : index
    %310 = vector.load %arg13[%c5_248, %c0_249, %c0_250] : memref<9x4x4xf32, #tpu.memory_space<vmem>>, vector<1x4x4xf32>
    %311 = vector.shape_cast %310 : vector<1x4x4xf32> to vector<4x4xf32>
    %cst_251 = arith.constant dense<0.000000e+00> : vector<4x512xf32>
    %312 = tpu.matmul %311, %309, %cst_251 {dimension_numbers = #tpu.dot_dimension_numbers<[1], [0], [0], [1], [0, 0, 1, 1], [], []>} : vector<4x4xf32>, vector<4x512xf32>, vector<4x512xf32> -> vector<4x512xf32>
    %313 = arith.addf %304, %312 : vector<4x512xf32>
    %c497_i32_252 = arith.constant 497 : i32
    %314 = tpu.dynamic_rotate %261 by %c497_i32_252 dim 1 : vector<4x512xf32>, i32 -> vector<4x512xf32>
    %c6_253 = arith.constant 6 : index
    %c0_254 = arith.constant 0 : index
    %c0_255 = arith.constant 0 : index
    %315 = vector.load %arg1[%c6_253, %c0_254, %c0_255] : memref<9x1x512xf32, #tpu.memory_space<vmem>>, vector<1x1x512xf32>
    %316 = vector.shape_cast %315 : vector<1x1x512xf32> to vector<1x512xf32>
    %317 = vector.broadcast %316 : vector<1x512xf32> to vector<4x512xf32>
    %318 = arith.mulf %314, %317 : vector<4x512xf32>
    %c6_256 = arith.constant 6 : index
    %c0_257 = arith.constant 0 : index
    %c0_258 = arith.constant 0 : index
    %319 = vector.load %arg13[%c6_256, %c0_257, %c0_258] : memref<9x4x4xf32, #tpu.memory_space<vmem>>, vector<1x4x4xf32>
    %320 = vector.shape_cast %319 : vector<1x4x4xf32> to vector<4x4xf32>
    %cst_259 = arith.constant dense<0.000000e+00> : vector<4x512xf32>
    %321 = tpu.matmul %320, %318, %cst_259 {dimension_numbers = #tpu.dot_dimension_numbers<[1], [0], [0], [1], [0, 0, 1, 1], [], []>} : vector<4x4xf32>, vector<4x512xf32>, vector<4x512xf32> -> vector<4x512xf32>
    %322 = arith.addf %313, %321 : vector<4x512xf32>
    %c496_i32_260 = arith.constant 496 : i32
    %323 = tpu.dynamic_rotate %261 by %c496_i32_260 dim 1 : vector<4x512xf32>, i32 -> vector<4x512xf32>
    %c7_261 = arith.constant 7 : index
    %c0_262 = arith.constant 0 : index
    %c0_263 = arith.constant 0 : index
    %324 = vector.load %arg1[%c7_261, %c0_262, %c0_263] : memref<9x1x512xf32, #tpu.memory_space<vmem>>, vector<1x1x512xf32>
    %325 = vector.shape_cast %324 : vector<1x1x512xf32> to vector<1x512xf32>
    %326 = vector.broadcast %325 : vector<1x512xf32> to vector<4x512xf32>
    %327 = arith.mulf %323, %326 : vector<4x512xf32>
    %c7_264 = arith.constant 7 : index
    %c0_265 = arith.constant 0 : index
    %c0_266 = arith.constant 0 : index
    %328 = vector.load %arg13[%c7_264, %c0_265, %c0_266] : memref<9x4x4xf32, #tpu.memory_space<vmem>>, vector<1x4x4xf32>
    %329 = vector.shape_cast %328 : vector<1x4x4xf32> to vector<4x4xf32>
    %cst_267 = arith.constant dense<0.000000e+00> : vector<4x512xf32>
    %330 = tpu.matmul %329, %327, %cst_267 {dimension_numbers = #tpu.dot_dimension_numbers<[1], [0], [0], [1], [0, 0, 1, 1], [], []>} : vector<4x4xf32>, vector<4x512xf32>, vector<4x512xf32> -> vector<4x512xf32>
    %331 = arith.addf %322, %330 : vector<4x512xf32>
    %c495_i32_268 = arith.constant 495 : i32
    %332 = tpu.dynamic_rotate %261 by %c495_i32_268 dim 1 : vector<4x512xf32>, i32 -> vector<4x512xf32>
    %c8_269 = arith.constant 8 : index
    %c0_270 = arith.constant 0 : index
    %c0_271 = arith.constant 0 : index
    %333 = vector.load %arg1[%c8_269, %c0_270, %c0_271] : memref<9x1x512xf32, #tpu.memory_space<vmem>>, vector<1x1x512xf32>
    %334 = vector.shape_cast %333 : vector<1x1x512xf32> to vector<1x512xf32>
    %335 = vector.broadcast %334 : vector<1x512xf32> to vector<4x512xf32>
    %336 = arith.mulf %332, %335 : vector<4x512xf32>
    %c8_272 = arith.constant 8 : index
    %c0_273 = arith.constant 0 : index
    %c0_274 = arith.constant 0 : index
    %337 = vector.load %arg13[%c8_272, %c0_273, %c0_274] : memref<9x4x4xf32, #tpu.memory_space<vmem>>, vector<1x4x4xf32>
    %338 = vector.shape_cast %337 : vector<1x4x4xf32> to vector<4x4xf32>
    %cst_275 = arith.constant dense<0.000000e+00> : vector<4x512xf32>
    %339 = tpu.matmul %338, %336, %cst_275 {dimension_numbers = #tpu.dot_dimension_numbers<[1], [0], [0], [1], [0, 0, 1, 1], [], []>} : vector<4x4xf32>, vector<4x512xf32>, vector<4x512xf32> -> vector<4x512xf32>
    %340 = arith.addf %331, %339 : vector<4x512xf32>
    %c0_276 = arith.constant 0 : index
    %c0_277 = arith.constant 0 : index
    %341 = vector.load %arg14[%c0_276, %c0_277] : memref<4x1xf32, #tpu.memory_space<vmem>>, vector<4x1xf32>
    %342 = vector.broadcast %341 : vector<4x1xf32> to vector<4x512xf32>
    %343 = arith.addf %340, %342 : vector<4x512xf32>
    %cst_278 = arith.constant 0.000000e+00 : f32
    %344 = vector.broadcast %cst_278 : f32 to vector<4x512xf32>
    %345 = arith.maximumf %343, %344 : vector<4x512xf32>
    %c0_279 = arith.constant 0 : index
    %c0_280 = arith.constant 0 : index
    %346 = vector.load %arg17[%c0_279, %c0_280] : memref<4x512xf32, #tpu.memory_space<vmem>>, vector<4x512xf32>
    tpu.vector_store %arg17[%c0_279, %c0_280], %345 {strides = array<i32>} : memref<4x512xf32, #tpu.memory_space<vmem>>, vector<4x512xf32>,
    return
  }
}

</mosaic_0001>

<llo_original>
// kernel: tpu_custom_call.1
$region0: #{tpu_custom_call.1}
  #allocation0 [shape = 'u32[]', space=smem, size = 0x4, offset = 0x4, fixed_abs, tag = 'smem constant byte address 0x4 - core index']
  #allocation1 [shape = 'u32[72,128]{1,0:T(1,128)}', space=vmem, size = 0x9000, scoped, tag = 'internal scratch']
  %s0 = inlined_call_operand.vmem [shape: f32[4,512], index: 0, kind: input, shape index: {}]
  %s1 = inlined_call_operand.vmem [shape: f32[9,1,512], index: 1, kind: input, shape index: {}]
  %s2 = inlined_call_operand.vmem [shape: f32[8,128], index: 2, kind: input, shape index: {}]
  %s3 = inlined_call_operand.vmem [shape: f32[9,4,8], index: 3, kind: input, shape index: {}]
  %s4 = inlined_call_operand.vmem [shape: f32[4,1], index: 4, kind: input, shape index: {}]
  %s5 = inlined_call_operand.hbm [shape: f32[128,512], index: 5, kind: input, shape index: {}]
  %s6 = inlined_call_operand.vmem [shape: f32[9,4,4], index: 6, kind: input, shape index: {}]
  %s7 = inlined_call_operand.vmem [shape: f32[4,1], index: 7, kind: input, shape index: {}]
  %s8 = inlined_call_operand.vmem [shape: f32[9,1,128], index: 8, kind: input, shape index: {}]
  %s9 = inlined_call_operand.vmem [shape: f32[16,128], index: 9, kind: input, shape index: {}]
  %s10 = inlined_call_operand.vmem [shape: f32[9,4,16], index: 10, kind: input, shape index: {}]
  %s11 = inlined_call_operand.vmem [shape: f32[4,1], index: 11, kind: input, shape index: {}]
  %s12 = inlined_call_operand.hbm [shape: f32[128,512], index: 12, kind: input, shape index: {}]
  %s13 = inlined_call_operand.vmem [shape: f32[9,4,4], index: 13, kind: input, shape index: {}]
  %s14 = inlined_call_operand.vmem [shape: f32[4,1], index: 14, kind: input, shape index: {}]
  %s15 = inlined_call_operand.vmem [shape: f32[9,1,128], index: 15, kind: input, shape index: {}]
  %s16 = inlined_call_operand.hbm [shape: f32[4,512], index: 16, kind: output, shape index: {0}]
  %s17 = inlined_call_operand.hbm [shape: f32[4,512], index: 17, kind: output, shape index: {1}]
  %18 = xla_tuple %s16, %s17
  %s19 = sld [smem:[#allocation0]]
  $region90: #{tpu_custom_call.1} parent=0
    _
  %s21 = ssub.s32 1, %s19
  %s22 = scalar_select 0, %s21, %s19
  $region1: #{tpu_custom_call.1} parent=0
    #allocation2 [shape = 'u8[262144]{0}', space=vmem, size = 0x40000, scoped, tag = 'input window, operand 5, single buffered']
    #allocation3 [shape = 's32[1]{0}', space=sflag, size = 0x4, scoped, tag = 'scoped memory for tpu_custom_call.1']
    #allocation4 [shape = 's32[1]{0}', space=sflag, size = 0x4, scoped, tag = 'scoped memory for tpu_custom_call.1']
    #allocation5 [shape = 'u8[262144]{0}', space=vmem, size = 0x40000, scoped, tag = 'input window, operand 12, single buffered']
    #allocation6 [shape = 's32[1]{0}', space=sflag, size = 0x4, scoped, tag = 'scoped memory for tpu_custom_call.1']
    #allocation7 [shape = 'u8[8192]{0}', space=vmem, size = 0x2000, scoped, tag = 'output window, operand 0, single buffered']
    #allocation8 [shape = 'u8[8192]{0}', space=vmem, size = 0x2000, scoped, tag = 'output window, operand 1, single buffered']
    #allocation9 [shape = 's32[1]{0}', space=sflag, size = 0x4, scoped, tag = 'scoped memory for tpu_custom_call.1']
    %23 = vsyncpa [#allocation3], 0
    %24 = vsyncpa [#allocation6], 0
    %25 = vsyncpa [#allocation4], 0
    %26 = vsyncpa [#allocation9], 0
    // Predicated region
    $region2: #{tpu_custom_call.1} parent=1 // pred_check
      _
    $region3: #{tpu_custom_call.1} parent=1 // pred_check_branch
      %28 = sbr.rel (0) target = $region5
    $region4: #{tpu_custom_call.1} parent=1 // pred_region
      _
    $region5: #{tpu_custom_call.1} parent=1 // pred_fallthru
      _
    // Predicated region
    $region6: #{tpu_custom_call.1} parent=1 // pred_check
      _
    $region7: #{tpu_custom_call.1} parent=1 // pred_check_branch
      %30 = sbr.rel (0) target = $region9
    $region8: #{tpu_custom_call.1} parent=1 // pred_region
      _
    $region9: #{tpu_custom_call.1} parent=1 // pred_fallthru
      _
    // Predicated region
    $region10: #{tpu_custom_call.1} parent=1 // pred_check
      _
    $region11: #{tpu_custom_call.1} parent=1 // pred_check_branch
      %32 = sbr.rel (0) target = $region13
    $region12: #{tpu_custom_call.1} parent=1 // pred_region
      _
    $region13: #{tpu_custom_call.1} parent=1 // pred_fallthru
      _
    // Predicated region
    $region14: #{tpu_custom_call.1} parent=1 // pred_check
      _
    $region15: #{tpu_custom_call.1} parent=1 // pred_check_branch
      %34 = sbr.rel (0) target = $region17
    $region16: #{tpu_custom_call.1} parent=1 // pred_region
      _
    $region17: #{tpu_custom_call.1} parent=1 // pred_fallthru
      _
    // Predicated region
    $region18: #{tpu_custom_call.1} parent=1 // pred_check
      _
    $region19: #{tpu_custom_call.1} parent=1 // pred_check_branch
      %36 = sbr.rel (0) target = $region21
    $region20: #{tpu_custom_call.1} parent=1 // pred_region
      _
    $region21: #{tpu_custom_call.1} parent=1 // pred_fallthru
      _
    // Predicated region
    $region22: #{tpu_custom_call.1} parent=1 // pred_check
      _
    $region23: #{tpu_custom_call.1} parent=1 // pred_check_branch
      %38 = sbr.rel (0) target = $region25
    $region24: #{tpu_custom_call.1} parent=1 // pred_region
      %40 = vsyncadd [#allocation3], 0
      %s41 = sshll.u32 %s5, 4
      %s42 = int_to_ptr.hbm [resolvable:$true] %s41
      %s43 = sshll.u32 [#allocation2], 4
      %s44 = int_to_ptr.vmem [resolvable:$true] %s43
      %49 = dma.hbm_to_vmem [thread:$0]  %s42, 8192, %s44, [#allocation3], 512, 512, 32
    $region25: #{tpu_custom_call.1} parent=1 // pred_fallthru
      _
    // Predicated region
    $region26: #{tpu_custom_call.1} parent=1 // pred_check
      _
    $region27: #{tpu_custom_call.1} parent=1 // pred_check_branch
      %51 = sbr.rel (0) target = $region29
    $region28: #{tpu_custom_call.1} parent=1 // pred_region
      _
    $region29: #{tpu_custom_call.1} parent=1 // pred_fallthru
      _
    // Predicated region
    $region30: #{tpu_custom_call.1} parent=1 // pred_check
      _
    $region31: #{tpu_custom_call.1} parent=1 // pred_check_branch
      %53 = sbr.rel (0) target = $region33
    $region32: #{tpu_custom_call.1} parent=1 // pred_region
      _
    $region33: #{tpu_custom_call.1} parent=1 // pred_fallthru
      _
    // Predicated region
    $region34: #{tpu_custom_call.1} parent=1 // pred_check
      _
    $region35: #{tpu_custom_call.1} parent=1 // pred_check_branch
      %55 = sbr.rel (0) target = $region37
    $region36: #{tpu_custom_call.1} parent=1 // pred_region
      _
    $region37: #{tpu_custom_call.1} parent=1 // pred_fallthru
      _
    // Predicated region
    $region38: #{tpu_custom_call.1} parent=1 // pred_check
      _
    $region39: #{tpu_custom_call.1} parent=1 // pred_check_branch
      %57 = sbr.rel (0) target = $region41
    $region40: #{tpu_custom_call.1} parent=1 // pred_region
      _
    $region41: #{tpu_custom_call.1} parent=1 // pred_fallthru
      _
    // Predicated region
    $region42: #{tpu_custom_call.1} parent=1 // pred_check
      _
    $region43: #{tpu_custom_call.1} parent=1 // pred_check_branch
      %59 = sbr.rel (0) target = $region45
    $region44: #{tpu_custom_call.1} parent=1 // pred_region
      _
    $region45: #{tpu_custom_call.1} parent=1 // pred_fallthru
      _
    // Predicated region
    $region46: #{tpu_custom_call.1} parent=1 // pred_check
      _
    $region47: #{tpu_custom_call.1} parent=1 // pred_check_branch
      %61 = sbr.rel (0) target = $region49
    $region48: #{tpu_custom_call.1} parent=1 // pred_region
      _
    $region49: #{tpu_custom_call.1} parent=1 // pred_fallthru
      _
    // Predicated region
    $region50: #{tpu_custom_call.1} parent=1 // pred_check
      _
    $region51: #{tpu_custom_call.1} parent=1 // pred_check_branch
      %63 = sbr.rel (0) target = $region53
    $region52: #{tpu_custom_call.1} parent=1 // pred_region
      %65 = vsyncadd [#allocation6], 0
      %s66 = sshll.u32 %s12, 4
      %s67 = int_to_ptr.hbm [resolvable:$true] %s66
      %s68 = sshll.u32 [#allocation5], 4
      %s69 = int_to_ptr.vmem [resolvable:$true] %s68
      %74 = dma.hbm_to_vmem [thread:$0]  %s67, 8192, %s69, [#allocation6], 512, 512, 32
    $region53: #{tpu_custom_call.1} parent=1 // pred_fallthru
      _
    // Predicated region
    $region54: #{tpu_custom_call.1} parent=1 // pred_check
      _
    $region55: #{tpu_custom_call.1} parent=1 // pred_check_branch
      %76 = sbr.rel (0) target = $region57
    $region56: #{tpu_custom_call.1} parent=1 // pred_region
      _
    $region57: #{tpu_custom_call.1} parent=1 // pred_fallthru
      _
    // Predicated region
    $region58: #{tpu_custom_call.1} parent=1 // pred_check
      _
    $region59: #{tpu_custom_call.1} parent=1 // pred_check_branch
      %78 = sbr.rel (0) target = $region61
    $region60: #{tpu_custom_call.1} parent=1 // pred_region
      _
    $region61: #{tpu_custom_call.1} parent=1 // pred_fallthru
      _
    // Predicated region
    $region62: #{tpu_custom_call.1} parent=1 // pred_check
      _
    $region63: #{tpu_custom_call.1} parent=1 // pred_check_branch
      %80 = sbr.rel (0) target = $region65
    $region64: #{tpu_custom_call.1} parent=1 // pred_region
      _
    $region65: #{tpu_custom_call.1} parent=1 // pred_fallthru
      _
    // Predicated region
    $region66: #{tpu_custom_call.1} parent=1 // pred_check
      _
    $region67: #{tpu_custom_call.1} parent=1 // pred_check_branch
      %82 = sbr.rel (0) target = $region69
    $region68: #{tpu_custom_call.1} parent=1 // pred_region
      %84 = dma.done [#allocation3], 8192
    $region69: #{tpu_custom_call.1} parent=1 // pred_fallthru
      _
    // Predicated region
    $region70: #{tpu_custom_call.1} parent=1 // pred_check
      _
    $region71: #{tpu_custom_call.1} parent=1 // pred_check_branch
      %86 = sbr.rel (0) target = $region73
    $region72: #{tpu_custom_call.1} parent=1 // pred_region
      %88 = dma.done [#allocation6], 8192
    $region73: #{tpu_custom_call.1} parent=1 // pred_fallthru
      _
    %v89 = vld [vmem:[%s0] sm:$0xff]
    %v90 = vld [vmem:[%s0 + $0x8] sm:$0xff]
    %v91 = vld [vmem:[%s2] sm:$0xff]
    %92 = vrot.lane.b32.xlu0 %v91, 9
    %v93 = vpop.permute.xlu0 %92
    %v94 = vld [vmem:[%s8] sm:$0x1]
    %v96 = vperm.slane %v94, 0
    %v98 = vmul.f32 %v93, %v96
    %v99 = vld [vmem:[%s3] sm:$0xf]
    %100 = vrot.lane.b32.xlu0 %v91, 8
    %v101 = vpop.permute.xlu0 %100
    %s102 = scalar_lea.vmem %s8, 1
    %v103 = vld [vmem:[%s102] sm:$0x1]
    %v105 = vperm.slane %v103, 0
    %v107 = vmul.f32 %v101, %v105
    %s108 = scalar_lea.vmem %s3, 4
    %v109 = vld [vmem:[%s108] sm:$0xf]
    %vm110 = vcmask 64512
    %v112 = vsel %vm110, %v109, 0
    %114 = vmatpush.msra.mxu0 0.0
    %115 = vmatpush.msra.mxu0 0.0
    %116 = vmatpush.msra.mxu0 0.0
    %117 = vmatpush.msra.mxu0 0.0
    %118 = vmatpush.msra.mxu0 0.0
    %119 = vmatpush.msra.mxu0 0.0
    %120 = vmatpush.msra.mxu0 0.0
    %121 = vmatpush.msra.mxu0 0.0
    %122 = vmatpush.msra.mxu0 0.0
    %123 = vmatpush.msra.mxu0 0.0
    %124 = vmatpush.msra.mxu0 0.0
    %125 = vmatpush.msra.mxu0 0.0
    %126 = vmatpush.msra.mxu0 0.0
    %127 = vmatpush.msra.mxu0 0.0
    %128 = vmatpush.msra.mxu0 0.0
    %129 = vmatpush.msra.mxu0 %v107
    %130 = vmatmul.f32.gmra.mxu0 %v112
    %v131 = vpop.f32.mrf.mxu0
    %v132 = vadd.f32 0.0, %v131
    %133 = vdwg.mxu0
    %v135 = vsel %vm110, %v99, 0
    %137 = vmatpush.msra.mxu0 0.0
    %138 = vmatpush.msra.mxu0 0.0
    %139 = vmatpush.msra.mxu0 0.0
    %140 = vmatpush.msra.mxu0 0.0
    %141 = vmatpush.msra.mxu0 0.0
    %142 = vmatpush.msra.mxu0 0.0
    %143 = vmatpush.msra.mxu0 0.0
    %144 = vmatpush.msra.mxu0 0.0
    %145 = vmatpush.msra.mxu0 0.0
    %146 = vmatpush.msra.mxu0 0.0
    %147 = vmatpush.msra.mxu0 0.0
    %148 = vmatpush.msra.mxu0 0.0
    %149 = vmatpush.msra.mxu0 0.0
    %150 = vmatpush.msra.mxu0 0.0
    %151 = vmatpush.msra.mxu0 0.0
    %152 = vmatpush.msra.mxu0 %v98
    %153 = vmatmul.f32.gmra.mxu0 %v135
    %v154 = vpop.f32.mrf.mxu0
    %v155 = vadd.f32 %v132, %v154
    %156 = vdwg.mxu0
    %157 = vrot.lane.b32.xlu0 %v91, 7
    %v158 = vpop.permute.xlu0 %157
    %s159 = scalar_lea.vmem %s8, 2
    %v160 = vld [vmem:[%s159] sm:$0x1]
    %v162 = vperm.slane %v160, 0
    %v164 = vmul.f32 %v158, %v162
    %s165 = scalar_lea.vmem %s3, 8
    %v166 = vld [vmem:[%s165] sm:$0xf]
    %v168 = vsel %vm110, %v166, 0
    %170 = vmatpush.msra.mxu0 0.0
    %171 = vmatpush.msra.mxu0 0.0
    %172 = vmatpush.msra.mxu0 0.0
    %173 = vmatpush.msra.mxu0 0.0
    %174 = vmatpush.msra.mxu0 0.0
    %175 = vmatpush.msra.mxu0 0.0
    %176 = vmatpush.msra.mxu0 0.0
    %177 = vmatpush.msra.mxu0 0.0
    %178 = vmatpush.msra.mxu0 0.0
    %179 = vmatpush.msra.mxu0 0.0
    %180 = vmatpush.msra.mxu0 0.0
    %181 = vmatpush.msra.mxu0 0.0
    %182 = vmatpush.msra.mxu0 0.0
    %183 = vmatpush.msra.mxu0 0.0
    %184 = vmatpush.msra.mxu0 0.0
    %185 = vmatpush.msra.mxu0 %v164
    %186 = vmatmul.f32.gmra.mxu0 %v168
    %v187 = vpop.f32.mrf.mxu0
    %v188 = vadd.f32 0.0, %v187
    %189 = vdwg.mxu0
    %v190 = vadd.f32 %v155, %v188
    %191 = vrot.lane.b32.xlu0 %v91, 1
    %v192 = vpop.permute.xlu0 %191
    %s193 = scalar_lea.vmem %s8, 3
    %v194 = vld [vmem:[%s193] sm:$0x1]
    %v196 = vperm.slane %v194, 0
    %v198 = vmul.f32 %v192, %v196
    %s199 = scalar_lea.vmem %s3, 12
    %v200 = vld [vmem:[%s199] sm:$0xf]
    %v202 = vsel %vm110, %v200, 0
    %204 = vmatpush.msra.mxu0 0.0
    %205 = vmatpush.msra.mxu0 0.0
    %206 = vmatpush.msra.mxu0 0.0
    %207 = vmatpush.msra.mxu0 0.0
    %208 = vmatpush.msra.mxu0 0.0
    %209 = vmatpush.msra.mxu0 0.0
    %210 = vmatpush.msra.mxu0 0.0
    %211 = vmatpush.msra.mxu0 0.0
    %212 = vmatpush.msra.mxu0 0.0
    %213 = vmatpush.msra.mxu0 0.0
    %214 = vmatpush.msra.mxu0 0.0
    %215 = vmatpush.msra.mxu0 0.0
    %216 = vmatpush.msra.mxu0 0.0
    %217 = vmatpush.msra.mxu0 0.0
    %218 = vmatpush.msra.mxu0 0.0
    %219 = vmatpush.msra.mxu0 %v198
    %220 = vmatmul.f32.gmra.mxu0 %v202
    %v221 = vpop.f32.mrf.mxu0
    %v222 = vadd.f32 0.0, %v221
    %223 = vdwg.mxu0
    %v224 = vadd.f32 %v190, %v222
    %s225 = scalar_lea.vmem %s8, 4
    %v226 = vld [vmem:[%s225] sm:$0x1]
    %v228 = vperm.slane %v226, 0
    %v230 = vmul.f32 %v91, %v228
    %s231 = scalar_lea.vmem %s3, 16
    %v232 = vld [vmem:[%s231] sm:$0xf]
    %v234 = vsel %vm110, %v232, 0
    %236 = vmatpush.msra.mxu0 0.0
    %237 = vmatpush.msra.mxu0 0.0
    %238 = vmatpush.msra.mxu0 0.0
    %239 = vmatpush.msra.mxu0 0.0
    %240 = vmatpush.msra.mxu0 0.0
    %241 = vmatpush.msra.mxu0 0.0
    %242 = vmatpush.msra.mxu0 0.0
    %243 = vmatpush.msra.mxu0 0.0
    %244 = vmatpush.msra.mxu0 0.0
    %245 = vmatpush.msra.mxu0 0.0
    %246 = vmatpush.msra.mxu0 0.0
    %247 = vmatpush.msra.mxu0 0.0
    %248 = vmatpush.msra.mxu0 0.0
    %249 = vmatpush.msra.mxu0 0.0
    %250 = vmatpush.msra.mxu0 0.0
    %251 = vmatpush.msra.mxu0 %v230
    %252 = vmatmul.f32.gmra.mxu0 %v234
    %v253 = vpop.f32.mrf.mxu0
    %v254 = vadd.f32 0.0, %v253
    %255 = vdwg.mxu0
    %v256 = vadd.f32 %v224, %v254
    %257 = vrot.lane.b32.xlu0 %v91, 127
    %v258 = vpop.permute.xlu0 %257
    %s259 = scalar_lea.vmem %s8, 5
    %v260 = vld [vmem:[%s259] sm:$0x1]
    %v262 = vperm.slane %v260, 0
    %v264 = vmul.f32 %v258, %v262
    %s265 = scalar_lea.vmem %s3, 20
    %v266 = vld [vmem:[%s265] sm:$0xf]
    %v268 = vsel %vm110, %v266, 0
    %270 = vmatpush.msra.mxu0 0.0
    %271 = vmatpush.msra.mxu0 0.0
    %272 = vmatpush.msra.mxu0 0.0
    %273 = vmatpush.msra.mxu0 0.0
    %274 = vmatpush.msra.mxu0 0.0
    %275 = vmatpush.msra.mxu0 0.0
    %276 = vmatpush.msra.mxu0 0.0
    %277 = vmatpush.msra.mxu0 0.0
    %278 = vmatpush.msra.mxu0 0.0
    %279 = vmatpush.msra.mxu0 0.0
    %280 = vmatpush.msra.mxu0 0.0
    %281 = vmatpush.msra.mxu0 0.0
    %282 = vmatpush.msra.mxu0 0.0
    %283 = vmatpush.msra.mxu0 0.0
    %284 = vmatpush.msra.mxu0 0.0
    %285 = vmatpush.msra.mxu0 %v264
    %286 = vmatmul.f32.gmra.mxu0 %v268
    %v287 = vpop.f32.mrf.mxu0
    %v288 = vadd.f32 0.0, %v287
    %289 = vdwg.mxu0
    %v290 = vadd.f32 %v256, %v288
    %291 = vrot.lane.b32.xlu0 %v91, 121
    %v292 = vpop.permute.xlu0 %291
    %s293 = scalar_lea.vmem %s8, 6
    %v294 = vld [vmem:[%s293] sm:$0x1]
    %v296 = vperm.slane %v294, 0
    %v298 = vmul.f32 %v292, %v296
    %s299 = scalar_lea.vmem %s3, 24
    %v300 = vld [vmem:[%s299] sm:$0xf]
    %v302 = vsel %vm110, %v300, 0
    %304 = vmatpush.msra.mxu0 0.0
    %305 = vmatpush.msra.mxu0 0.0
    %306 = vmatpush.msra.mxu0 0.0
    %307 = vmatpush.msra.mxu0 0.0
    %308 = vmatpush.msra.mxu0 0.0
    %309 = vmatpush.msra.mxu0 0.0
    %310 = vmatpush.msra.mxu0 0.0
    %311 = vmatpush.msra.mxu0 0.0
    %312 = vmatpush.msra.mxu0 0.0
    %313 = vmatpush.msra.mxu0 0.0
    %314 = vmatpush.msra.mxu0 0.0
    %315 = vmatpush.msra.mxu0 0.0
    %316 = vmatpush.msra.mxu0 0.0
    %317 = vmatpush.msra.mxu0 0.0
    %318 = vmatpush.msra.mxu0 0.0
    %319 = vmatpush.msra.mxu0 %v298
    %320 = vmatmul.f32.gmra.mxu0 %v302
    %v321 = vpop.f32.mrf.mxu0
    %v322 = vadd.f32 0.0, %v321
    %323 = vdwg.mxu0
    %v324 = vadd.f32 %v290, %v322
    %325 = vrot.lane.b32.xlu0 %v91, 120
    %v326 = vpop.permute.xlu0 %325
    %s327 = scalar_lea.vmem %s8, 7
    %v328 = vld [vmem:[%s327] sm:$0x1]
    %v330 = vperm.slane %v328, 0
    %v332 = vmul.f32 %v326, %v330
    %s333 = scalar_lea.vmem %s3, 28
    %v334 = vld [vmem:[%s333] sm:$0xf]
    %v336 = vsel %vm110, %v334, 0
    %338 = vmatpush.msra.mxu0 0.0
    %339 = vmatpush.msra.mxu0 0.0
    %340 = vmatpush.msra.mxu0 0.0
    %341 = vmatpush.msra.mxu0 0.0
    %342 = vmatpush.msra.mxu0 0.0
    %343 = vmatpush.msra.mxu0 0.0
    %344 = vmatpush.msra.mxu0 0.0
    %345 = vmatpush.msra.mxu0 0.0
    %346 = vmatpush.msra.mxu0 0.0
    %347 = vmatpush.msra.mxu0 0.0
    %348 = vmatpush.msra.mxu0 0.0
    %349 = vmatpush.msra.mxu0 0.0
    %350 = vmatpush.msra.mxu0 0.0
    %351 = vmatpush.msra.mxu0 0.0
    %352 = vmatpush.msra.mxu0 0.0
    %353 = vmatpush.msra.mxu0 %v332
    %354 = vmatmul.f32.gmra.mxu0 %v336
    %v355 = vpop.f32.mrf.mxu0
    %v356 = vadd.f32 0.0, %v355
    %357 = vdwg.mxu0
    %v358 = vadd.f32 %v324, %v356
    %359 = vrot.lane.b32.xlu0 %v91, 119
    %v360 = vpop.permute.xlu0 %359
    %s361 = scalar_lea.vmem %s8, 8
    %v362 = vld [vmem:[%s361] sm:$0x1]
    %v364 = vperm.slane %v362, 0
    %v366 = vmul.f32 %v360, %v364
    %s367 = scalar_lea.vmem %s3, 32
    %v368 = vld [vmem:[%s367] sm:$0xf]
    %v370 = vsel %vm110, %v368, 0
    %372 = vmatpush.msra.mxu0 0.0
    %373 = vmatpush.msra.mxu0 0.0
    %374 = vmatpush.msra.mxu0 0.0
    %375 = vmatpush.msra.mxu0 0.0
    %376 = vmatpush.msra.mxu0 0.0
    %377 = vmatpush.msra.mxu0 0.0
    %378 = vmatpush.msra.mxu0 0.0
    %379 = vmatpush.msra.mxu0 0.0
    %380 = vmatpush.msra.mxu0 0.0
    %381 = vmatpush.msra.mxu0 0.0
    %382 = vmatpush.msra.mxu0 0.0
    %383 = vmatpush.msra.mxu0 0.0
    %384 = vmatpush.msra.mxu0 0.0
    %385 = vmatpush.msra.mxu0 0.0
    %386 = vmatpush.msra.mxu0 0.0
    %387 = vmatpush.msra.mxu0 %v366
    %388 = vmatmul.f32.gmra.mxu0 %v370
    %v389 = vpop.f32.mrf.mxu0
    %v390 = vadd.f32 0.0, %v389
    %391 = vdwg.mxu0
    %v392 = vadd.f32 %v358, %v390
    %v393 = vld [vmem:[%s4] sm:$0xf]
    %395 = vset.pattern.permute.xlu0 0
    %396 = vperm.xlu0 %395, %v393
    %v397 = vpop.permute.xlu0 %396
    %v399 = vadd.f32 %v392, %v397
    %v400 = vmax.f32 %v399, 0.0
    %v401 = vld [vmem:[#allocation2] sm:$0xff]
    %v402 = vld [vmem:[#allocation2 + $0x8] sm:$0xff]
    %v403 = vld [vmem:[#allocation2 + $0x10] sm:$0xff]
    %v404 = vld [vmem:[#allocation2 + $0x18] sm:$0xff]
    %v405 = vld [vmem:[#allocation2 + $0x20] sm:$0xff]
    %v406 = vld [vmem:[#allocation2 + $0x28] sm:$0xff]
    %v407 = vld [vmem:[#allocation2 + $0x30] sm:$0xff]
    %v408 = vld [vmem:[#allocation2 + $0x38] sm:$0xff]
    %v409 = vld [vmem:[#allocation2 + $0x40] sm:$0xff]
    %v410 = vld [vmem:[#allocation2 + $0x48] sm:$0xff]
    %v411 = vld [vmem:[#allocation2 + $0x50] sm:$0xff]
    %v412 = vld [vmem:[#allocation2 + $0x58] sm:$0xff]
    %v413 = vld [vmem:[#allocation2 + $0x60] sm:$0xff]
    %v414 = vld [vmem:[#allocation2 + $0x68] sm:$0xff]
    %v415 = vld [vmem:[#allocation2 + $0x70] sm:$0xff]
    %v416 = vld [vmem:[#allocation2 + $0x78] sm:$0xff]
    %v417 = vld [vmem:[#allocation2 + $0x80] sm:$0xff]
    %v418 = vld [vmem:[#allocation2 + $0x88] sm:$0xff]
    %v419 = vld [vmem:[#allocation2 + $0x90] sm:$0xff]
    %v420 = vld [vmem:[#allocation2 + $0x98] sm:$0xff]
    %v421 = vld [vmem:[#allocation2 + $0xa0] sm:$0xff]
    %v422 = vld [vmem:[#allocation2 + $0xa8] sm:$0xff]
    %v423 = vld [vmem:[#allocation2 + $0xb0] sm:$0xff]
    %v424 = vld [vmem:[#allocation2 + $0xb8] sm:$0xff]
    %v425 = vld [vmem:[#allocation2 + $0xc0] sm:$0xff]
    %v426 = vld [vmem:[#allocation2 + $0xc8] sm:$0xff]
    %v427 = vld [vmem:[#allocation2 + $0xd0] sm:$0xff]
    %v428 = vld [vmem:[#allocation2 + $0xd8] sm:$0xff]
    %v429 = vld [vmem:[#allocation2 + $0xe0] sm:$0xff]
    %v430 = vld [vmem:[#allocation2 + $0xe8] sm:$0xff]
    %v431 = vld [vmem:[#allocation2 + $0xf0] sm:$0xff]
    %v432 = vld [vmem:[#allocation2 + $0xf8] sm:$0xff]
    %v433 = vld [vmem:[#allocation2 + $0x100] sm:$0xff]
    %v434 = vld [vmem:[#allocation2 + $0x108] sm:$0xff]
    %v435 = vld [vmem:[#allocation2 + $0x110] sm:$0xff]
    %v436 = vld [vmem:[#allocation2 + $0x118] sm:$0xff]
    %v437 = vld [vmem:[#allocation2 + $0x120] sm:$0xff]
    %v438 = vld [vmem:[#allocation2 + $0x128] sm:$0xff]
    %v439 = vld [vmem:[#allocation2 + $0x130] sm:$0xff]
    %v440 = vld [vmem:[#allocation2 + $0x138] sm:$0xff]
    %v441 = vld [vmem:[#allocation2 + $0x140] sm:$0xff]
    %v442 = vld [vmem:[#allocation2 + $0x148] sm:$0xff]
    %v443 = vld [vmem:[#allocation2 + $0x150] sm:$0xff]
    %v444 = vld [vmem:[#allocation2 + $0x158] sm:$0xff]
    %v445 = vld [vmem:[#allocation2 + $0x160] sm:$0xff]
    %v446 = vld [vmem:[#allocation2 + $0x168] sm:$0xff]
    %v447 = vld [vmem:[#allocation2 + $0x170] sm:$0xff]
    %v448 = vld [vmem:[#allocation2 + $0x178] sm:$0xff]
    %v449 = vld [vmem:[#allocation2 + $0x180] sm:$0xff]
    %v450 = vld [vmem:[#allocation2 + $0x188] sm:$0xff]
    %v451 = vld [vmem:[#allocation2 + $0x190] sm:$0xff]
    %v452 = vld [vmem:[#allocation2 + $0x198] sm:$0xff]
    %v453 = vld [vmem:[#allocation2 + $0x1a0] sm:$0xff]
    %v454 = vld [vmem:[#allocation2 + $0x1a8] sm:$0xff]
    %v455 = vld [vmem:[#allocation2 + $0x1b0] sm:$0xff]
    %v456 = vld [vmem:[#allocation2 + $0x1b8] sm:$0xff]
    %v457 = vld [vmem:[#allocation2 + $0x1c0] sm:$0xff]
    %v458 = vld [vmem:[#allocation2 + $0x1c8] sm:$0xff]
    %v459 = vld [vmem:[#allocation2 + $0x1d0] sm:$0xff]
    %v460 = vld [vmem:[#allocation2 + $0x1d8] sm:$0xff]
    %v461 = vld [vmem:[#allocation2 + $0x1e0] sm:$0xff]
    %v462 = vld [vmem:[#allocation2 + $0x1e8] sm:$0xff]
    %v463 = vld [vmem:[#allocation2 + $0x1f0] sm:$0xff]
    %v464 = vld [vmem:[#allocation2 + $0x1f8] sm:$0xff]
    %467 = vst [vmem:[#allocation1] ss:$2 sm:$0xff] %v89
    %s468 = scalar_lea.vmem [#allocation1], 16
    %469 = vst [vmem:[%s468] ss:$2 sm:$0xff] %v90
    %v470 = vld.sshfl [vmem:[#allocation1] sm:$0xff pattern:$0x75316420]
    %v471 = vld.sshfl [vmem:[#allocation1 + $0x8] sm:$0xff pattern:$0x75316420]
    %v472 = vld.sshfl [vmem:[#allocation1 + $0x10] sm:$0xff pattern:$0x75316420]
    %v473 = vld.sshfl [vmem:[#allocation1 + $0x18] sm:$0xff pattern:$0x75316420]
    %478 = vmatpush.msra.mxu0 %v461
    %479 = vmatpush.msra.mxu0 %v457
    %480 = vmatpush.msra.mxu0 %v453
    %481 = vmatpush.msra.mxu0 %v449
    %482 = vmatpush.msra.mxu0 %v445
    %483 = vmatpush.msra.mxu0 %v441
    %484 = vmatpush.msra.mxu0 %v437
    %485 = vmatpush.msra.mxu0 %v433
    %486 = vmatpush.msra.mxu0 %v429
    %487 = vmatpush.msra.mxu0 %v425
    %488 = vmatpush.msra.mxu0 %v421
    %489 = vmatpush.msra.mxu0 %v417
    %490 = vmatpush.msra.mxu0 %v413
    %491 = vmatpush.msra.mxu0 %v409
    %492 = vmatpush.msra.mxu0 %v405
    %493 = vmatpush.msra.mxu0 %v401
    %494 = vmatmul.f32.gmra.mxu0 %v400
    %v495 = vpop.f32.mrf.mxu0
    %v496 = vadd.f32 %v470, %v495
    %497 = vdwg.mxu0
    %498 = vmatpush.msra.mxu0 %v462
    %499 = vmatpush.msra.mxu0 %v458
    %500 = vmatpush.msra.mxu0 %v454
    %501 = vmatpush.msra.mxu0 %v450
    %502 = vmatpush.msra.mxu0 %v446
    %503 = vmatpush.msra.mxu0 %v442
    %504 = vmatpush.msra.mxu0 %v438
    %505 = vmatpush.msra.mxu0 %v434
    %506 = vmatpush.msra.mxu0 %v430
    %507 = vmatpush.msra.mxu0 %v426
    %508 = vmatpush.msra.mxu0 %v422
    %509 = vmatpush.msra.mxu0 %v418
    %510 = vmatpush.msra.mxu0 %v414
    %511 = vmatpush.msra.mxu0 %v410
    %512 = vmatpush.msra.mxu0 %v406
    %513 = vmatpush.msra.mxu0 %v402
    %514 = vmatmul.f32.gmra.mxu0 %v400
    %v515 = vpop.f32.mrf.mxu0
    %v516 = vadd.f32 %v471, %v515
    %517 = vdwg.mxu0
    %518 = vmatpush.msra.mxu0 %v463
    %519 = vmatpush.msra.mxu0 %v459
    %520 = vmatpush.msra.mxu0 %v455
    %521 = vmatpush.msra.mxu0 %v451
    %522 = vmatpush.msra.mxu0 %v447
    %523 = vmatpush.msra.mxu0 %v443
    %524 = vmatpush.msra.mxu0 %v439
    %525 = vmatpush.msra.mxu0 %v435
    %526 = vmatpush.msra.mxu0 %v431
    %527 = vmatpush.msra.mxu0 %v427
    %528 = vmatpush.msra.mxu0 %v423
    %529 = vmatpush.msra.mxu0 %v419
    %530 = vmatpush.msra.mxu0 %v415
    %531 = vmatpush.msra.mxu0 %v411
    %532 = vmatpush.msra.mxu0 %v407
    %533 = vmatpush.msra.mxu0 %v403
    %534 = vmatmul.f32.gmra.mxu0 %v400
    %v535 = vpop.f32.mrf.mxu0
    %v536 = vadd.f32 %v472, %v535
    %537 = vdwg.mxu0
    %538 = vmatpush.msra.mxu0 %v464
    %539 = vmatpush.msra.mxu0 %v460
    %540 = vmatpush.msra.mxu0 %v456
    %541 = vmatpush.msra.mxu0 %v452
    %542 = vmatpush.msra.mxu0 %v448
    %543 = vmatpush.msra.mxu0 %v444
    %544 = vmatpush.msra.mxu0 %v440
    %545 = vmatpush.msra.mxu0 %v436
    %546 = vmatpush.msra.mxu0 %v432
    %547 = vmatpush.msra.mxu0 %v428
    %548 = vmatpush.msra.mxu0 %v424
    %549 = vmatpush.msra.mxu0 %v420
    %550 = vmatpush.msra.mxu0 %v416
    %551 = vmatpush.msra.mxu0 %v412
    %552 = vmatpush.msra.mxu0 %v408
    %553 = vmatpush.msra.mxu0 %v404
    %554 = vmatmul.f32.gmra.mxu0 %v400
    %v555 = vpop.f32.mrf.mxu0
    %v556 = vadd.f32 %v473, %v555
    %557 = vdwg.mxu0
    %558 = vrot.lane.b32.xlu0 %v496, 17
    %v559 = vpop.permute.xlu0 %558
    %560 = vrot.lane.b32.xlu0 %v516, 17
    %v561 = vpop.permute.xlu0 %560
    %562 = vrot.lane.b32.xlu0 %v536, 17
    %v563 = vpop.permute.xlu0 %562
    %564 = vrot.lane.b32.xlu0 %v556, 17
    %v565 = vpop.permute.xlu0 %564
    %v566 = vlaneseq
    %v567 = vand.u32 %v566, 127
    %vm568 = vcmp.lt.s32.totalorder %v567, 17
    %v569 = vsel %vm568, %v563, %v565
    %v570 = vsel %vm568, %v561, %v563
    %v571 = vsel %vm568, %v559, %v561
    %v572 = vsel %vm568, %v565, %v559
    %v573 = vld [vmem:[%s1] sm:$0xf]
    %v575 = vperm.slane %v573, 0
    %v576 = vperm.slane %v573, 1
    %v577 = vperm.slane %v573, 2
    %v578 = vperm.slane %v573, 3
    %v583 = vmul.f32 %v572, %v575
    %v584 = vmul.f32 %v571, %v576
    %v585 = vmul.f32 %v570, %v577
    %v586 = vmul.f32 %v569, %v578
    %v587 = vld [vmem:[%s6] sm:$0xf]
    %588 = vrot.lane.b32.xlu0 %v496, 16
    %v589 = vpop.permute.xlu0 %588
    %590 = vrot.lane.b32.xlu0 %v516, 16
    %v591 = vpop.permute.xlu0 %590
    %592 = vrot.lane.b32.xlu0 %v536, 16
    %v593 = vpop.permute.xlu0 %592
    %594 = vrot.lane.b32.xlu0 %v556, 16
    %v595 = vpop.permute.xlu0 %594
    %vm596 = vcmp.lt.s32.totalorder %v567, 16
    %v597 = vsel %vm596, %v593, %v595
    %v598 = vsel %vm596, %v591, %v593
    %v599 = vsel %vm596, %v589, %v591
    %v600 = vsel %vm596, %v595, %v589
    %s601 = scalar_lea.vmem %s1, 4
    %v602 = vld [vmem:[%s601] sm:$0xf]
    %v604 = vperm.slane %v602, 0
    %v605 = vperm.slane %v602, 1
    %v606 = vperm.slane %v602, 2
    %v607 = vperm.slane %v602, 3
    %v612 = vmul.f32 %v600, %v604
    %v613 = vmul.f32 %v599, %v605
    %v614 = vmul.f32 %v598, %v606
    %v615 = vmul.f32 %v597, %v607
    %s616 = scalar_lea.vmem %s6, 4
    %v617 = vld [vmem:[%s616] sm:$0xf]
    %vm618 = vcmask 31744
    %v620 = vsel %vm618, %v617, 0
    %vm622 = vcmask 1043456
    %v624 = vsel %vm622, %v612, 0
    %v627 = vsel %vm622, %v613, 0
    %v630 = vsel %vm622, %v614, 0
    %v633 = vsel %vm622, %v615, 0
    %635 = vmatpush.msra.mxu0 0.0
    %636 = vmatpush.msra.mxu0 0.0
    %637 = vmatpush.msra.mxu0 0.0
    %638 = vmatpush.msra.mxu0 0.0
    %639 = vmatpush.msra.mxu0 0.0
    %640 = vmatpush.msra.mxu0 0.0
    %641 = vmatpush.msra.mxu0 0.0
    %642 = vmatpush.msra.mxu0 0.0
    %643 = vmatpush.msra.mxu0 0.0
    %644 = vmatpush.msra.mxu0 0.0
    %645 = vmatpush.msra.mxu0 0.0
    %646 = vmatpush.msra.mxu0 0.0
    %647 = vmatpush.msra.mxu0 0.0
    %648 = vmatpush.msra.mxu0 0.0
    %649 = vmatpush.msra.mxu0 0.0
    %650 = vmatpush.msra.mxu0 %v624
    %651 = vmatmul.f32.gmra.mxu0 %v620
    %v652 = vpop.f32.mrf.mxu0
    %v653 = vadd.f32 0.0, %v652
    %654 = vdwg.mxu0
    %655 = vmatpush.msra.mxu0 0.0
    %656 = vmatpush.msra.mxu0 0.0
    %657 = vmatpush.msra.mxu0 0.0
    %658 = vmatpush.msra.mxu0 0.0
    %659 = vmatpush.msra.mxu0 0.0
    %660 = vmatpush.msra.mxu0 0.0
    %661 = vmatpush.msra.mxu0 0.0
    %662 = vmatpush.msra.mxu0 0.0
    %663 = vmatpush.msra.mxu0 0.0
    %664 = vmatpush.msra.mxu0 0.0
    %665 = vmatpush.msra.mxu0 0.0
    %666 = vmatpush.msra.mxu0 0.0
    %667 = vmatpush.msra.mxu0 0.0
    %668 = vmatpush.msra.mxu0 0.0
    %669 = vmatpush.msra.mxu0 0.0
    %670 = vmatpush.msra.mxu0 %v627
    %671 = vmatmul.f32.gmra.mxu0 %v620
    %v672 = vpop.f32.mrf.mxu0
    %v673 = vadd.f32 0.0, %v672
    %674 = vdwg.mxu0
    %675 = vmatpush.msra.mxu0 0.0
    %676 = vmatpush.msra.mxu0 0.0
    %677 = vmatpush.msra.mxu0 0.0
    %678 = vmatpush.msra.mxu0 0.0
    %679 = vmatpush.msra.mxu0 0.0
    %680 = vmatpush.msra.mxu0 0.0
    %681 = vmatpush.msra.mxu0 0.0
    %682 = vmatpush.msra.mxu0 0.0
    %683 = vmatpush.msra.mxu0 0.0
    %684 = vmatpush.msra.mxu0 0.0
    %685 = vmatpush.msra.mxu0 0.0
    %686 = vmatpush.msra.mxu0 0.0
    %687 = vmatpush.msra.mxu0 0.0
    %688 = vmatpush.msra.mxu0 0.0
    %689 = vmatpush.msra.mxu0 0.0
    %690 = vmatpush.msra.mxu0 %v630
    %691 = vmatmul.f32.gmra.mxu0 %v620
    %v692 = vpop.f32.mrf.mxu0
    %v693 = vadd.f32 0.0, %v692
    %694 = vdwg.mxu0
    %695 = vmatpush.msra.mxu0 0.0
    %696 = vmatpush.msra.mxu0 0.0
    %697 = vmatpush.msra.mxu0 0.0
    %698 = vmatpush.msra.mxu0 0.0
    %699 = vmatpush.msra.mxu0 0.0
    %700 = vmatpush.msra.mxu0 0.0
    %701 = vmatpush.msra.mxu0 0.0
    %702 = vmatpush.msra.mxu0 0.0
    %703 = vmatpush.msra.mxu0 0.0
    %704 = vmatpush.msra.mxu0 0.0
    %705 = vmatpush.msra.mxu0 0.0
    %706 = vmatpush.msra.mxu0 0.0
    %707 = vmatpush.msra.mxu0 0.0
    %708 = vmatpush.msra.mxu0 0.0
    %709 = vmatpush.msra.mxu0 0.0
    %710 = vmatpush.msra.mxu0 %v633
    %711 = vmatmul.f32.gmra.mxu0 %v620
    %v712 = vpop.f32.mrf.mxu0
    %v713 = vadd.f32 0.0, %v712
    %714 = vdwg.mxu0
    %v716 = vsel %vm618, %v587, 0
    %v719 = vsel %vm622, %v583, 0
    %v722 = vsel %vm622, %v584, 0
    %v725 = vsel %vm622, %v585, 0
    %v728 = vsel %vm622, %v586, 0
    %730 = vmatpush.msra.mxu0 0.0
    %731 = vmatpush.msra.mxu0 0.0
    %732 = vmatpush.msra.mxu0 0.0
    %733 = vmatpush.msra.mxu0 0.0
    %734 = vmatpush.msra.mxu0 0.0
    %735 = vmatpush.msra.mxu0 0.0
    %736 = vmatpush.msra.mxu0 0.0
    %737 = vmatpush.msra.mxu0 0.0
    %738 = vmatpush.msra.mxu0 0.0
    %739 = vmatpush.msra.mxu0 0.0
    %740 = vmatpush.msra.mxu0 0.0
    %741 = vmatpush.msra.mxu0 0.0
    %742 = vmatpush.msra.mxu0 0.0
    %743 = vmatpush.msra.mxu0 0.0
    %744 = vmatpush.msra.mxu0 0.0
    %745 = vmatpush.msra.mxu0 %v719
    %746 = vmatmul.f32.gmra.mxu0 %v716
    %v747 = vpop.f32.mrf.mxu0
    %v748 = vadd.f32 %v653, %v747
    %749 = vdwg.mxu0
    %750 = vmatpush.msra.mxu0 0.0
    %751 = vmatpush.msra.mxu0 0.0
    %752 = vmatpush.msra.mxu0 0.0
    %753 = vmatpush.msra.mxu0 0.0
    %754 = vmatpush.msra.mxu0 0.0
    %755 = vmatpush.msra.mxu0 0.0
    %756 = vmatpush.msra.mxu0 0.0
    %757 = vmatpush.msra.mxu0 0.0
    %758 = vmatpush.msra.mxu0 0.0
    %759 = vmatpush.msra.mxu0 0.0
    %760 = vmatpush.msra.mxu0 0.0
    %761 = vmatpush.msra.mxu0 0.0
    %762 = vmatpush.msra.mxu0 0.0
    %763 = vmatpush.msra.mxu0 0.0
    %764 = vmatpush.msra.mxu0 0.0
    %765 = vmatpush.msra.mxu0 %v722
    %766 = vmatmul.f32.gmra.mxu0 %v716
    %v767 = vpop.f32.mrf.mxu0
    %v768 = vadd.f32 %v673, %v767
    %769 = vdwg.mxu0
    %770 = vmatpush.msra.mxu0 0.0
    %771 = vmatpush.msra.mxu0 0.0
    %772 = vmatpush.msra.mxu0 0.0
    %773 = vmatpush.msra.mxu0 0.0
    %774 = vmatpush.msra.mxu0 0.0
    %775 = vmatpush.msra.mxu0 0.0
    %776 = vmatpush.msra.mxu0 0.0
    %777 = vmatpush.msra.mxu0 0.0
    %778 = vmatpush.msra.mxu0 0.0
    %779 = vmatpush.msra.mxu0 0.0
    %780 = vmatpush.msra.mxu0 0.0
    %781 = vmatpush.msra.mxu0 0.0
    %782 = vmatpush.msra.mxu0 0.0
    %783 = vmatpush.msra.mxu0 0.0
    %784 = vmatpush.msra.mxu0 0.0
    %785 = vmatpush.msra.mxu0 %v725
    %786 = vmatmul.f32.gmra.mxu0 %v716
    %v787 = vpop.f32.mrf.mxu0
    %v788 = vadd.f32 %v693, %v787
    %789 = vdwg.mxu0
    %790 = vmatpush.msra.mxu0 0.0
    %791 = vmatpush.msra.mxu0 0.0
    %792 = vmatpush.msra.mxu0 0.0
    %793 = vmatpush.msra.mxu0 0.0
    %794 = vmatpush.msra.mxu0 0.0
    %795 = vmatpush.msra.mxu0 0.0
    %796 = vmatpush.msra.mxu0 0.0
    %797 = vmatpush.msra.mxu0 0.0
    %798 = vmatpush.msra.mxu0 0.0
    %799 = vmatpush.msra.mxu0 0.0
    %800 = vmatpush.msra.mxu0 0.0
    %801 = vmatpush.msra.mxu0 0.0
    %802 = vmatpush.msra.mxu0 0.0
    %803 = vmatpush.msra.mxu0 0.0
    %804 = vmatpush.msra.mxu0 0.0
    %805 = vmatpush.msra.mxu0 %v728
    %806 = vmatmul.f32.gmra.mxu0 %v716
    %v807 = vpop.f32.mrf.mxu0
    %v808 = vadd.f32 %v713, %v807
    %809 = vdwg.mxu0
    %810 = vrot.lane.b32.xlu0 %v496, 15
    %v811 = vpop.permute.xlu0 %810
    %812 = vrot.lane.b32.xlu0 %v516, 15
    %v813 = vpop.permute.xlu0 %812
    %814 = vrot.lane.b32.xlu0 %v536, 15
    %v815 = vpop.permute.xlu0 %814
    %816 = vrot.lane.b32.xlu0 %v556, 15
    %v817 = vpop.permute.xlu0 %816
    %vm818 = vcmp.lt.s32.totalorder %v567, 15
    %v819 = vsel %vm818, %v815, %v817
    %v820 = vsel %vm818, %v813, %v815
    %v821 = vsel %vm818, %v811, %v813
    %v822 = vsel %vm818, %v817, %v811
    %s823 = scalar_lea.vmem %s1, 8
    %v824 = vld [vmem:[%s823] sm:$0xf]
    %v826 = vperm.slane %v824, 0
    %v827 = vperm.slane %v824, 1
    %v828 = vperm.slane %v824, 2
    %v829 = vperm.slane %v824, 3
    %v834 = vmul.f32 %v822, %v826
    %v835 = vmul.f32 %v821, %v827
    %v836 = vmul.f32 %v820, %v828
    %v837 = vmul.f32 %v819, %v829
    %s838 = scalar_lea.vmem %s6, 8
    %v839 = vld [vmem:[%s838] sm:$0xf]
    %v841 = vsel %vm618, %v839, 0
    %v844 = vsel %vm622, %v834, 0
    %v847 = vsel %vm622, %v835, 0
    %v850 = vsel %vm622, %v836, 0
    %v853 = vsel %vm622, %v837, 0
    %855 = vmatpush.msra.mxu0 0.0
    %856 = vmatpush.msra.mxu0 0.0
    %857 = vmatpush.msra.mxu0 0.0
    %858 = vmatpush.msra.mxu0 0.0
    %859 = vmatpush.msra.mxu0 0.0
    %860 = vmatpush.msra.mxu0 0.0
    %861 = vmatpush.msra.mxu0 0.0
    %862 = vmatpush.msra.mxu0 0.0
    %863 = vmatpush.msra.mxu0 0.0
    %864 = vmatpush.msra.mxu0 0.0
    %865 = vmatpush.msra.mxu0 0.0
    %866 = vmatpush.msra.mxu0 0.0
    %867 = vmatpush.msra.mxu0 0.0
    %868 = vmatpush.msra.mxu0 0.0
    %869 = vmatpush.msra.mxu0 0.0
    %870 = vmatpush.msra.mxu0 %v844
    %871 = vmatmul.f32.gmra.mxu0 %v841
    %v872 = vpop.f32.mrf.mxu0
    %v873 = vadd.f32 0.0, %v872
    %874 = vdwg.mxu0
    %875 = vmatpush.msra.mxu0 0.0
    %876 = vmatpush.msra.mxu0 0.0
    %877 = vmatpush.msra.mxu0 0.0
    %878 = vmatpush.msra.mxu0 0.0
    %879 = vmatpush.msra.mxu0 0.0
    %880 = vmatpush.msra.mxu0 0.0
    %881 = vmatpush.msra.mxu0 0.0
    %882 = vmatpush.msra.mxu0 0.0
    %883 = vmatpush.msra.mxu0 0.0
    %884 = vmatpush.msra.mxu0 0.0
    %885 = vmatpush.msra.mxu0 0.0
    %886 = vmatpush.msra.mxu0 0.0
    %887 = vmatpush.msra.mxu0 0.0
    %888 = vmatpush.msra.mxu0 0.0
    %889 = vmatpush.msra.mxu0 0.0
    %890 = vmatpush.msra.mxu0 %v847
    %891 = vmatmul.f32.gmra.mxu0 %v841
    %v892 = vpop.f32.mrf.mxu0
    %v893 = vadd.f32 0.0, %v892
    %894 = vdwg.mxu0
    %895 = vmatpush.msra.mxu0 0.0
    %896 = vmatpush.msra.mxu0 0.0
    %897 = vmatpush.msra.mxu0 0.0
    %898 = vmatpush.msra.mxu0 0.0
    %899 = vmatpush.msra.mxu0 0.0
    %900 = vmatpush.msra.mxu0 0.0
    %901 = vmatpush.msra.mxu0 0.0
    %902 = vmatpush.msra.mxu0 0.0
    %903 = vmatpush.msra.mxu0 0.0
    %904 = vmatpush.msra.mxu0 0.0
    %905 = vmatpush.msra.mxu0 0.0
    %906 = vmatpush.msra.mxu0 0.0
    %907 = vmatpush.msra.mxu0 0.0
    %908 = vmatpush.msra.mxu0 0.0
    %909 = vmatpush.msra.mxu0 0.0
    %910 = vmatpush.msra.mxu0 %v850
    %911 = vmatmul.f32.gmra.mxu0 %v841
    %v912 = vpop.f32.mrf.mxu0
    %v913 = vadd.f32 0.0, %v912
    %914 = vdwg.mxu0
    %915 = vmatpush.msra.mxu0 0.0
    %916 = vmatpush.msra.mxu0 0.0
    %917 = vmatpush.msra.mxu0 0.0
    %918 = vmatpush.msra.mxu0 0.0
    %919 = vmatpush.msra.mxu0 0.0
    %920 = vmatpush.msra.mxu0 0.0
    %921 = vmatpush.msra.mxu0 0.0
    %922 = vmatpush.msra.mxu0 0.0
    %923 = vmatpush.msra.mxu0 0.0
    %924 = vmatpush.msra.mxu0 0.0
    %925 = vmatpush.msra.mxu0 0.0
    %926 = vmatpush.msra.mxu0 0.0
    %927 = vmatpush.msra.mxu0 0.0
    %928 = vmatpush.msra.mxu0 0.0
    %929 = vmatpush.msra.mxu0 0.0
    %930 = vmatpush.msra.mxu0 %v853
    %931 = vmatmul.f32.gmra.mxu0 %v841
    %v932 = vpop.f32.mrf.mxu0
    %v933 = vadd.f32 0.0, %v932
    %934 = vdwg.mxu0
    %v935 = vadd.f32 %v748, %v873
    %v936 = vadd.f32 %v768, %v893
    %v937 = vadd.f32 %v788, %v913
    %v938 = vadd.f32 %v808, %v933
    %939 = vrot.lane.b32.xlu0 %v496, 1
    %v940 = vpop.permute.xlu0 %939
    %941 = vrot.lane.b32.xlu0 %v516, 1
    %v942 = vpop.permute.xlu0 %941
    %943 = vrot.lane.b32.xlu0 %v536, 1
    %v944 = vpop.permute.xlu0 %943
    %945 = vrot.lane.b32.xlu0 %v556, 1
    %v946 = vpop.permute.xlu0 %945
    %vm947 = vcmp.lt.s32.totalorder %v567, 1
    %v948 = vsel %vm947, %v944, %v946
    %v949 = vsel %vm947, %v942, %v944
    %v950 = vsel %vm947, %v940, %v942
    %v951 = vsel %vm947, %v946, %v940
    %s952 = scalar_lea.vmem %s1, 12
    %v953 = vld [vmem:[%s952] sm:$0xf]
    %v955 = vperm.slane %v953, 0
    %v956 = vperm.slane %v953, 1
    %v957 = vperm.slane %v953, 2
    %v958 = vperm.slane %v953, 3
    %v963 = vmul.f32 %v951, %v955
    %v964 = vmul.f32 %v950, %v956
    %v965 = vmul.f32 %v949, %v957
    %v966 = vmul.f32 %v948, %v958
    %s967 = scalar_lea.vmem %s6, 12
    %v968 = vld [vmem:[%s967] sm:$0xf]
    %v970 = vsel %vm618, %v968, 0
    %v973 = vsel %vm622, %v963, 0
    %v976 = vsel %vm622, %v964, 0
    %v979 = vsel %vm622, %v965, 0
    %v982 = vsel %vm622, %v966, 0
    %984 = vmatpush.msra.mxu0 0.0
    %985 = vmatpush.msra.mxu0 0.0
    %986 = vmatpush.msra.mxu0 0.0
    %987 = vmatpush.msra.mxu0 0.0
    %988 = vmatpush.msra.mxu0 0.0
    %989 = vmatpush.msra.mxu0 0.0
    %990 = vmatpush.msra.mxu0 0.0
    %991 = vmatpush.msra.mxu0 0.0
    %992 = vmatpush.msra.mxu0 0.0
    %993 = vmatpush.msra.mxu0 0.0
    %994 = vmatpush.msra.mxu0 0.0
    %995 = vmatpush.msra.mxu0 0.0
    %996 = vmatpush.msra.mxu0 0.0
    %997 = vmatpush.msra.mxu0 0.0
    %998 = vmatpush.msra.mxu0 0.0
    %999 = vmatpush.msra.mxu0 %v973
    %1000 = vmatmul.f32.gmra.mxu0 %v970
    %v1001 = vpop.f32.mrf.mxu0
    %v1002 = vadd.f32 0.0, %v1001
    %1003 = vdwg.mxu0
    %1004 = vmatpush.msra.mxu0 0.0
    %1005 = vmatpush.msra.mxu0 0.0
    %1006 = vmatpush.msra.mxu0 0.0
    %1007 = vmatpush.msra.mxu0 0.0
    %1008 = vmatpush.msra.mxu0 0.0
    %1009 = vmatpush.msra.mxu0 0.0
    %1010 = vmatpush.msra.mxu0 0.0
    %1011 = vmatpush.msra.mxu0 0.0
    %1012 = vmatpush.msra.mxu0 0.0
    %1013 = vmatpush.msra.mxu0 0.0
    %1014 = vmatpush.msra.mxu0 0.0
    %1015 = vmatpush.msra.mxu0 0.0
    %1016 = vmatpush.msra.mxu0 0.0
    %1017 = vmatpush.msra.mxu0 0.0
    %1018 = vmatpush.msra.mxu0 0.0
    %1019 = vmatpush.msra.mxu0 %v976
    %1020 = vmatmul.f32.gmra.mxu0 %v970
    %v1021 = vpop.f32.mrf.mxu0
    %v1022 = vadd.f32 0.0, %v1021
    %1023 = vdwg.mxu0
    %1024 = vmatpush.msra.mxu0 0.0
    %1025 = vmatpush.msra.mxu0 0.0
    %1026 = vmatpush.msra.mxu0 0.0
    %1027 = vmatpush.msra.mxu0 0.0
    %1028 = vmatpush.msra.mxu0 0.0
    %1029 = vmatpush.msra.mxu0 0.0
    %1030 = vmatpush.msra.mxu0 0.0
    %1031 = vmatpush.msra.mxu0 0.0
    %1032 = vmatpush.msra.mxu0 0.0
    %1033 = vmatpush.msra.mxu0 0.0
    %1034 = vmatpush.msra.mxu0 0.0
    %1035 = vmatpush.msra.mxu0 0.0
    %1036 = vmatpush.msra.mxu0 0.0
    %1037 = vmatpush.msra.mxu0 0.0
    %1038 = vmatpush.msra.mxu0 0.0
    %1039 = vmatpush.msra.mxu0 %v979
    %1040 = vmatmul.f32.gmra.mxu0 %v970
    %v1041 = vpop.f32.mrf.mxu0
    %v1042 = vadd.f32 0.0, %v1041
    %1043 = vdwg.mxu0
    %1044 = vmatpush.msra.mxu0 0.0
    %1045 = vmatpush.msra.mxu0 0.0
    %1046 = vmatpush.msra.mxu0 0.0
    %1047 = vmatpush.msra.mxu0 0.0
    %1048 = vmatpush.msra.mxu0 0.0
    %1049 = vmatpush.msra.mxu0 0.0
    %1050 = vmatpush.msra.mxu0 0.0
    %1051 = vmatpush.msra.mxu0 0.0
    %1052 = vmatpush.msra.mxu0 0.0
    %1053 = vmatpush.msra.mxu0 0.0
    %1054 = vmatpush.msra.mxu0 0.0
    %1055 = vmatpush.msra.mxu0 0.0
    %1056 = vmatpush.msra.mxu0 0.0
    %1057 = vmatpush.msra.mxu0 0.0
    %1058 = vmatpush.msra.mxu0 0.0
    %1059 = vmatpush.msra.mxu0 %v982
    %1060 = vmatmul.f32.gmra.mxu0 %v970
    %v1061 = vpop.f32.mrf.mxu0
    %v1062 = vadd.f32 0.0, %v1061
    %1063 = vdwg.mxu0
    %v1064 = vadd.f32 %v935, %v1002
    %v1065 = vadd.f32 %v936, %v1022
    %v1066 = vadd.f32 %v937, %v1042
    %v1067 = vadd.f32 %v938, %v1062
    %s1068 = scalar_lea.vmem %s1, 16
    %v1069 = vld [vmem:[%s1068] sm:$0xf]
    %v1071 = vperm.slane %v1069, 0
    %v1072 = vperm.slane %v1069, 1
    %v1073 = vperm.slane %v1069, 2
    %v1074 = vperm.slane %v1069, 3
    %v1079 = vmul.f32 %v496, %v1071
    %v1080 = vmul.f32 %v516, %v1072
    %v1081 = vmul.f32 %v536, %v1073
    %v1082 = vmul.f32 %v556, %v1074
    %s1083 = scalar_lea.vmem %s6, 16
    %v1084 = vld [vmem:[%s1083] sm:$0xf]
    %v1086 = vsel %vm618, %v1084, 0
    %v1089 = vsel %vm622, %v1079, 0
    %v1092 = vsel %vm622, %v1080, 0
    %v1095 = vsel %vm622, %v1081, 0
    %v1098 = vsel %vm622, %v1082, 0
    %1100 = vmatpush.msra.mxu0 0.0
    %1101 = vmatpush.msra.mxu0 0.0
    %1102 = vmatpush.msra.mxu0 0.0
    %1103 = vmatpush.msra.mxu0 0.0
    %1104 = vmatpush.msra.mxu0 0.0
    %1105 = vmatpush.msra.mxu0 0.0
    %1106 = vmatpush.msra.mxu0 0.0
    %1107 = vmatpush.msra.mxu0 0.0
    %1108 = vmatpush.msra.mxu0 0.0
    %1109 = vmatpush.msra.mxu0 0.0
    %1110 = vmatpush.msra.mxu0 0.0
    %1111 = vmatpush.msra.mxu0 0.0
    %1112 = vmatpush.msra.mxu0 0.0
    %1113 = vmatpush.msra.mxu0 0.0
    %1114 = vmatpush.msra.mxu0 0.0
    %1115 = vmatpush.msra.mxu0 %v1089
    %1116 = vmatmul.f32.gmra.mxu0 %v1086
    %v1117 = vpop.f32.mrf.mxu0
    %v1118 = vadd.f32 0.0, %v1117
    %1119 = vdwg.mxu0
    %1120 = vmatpush.msra.mxu0 0.0
    %1121 = vmatpush.msra.mxu0 0.0
    %1122 = vmatpush.msra.mxu0 0.0
    %1123 = vmatpush.msra.mxu0 0.0
    %1124 = vmatpush.msra.mxu0 0.0
    %1125 = vmatpush.msra.mxu0 0.0
    %1126 = vmatpush.msra.mxu0 0.0
    %1127 = vmatpush.msra.mxu0 0.0
    %1128 = vmatpush.msra.mxu0 0.0
    %1129 = vmatpush.msra.mxu0 0.0
    %1130 = vmatpush.msra.mxu0 0.0
    %1131 = vmatpush.msra.mxu0 0.0
    %1132 = vmatpush.msra.mxu0 0.0
    %1133 = vmatpush.msra.mxu0 0.0
    %1134 = vmatpush.msra.mxu0 0.0
    %1135 = vmatpush.msra.mxu0 %v1092
    %1136 = vmatmul.f32.gmra.mxu0 %v1086
    %v1137 = vpop.f32.mrf.mxu0
    %v1138 = vadd.f32 0.0, %v1137
    %1139 = vdwg.mxu0
    %1140 = vmatpush.msra.mxu0 0.0
    %1141 = vmatpush.msra.mxu0 0.0
    %1142 = vmatpush.msra.mxu0 0.0
    %1143 = vmatpush.msra.mxu0 0.0
    %1144 = vmatpush.msra.mxu0 0.0
    %1145 = vmatpush.msra.mxu0 0.0
    %1146 = vmatpush.msra.mxu0 0.0
    %1147 = vmatpush.msra.mxu0 0.0
    %1148 = vmatpush.msra.mxu0 0.0
    %1149 = vmatpush.msra.mxu0 0.0
    %1150 = vmatpush.msra.mxu0 0.0
    %1151 = vmatpush.msra.mxu0 0.0
    %1152 = vmatpush.msra.mxu0 0.0
    %1153 = vmatpush.msra.mxu0 0.0
    %1154 = vmatpush.msra.mxu0 0.0
    %1155 = vmatpush.msra.mxu0 %v1095
    %1156 = vmatmul.f32.gmra.mxu0 %v1086
    %v1157 = vpop.f32.mrf.mxu0
    %v1158 = vadd.f32 0.0, %v1157
    %1159 = vdwg.mxu0
    %1160 = vmatpush.msra.mxu0 0.0
    %1161 = vmatpush.msra.mxu0 0.0
    %1162 = vmatpush.msra.mxu0 0.0
    %1163 = vmatpush.msra.mxu0 0.0
    %1164 = vmatpush.msra.mxu0 0.0
    %1165 = vmatpush.msra.mxu0 0.0
    %1166 = vmatpush.msra.mxu0 0.0
    %1167 = vmatpush.msra.mxu0 0.0
    %1168 = vmatpush.msra.mxu0 0.0
    %1169 = vmatpush.msra.mxu0 0.0
    %1170 = vmatpush.msra.mxu0 0.0
    %1171 = vmatpush.msra.mxu0 0.0
    %1172 = vmatpush.msra.mxu0 0.0
    %1173 = vmatpush.msra.mxu0 0.0
    %1174 = vmatpush.msra.mxu0 0.0
    %1175 = vmatpush.msra.mxu0 %v1098
    %1176 = vmatmul.f32.gmra.mxu0 %v1086
    %v1177 = vpop.f32.mrf.mxu0
    %v1178 = vadd.f32 0.0, %v1177
    %1179 = vdwg.mxu0
    %v1180 = vadd.f32 %v1064, %v1118
    %v1181 = vadd.f32 %v1065, %v1138
    %v1182 = vadd.f32 %v1066, %v1158
    %v1183 = vadd.f32 %v1067, %v1178
    %1184 = vrot.lane.b32.xlu0 %v496, 127
    %v1185 = vpop.permute.xlu0 %1184
    %1186 = vrot.lane.b32.xlu0 %v516, 127
    %v1187 = vpop.permute.xlu0 %1186
    %1188 = vrot.lane.b32.xlu0 %v536, 127
    %v1189 = vpop.permute.xlu0 %1188
    %1190 = vrot.lane.b32.xlu0 %v556, 127
    %v1191 = vpop.permute.xlu0 %1190
    %vm1192 = vcmp.lt.s32.totalorder %v567, 127
    %v1193 = vsel %vm1192, %v1189, %v1191
    %v1194 = vsel %vm1192, %v1187, %v1189
    %v1195 = vsel %vm1192, %v1185, %v1187
    %v1196 = vsel %vm1192, %v1191, %v1185
    %s1197 = scalar_lea.vmem %s1, 20
    %v1198 = vld [vmem:[%s1197] sm:$0xf]
    %v1200 = vperm.slane %v1198, 0
    %v1201 = vperm.slane %v1198, 1
    %v1202 = vperm.slane %v1198, 2
    %v1203 = vperm.slane %v1198, 3
    %v1208 = vmul.f32 %v1195, %v1200
    %v1209 = vmul.f32 %v1194, %v1201
    %v1210 = vmul.f32 %v1193, %v1202
    %v1211 = vmul.f32 %v1196, %v1203
    %s1212 = scalar_lea.vmem %s6, 20
    %v1213 = vld [vmem:[%s1212] sm:$0xf]
    %v1215 = vsel %vm618, %v1213, 0
    %v1218 = vsel %vm622, %v1208, 0
    %v1221 = vsel %vm622, %v1209, 0
    %v1224 = vsel %vm622, %v1210, 0
    %v1227 = vsel %vm622, %v1211, 0
    %1229 = vmatpush.msra.mxu0 0.0
    %1230 = vmatpush.msra.mxu0 0.0
    %1231 = vmatpush.msra.mxu0 0.0
    %1232 = vmatpush.msra.mxu0 0.0
    %1233 = vmatpush.msra.mxu0 0.0
    %1234 = vmatpush.msra.mxu0 0.0
    %1235 = vmatpush.msra.mxu0 0.0
    %1236 = vmatpush.msra.mxu0 0.0
    %1237 = vmatpush.msra.mxu0 0.0
    %1238 = vmatpush.msra.mxu0 0.0
    %1239 = vmatpush.msra.mxu0 0.0
    %1240 = vmatpush.msra.mxu0 0.0
    %1241 = vmatpush.msra.mxu0 0.0
    %1242 = vmatpush.msra.mxu0 0.0
    %1243 = vmatpush.msra.mxu0 0.0
    %1244 = vmatpush.msra.mxu0 %v1218
    %1245 = vmatmul.f32.gmra.mxu0 %v1215
    %v1246 = vpop.f32.mrf.mxu0
    %v1247 = vadd.f32 0.0, %v1246
    %1248 = vdwg.mxu0
    %1249 = vmatpush.msra.mxu0 0.0
    %1250 = vmatpush.msra.mxu0 0.0
    %1251 = vmatpush.msra.mxu0 0.0
    %1252 = vmatpush.msra.mxu0 0.0
    %1253 = vmatpush.msra.mxu0 0.0
    %1254 = vmatpush.msra.mxu0 0.0
    %1255 = vmatpush.msra.mxu0 0.0
    %1256 = vmatpush.msra.mxu0 0.0
    %1257 = vmatpush.msra.mxu0 0.0
    %1258 = vmatpush.msra.mxu0 0.0
    %1259 = vmatpush.msra.mxu0 0.0
    %1260 = vmatpush.msra.mxu0 0.0
    %1261 = vmatpush.msra.mxu0 0.0
    %1262 = vmatpush.msra.mxu0 0.0
    %1263 = vmatpush.msra.mxu0 0.0
    %1264 = vmatpush.msra.mxu0 %v1221
    %1265 = vmatmul.f32.gmra.mxu0 %v1215
    %v1266 = vpop.f32.mrf.mxu0
    %v1267 = vadd.f32 0.0, %v1266
    %1268 = vdwg.mxu0
    %1269 = vmatpush.msra.mxu0 0.0
    %1270 = vmatpush.msra.mxu0 0.0
    %1271 = vmatpush.msra.mxu0 0.0
    %1272 = vmatpush.msra.mxu0 0.0
    %1273 = vmatpush.msra.mxu0 0.0
    %1274 = vmatpush.msra.mxu0 0.0
    %1275 = vmatpush.msra.mxu0 0.0
    %1276 = vmatpush.msra.mxu0 0.0
    %1277 = vmatpush.msra.mxu0 0.0
    %1278 = vmatpush.msra.mxu0 0.0
    %1279 = vmatpush.msra.mxu0 0.0
    %1280 = vmatpush.msra.mxu0 0.0
    %1281 = vmatpush.msra.mxu0 0.0
    %1282 = vmatpush.msra.mxu0 0.0
    %1283 = vmatpush.msra.mxu0 0.0
    %1284 = vmatpush.msra.mxu0 %v1224
    %1285 = vmatmul.f32.gmra.mxu0 %v1215
    %v1286 = vpop.f32.mrf.mxu0
    %v1287 = vadd.f32 0.0, %v1286
    %1288 = vdwg.mxu0
    %1289 = vmatpush.msra.mxu0 0.0
    %1290 = vmatpush.msra.mxu0 0.0
    %1291 = vmatpush.msra.mxu0 0.0
    %1292 = vmatpush.msra.mxu0 0.0
    %1293 = vmatpush.msra.mxu0 0.0
    %1294 = vmatpush.msra.mxu0 0.0
    %1295 = vmatpush.msra.mxu0 0.0
    %1296 = vmatpush.msra.mxu0 0.0
    %1297 = vmatpush.msra.mxu0 0.0
    %1298 = vmatpush.msra.mxu0 0.0
    %1299 = vmatpush.msra.mxu0 0.0
    %1300 = vmatpush.msra.mxu0 0.0
    %1301 = vmatpush.msra.mxu0 0.0
    %1302 = vmatpush.msra.mxu0 0.0
    %1303 = vmatpush.msra.mxu0 0.0
    %1304 = vmatpush.msra.mxu0 %v1227
    %1305 = vmatmul.f32.gmra.mxu0 %v1215
    %v1306 = vpop.f32.mrf.mxu0
    %v1307 = vadd.f32 0.0, %v1306
    %1308 = vdwg.mxu0
    %v1309 = vadd.f32 %v1180, %v1247
    %v1310 = vadd.f32 %v1181, %v1267
    %v1311 = vadd.f32 %v1182, %v1287
    %v1312 = vadd.f32 %v1183, %v1307
    %1313 = vrot.lane.b32.xlu0 %v496, 113
    %v1314 = vpop.permute.xlu0 %1313
    %1315 = vrot.lane.b32.xlu0 %v516, 113
    %v1316 = vpop.permute.xlu0 %1315
    %1317 = vrot.lane.b32.xlu0 %v536, 113
    %v1318 = vpop.permute.xlu0 %1317
    %1319 = vrot.lane.b32.xlu0 %v556, 113
    %v1320 = vpop.permute.xlu0 %1319
    %vm1321 = vcmp.lt.s32.totalorder %v567, 113
    %v1322 = vsel %vm1321, %v1318, %v1320
    %v1323 = vsel %vm1321, %v1316, %v1318
    %v1324 = vsel %vm1321, %v1314, %v1316
    %v1325 = vsel %vm1321, %v1320, %v1314
    %s1326 = scalar_lea.vmem %s1, 24
    %v1327 = vld [vmem:[%s1326] sm:$0xf]
    %v1329 = vperm.slane %v1327, 0
    %v1330 = vperm.slane %v1327, 1
    %v1331 = vperm.slane %v1327, 2
    %v1332 = vperm.slane %v1327, 3
    %v1337 = vmul.f32 %v1324, %v1329
    %v1338 = vmul.f32 %v1323, %v1330
    %v1339 = vmul.f32 %v1322, %v1331
    %v1340 = vmul.f32 %v1325, %v1332
    %s1341 = scalar_lea.vmem %s6, 24
    %v1342 = vld [vmem:[%s1341] sm:$0xf]
    %v1344 = vsel %vm618, %v1342, 0
    %v1347 = vsel %vm622, %v1337, 0
    %v1350 = vsel %vm622, %v1338, 0
    %v1353 = vsel %vm622, %v1339, 0
    %v1356 = vsel %vm622, %v1340, 0
    %1358 = vmatpush.msra.mxu0 0.0
    %1359 = vmatpush.msra.mxu0 0.0
    %1360 = vmatpush.msra.mxu0 0.0
    %1361 = vmatpush.msra.mxu0 0.0
    %1362 = vmatpush.msra.mxu0 0.0
    %1363 = vmatpush.msra.mxu0 0.0
    %1364 = vmatpush.msra.mxu0 0.0
    %1365 = vmatpush.msra.mxu0 0.0
    %1366 = vmatpush.msra.mxu0 0.0
    %1367 = vmatpush.msra.mxu0 0.0
    %1368 = vmatpush.msra.mxu0 0.0
    %1369 = vmatpush.msra.mxu0 0.0
    %1370 = vmatpush.msra.mxu0 0.0
    %1371 = vmatpush.msra.mxu0 0.0
    %1372 = vmatpush.msra.mxu0 0.0
    %1373 = vmatpush.msra.mxu0 %v1347
    %1374 = vmatmul.f32.gmra.mxu0 %v1344
    %v1375 = vpop.f32.mrf.mxu0
    %v1376 = vadd.f32 0.0, %v1375
    %1377 = vdwg.mxu0
    %1378 = vmatpush.msra.mxu0 0.0
    %1379 = vmatpush.msra.mxu0 0.0
    %1380 = vmatpush.msra.mxu0 0.0
    %1381 = vmatpush.msra.mxu0 0.0
    %1382 = vmatpush.msra.mxu0 0.0
    %1383 = vmatpush.msra.mxu0 0.0
    %1384 = vmatpush.msra.mxu0 0.0
    %1385 = vmatpush.msra.mxu0 0.0
    %1386 = vmatpush.msra.mxu0 0.0
    %1387 = vmatpush.msra.mxu0 0.0
    %1388 = vmatpush.msra.mxu0 0.0
    %1389 = vmatpush.msra.mxu0 0.0
    %1390 = vmatpush.msra.mxu0 0.0
    %1391 = vmatpush.msra.mxu0 0.0
    %1392 = vmatpush.msra.mxu0 0.0
    %1393 = vmatpush.msra.mxu0 %v1350
    %1394 = vmatmul.f32.gmra.mxu0 %v1344
    %v1395 = vpop.f32.mrf.mxu0
    %v1396 = vadd.f32 0.0, %v1395
    %1397 = vdwg.mxu0
    %1398 = vmatpush.msra.mxu0 0.0
    %1399 = vmatpush.msra.mxu0 0.0
    %1400 = vmatpush.msra.mxu0 0.0
    %1401 = vmatpush.msra.mxu0 0.0
    %1402 = vmatpush.msra.mxu0 0.0
    %1403 = vmatpush.msra.mxu0 0.0
    %1404 = vmatpush.msra.mxu0 0.0
    %1405 = vmatpush.msra.mxu0 0.0
    %1406 = vmatpush.msra.mxu0 0.0
    %1407 = vmatpush.msra.mxu0 0.0
    %1408 = vmatpush.msra.mxu0 0.0
    %1409 = vmatpush.msra.mxu0 0.0
    %1410 = vmatpush.msra.mxu0 0.0
    %1411 = vmatpush.msra.mxu0 0.0
    %1412 = vmatpush.msra.mxu0 0.0
    %1413 = vmatpush.msra.mxu0 %v1353
    %1414 = vmatmul.f32.gmra.mxu0 %v1344
    %v1415 = vpop.f32.mrf.mxu0
    %v1416 = vadd.f32 0.0, %v1415
    %1417 = vdwg.mxu0
    %1418 = vmatpush.msra.mxu0 0.0
    %1419 = vmatpush.msra.mxu0 0.0
    %1420 = vmatpush.msra.mxu0 0.0
    %1421 = vmatpush.msra.mxu0 0.0
    %1422 = vmatpush.msra.mxu0 0.0
    %1423 = vmatpush.msra.mxu0 0.0
    %1424 = vmatpush.msra.mxu0 0.0
    %1425 = vmatpush.msra.mxu0 0.0
    %1426 = vmatpush.msra.mxu0 0.0
    %1427 = vmatpush.msra.mxu0 0.0
    %1428 = vmatpush.msra.mxu0 0.0
    %1429 = vmatpush.msra.mxu0 0.0
    %1430 = vmatpush.msra.mxu0 0.0
    %1431 = vmatpush.msra.mxu0 0.0
    %1432 = vmatpush.msra.mxu0 0.0
    %1433 = vmatpush.msra.mxu0 %v1356
    %1434 = vmatmul.f32.gmra.mxu0 %v1344
    %v1435 = vpop.f32.mrf.mxu0
    %v1436 = vadd.f32 0.0, %v1435
    %1437 = vdwg.mxu0
    %v1438 = vadd.f32 %v1309, %v1376
    %v1439 = vadd.f32 %v1310, %v1396
    %v1440 = vadd.f32 %v1311, %v1416
    %v1441 = vadd.f32 %v1312, %v1436
    %1442 = vrot.lane.b32.xlu0 %v496, 112
    %v1443 = vpop.permute.xlu0 %1442
    %1444 = vrot.lane.b32.xlu0 %v516, 112
    %v1445 = vpop.permute.xlu0 %1444
    %1446 = vrot.lane.b32.xlu0 %v536, 112
    %v1447 = vpop.permute.xlu0 %1446
    %1448 = vrot.lane.b32.xlu0 %v556, 112
    %v1449 = vpop.permute.xlu0 %1448
    %vm1450 = vcmp.lt.s32.totalorder %v567, 112
    %v1451 = vsel %vm1450, %v1447, %v1449
    %v1452 = vsel %vm1450, %v1445, %v1447
    %v1453 = vsel %vm1450, %v1443, %v1445
    %v1454 = vsel %vm1450, %v1449, %v1443
    %s1455 = scalar_lea.vmem %s1, 28
    %v1456 = vld [vmem:[%s1455] sm:$0xf]
    %v1458 = vperm.slane %v1456, 0
    %v1459 = vperm.slane %v1456, 1
    %v1460 = vperm.slane %v1456, 2
    %v1461 = vperm.slane %v1456, 3
    %v1466 = vmul.f32 %v1453, %v1458
    %v1467 = vmul.f32 %v1452, %v1459
    %v1468 = vmul.f32 %v1451, %v1460
    %v1469 = vmul.f32 %v1454, %v1461
    %s1470 = scalar_lea.vmem %s6, 28
    %v1471 = vld [vmem:[%s1470] sm:$0xf]
    %v1473 = vsel %vm618, %v1471, 0
    %v1476 = vsel %vm622, %v1466, 0
    %v1479 = vsel %vm622, %v1467, 0
    %v1482 = vsel %vm622, %v1468, 0
    %v1485 = vsel %vm622, %v1469, 0
    %1487 = vmatpush.msra.mxu0 0.0
    %1488 = vmatpush.msra.mxu0 0.0
    %1489 = vmatpush.msra.mxu0 0.0
    %1490 = vmatpush.msra.mxu0 0.0
    %1491 = vmatpush.msra.mxu0 0.0
    %1492 = vmatpush.msra.mxu0 0.0
    %1493 = vmatpush.msra.mxu0 0.0
    %1494 = vmatpush.msra.mxu0 0.0
    %1495 = vmatpush.msra.mxu0 0.0
    %1496 = vmatpush.msra.mxu0 0.0
    %1497 = vmatpush.msra.mxu0 0.0
    %1498 = vmatpush.msra.mxu0 0.0
    %1499 = vmatpush.msra.mxu0 0.0
    %1500 = vmatpush.msra.mxu0 0.0
    %1501 = vmatpush.msra.mxu0 0.0
    %1502 = vmatpush.msra.mxu0 %v1476
    %1503 = vmatmul.f32.gmra.mxu0 %v1473
    %v1504 = vpop.f32.mrf.mxu0
    %v1505 = vadd.f32 0.0, %v1504
    %1506 = vdwg.mxu0
    %1507 = vmatpush.msra.mxu0 0.0
    %1508 = vmatpush.msra.mxu0 0.0
    %1509 = vmatpush.msra.mxu0 0.0
    %1510 = vmatpush.msra.mxu0 0.0
    %1511 = vmatpush.msra.mxu0 0.0
    %1512 = vmatpush.msra.mxu0 0.0
    %1513 = vmatpush.msra.mxu0 0.0
    %1514 = vmatpush.msra.mxu0 0.0
    %1515 = vmatpush.msra.mxu0 0.0
    %1516 = vmatpush.msra.mxu0 0.0
    %1517 = vmatpush.msra.mxu0 0.0
    %1518 = vmatpush.msra.mxu0 0.0
    %1519 = vmatpush.msra.mxu0 0.0
    %1520 = vmatpush.msra.mxu0 0.0
    %1521 = vmatpush.msra.mxu0 0.0
    %1522 = vmatpush.msra.mxu0 %v1479
    %1523 = vmatmul.f32.gmra.mxu0 %v1473
    %v1524 = vpop.f32.mrf.mxu0
    %v1525 = vadd.f32 0.0, %v1524
    %1526 = vdwg.mxu0
    %1527 = vmatpush.msra.mxu0 0.0
    %1528 = vmatpush.msra.mxu0 0.0
    %1529 = vmatpush.msra.mxu0 0.0
    %1530 = vmatpush.msra.mxu0 0.0
    %1531 = vmatpush.msra.mxu0 0.0
    %1532 = vmatpush.msra.mxu0 0.0
    %1533 = vmatpush.msra.mxu0 0.0
    %1534 = vmatpush.msra.mxu0 0.0
    %1535 = vmatpush.msra.mxu0 0.0
    %1536 = vmatpush.msra.mxu0 0.0
    %1537 = vmatpush.msra.mxu0 0.0
    %1538 = vmatpush.msra.mxu0 0.0
    %1539 = vmatpush.msra.mxu0 0.0
    %1540 = vmatpush.msra.mxu0 0.0
    %1541 = vmatpush.msra.mxu0 0.0
    %1542 = vmatpush.msra.mxu0 %v1482
    %1543 = vmatmul.f32.gmra.mxu0 %v1473
    %v1544 = vpop.f32.mrf.mxu0
    %v1545 = vadd.f32 0.0, %v1544
    %1546 = vdwg.mxu0
    %1547 = vmatpush.msra.mxu0 0.0
    %1548 = vmatpush.msra.mxu0 0.0
    %1549 = vmatpush.msra.mxu0 0.0
    %1550 = vmatpush.msra.mxu0 0.0
    %1551 = vmatpush.msra.mxu0 0.0
    %1552 = vmatpush.msra.mxu0 0.0
    %1553 = vmatpush.msra.mxu0 0.0
    %1554 = vmatpush.msra.mxu0 0.0
    %1555 = vmatpush.msra.mxu0 0.0
    %1556 = vmatpush.msra.mxu0 0.0
    %1557 = vmatpush.msra.mxu0 0.0
    %1558 = vmatpush.msra.mxu0 0.0
    %1559 = vmatpush.msra.mxu0 0.0
    %1560 = vmatpush.msra.mxu0 0.0
    %1561 = vmatpush.msra.mxu0 0.0
    %1562 = vmatpush.msra.mxu0 %v1485
    %1563 = vmatmul.f32.gmra.mxu0 %v1473
    %v1564 = vpop.f32.mrf.mxu0
    %v1565 = vadd.f32 0.0, %v1564
    %1566 = vdwg.mxu0
    %v1567 = vadd.f32 %v1438, %v1505
    %v1568 = vadd.f32 %v1439, %v1525
    %v1569 = vadd.f32 %v1440, %v1545
    %v1570 = vadd.f32 %v1441, %v1565
    %1571 = vrot.lane.b32.xlu0 %v496, 111
    %v1572 = vpop.permute.xlu0 %1571
    %1573 = vrot.lane.b32.xlu0 %v516, 111
    %v1574 = vpop.permute.xlu0 %1573
    %1575 = vrot.lane.b32.xlu0 %v536, 111
    %v1576 = vpop.permute.xlu0 %1575
    %1577 = vrot.lane.b32.xlu0 %v556, 111
    %v1578 = vpop.permute.xlu0 %1577
    %vm1579 = vcmp.lt.s32.totalorder %v567, 111
    %v1580 = vsel %vm1579, %v1576, %v1578
    %v1581 = vsel %vm1579, %v1574, %v1576
    %v1582 = vsel %vm1579, %v1572, %v1574
    %v1583 = vsel %vm1579, %v1578, %v1572
    %s1584 = scalar_lea.vmem %s1, 32
    %v1585 = vld [vmem:[%s1584] sm:$0xf]
    %v1587 = vperm.slane %v1585, 0
    %v1588 = vperm.slane %v1585, 1
    %v1589 = vperm.slane %v1585, 2
    %v1590 = vperm.slane %v1585, 3
    %v1595 = vmul.f32 %v1582, %v1587
    %v1596 = vmul.f32 %v1581, %v1588
    %v1597 = vmul.f32 %v1580, %v1589
    %v1598 = vmul.f32 %v1583, %v1590
    %s1599 = scalar_lea.vmem %s6, 32
    %v1600 = vld [vmem:[%s1599] sm:$0xf]
    %v1602 = vsel %vm618, %v1600, 0
    %v1605 = vsel %vm622, %v1595, 0
    %v1608 = vsel %vm622, %v1596, 0
    %v1611 = vsel %vm622, %v1597, 0
    %v1614 = vsel %vm622, %v1598, 0
    %1616 = vmatpush.msra.mxu0 0.0
    %1617 = vmatpush.msra.mxu0 0.0
    %1618 = vmatpush.msra.mxu0 0.0
    %1619 = vmatpush.msra.mxu0 0.0
    %1620 = vmatpush.msra.mxu0 0.0
    %1621 = vmatpush.msra.mxu0 0.0
    %1622 = vmatpush.msra.mxu0 0.0
    %1623 = vmatpush.msra.mxu0 0.0
    %1624 = vmatpush.msra.mxu0 0.0
    %1625 = vmatpush.msra.mxu0 0.0
    %1626 = vmatpush.msra.mxu0 0.0
    %1627 = vmatpush.msra.mxu0 0.0
    %1628 = vmatpush.msra.mxu0 0.0
    %1629 = vmatpush.msra.mxu0 0.0
    %1630 = vmatpush.msra.mxu0 0.0
    %1631 = vmatpush.msra.mxu0 %v1605
    %1632 = vmatmul.f32.gmra.mxu0 %v1602
    %v1633 = vpop.f32.mrf.mxu0
    %v1634 = vadd.f32 0.0, %v1633
    %1635 = vdwg.mxu0
    %1636 = vmatpush.msra.mxu0 0.0
    %1637 = vmatpush.msra.mxu0 0.0
    %1638 = vmatpush.msra.mxu0 0.0
    %1639 = vmatpush.msra.mxu0 0.0
    %1640 = vmatpush.msra.mxu0 0.0
    %1641 = vmatpush.msra.mxu0 0.0
    %1642 = vmatpush.msra.mxu0 0.0
    %1643 = vmatpush.msra.mxu0 0.0
    %1644 = vmatpush.msra.mxu0 0.0
    %1645 = vmatpush.msra.mxu0 0.0
    %1646 = vmatpush.msra.mxu0 0.0
    %1647 = vmatpush.msra.mxu0 0.0
    %1648 = vmatpush.msra.mxu0 0.0
    %1649 = vmatpush.msra.mxu0 0.0
    %1650 = vmatpush.msra.mxu0 0.0
    %1651 = vmatpush.msra.mxu0 %v1608
    %1652 = vmatmul.f32.gmra.mxu0 %v1602
    %v1653 = vpop.f32.mrf.mxu0
    %v1654 = vadd.f32 0.0, %v1653
    %1655 = vdwg.mxu0
    %1656 = vmatpush.msra.mxu0 0.0
    %1657 = vmatpush.msra.mxu0 0.0
    %1658 = vmatpush.msra.mxu0 0.0
    %1659 = vmatpush.msra.mxu0 0.0
    %1660 = vmatpush.msra.mxu0 0.0
    %1661 = vmatpush.msra.mxu0 0.0
    %1662 = vmatpush.msra.mxu0 0.0
    %1663 = vmatpush.msra.mxu0 0.0
    %1664 = vmatpush.msra.mxu0 0.0
    %1665 = vmatpush.msra.mxu0 0.0
    %1666 = vmatpush.msra.mxu0 0.0
    %1667 = vmatpush.msra.mxu0 0.0
    %1668 = vmatpush.msra.mxu0 0.0
    %1669 = vmatpush.msra.mxu0 0.0
    %1670 = vmatpush.msra.mxu0 0.0
    %1671 = vmatpush.msra.mxu0 %v1611
    %1672 = vmatmul.f32.gmra.mxu0 %v1602
    %v1673 = vpop.f32.mrf.mxu0
    %v1674 = vadd.f32 0.0, %v1673
    %1675 = vdwg.mxu0
    %1676 = vmatpush.msra.mxu0 0.0
    %1677 = vmatpush.msra.mxu0 0.0
    %1678 = vmatpush.msra.mxu0 0.0
    %1679 = vmatpush.msra.mxu0 0.0
    %1680 = vmatpush.msra.mxu0 0.0
    %1681 = vmatpush.msra.mxu0 0.0
    %1682 = vmatpush.msra.mxu0 0.0
    %1683 = vmatpush.msra.mxu0 0.0
    %1684 = vmatpush.msra.mxu0 0.0
    %1685 = vmatpush.msra.mxu0 0.0
    %1686 = vmatpush.msra.mxu0 0.0
    %1687 = vmatpush.msra.mxu0 0.0
    %1688 = vmatpush.msra.mxu0 0.0
    %1689 = vmatpush.msra.mxu0 0.0
    %1690 = vmatpush.msra.mxu0 0.0
    %1691 = vmatpush.msra.mxu0 %v1614
    %1692 = vmatmul.f32.gmra.mxu0 %v1602
    %v1693 = vpop.f32.mrf.mxu0
    %v1694 = vadd.f32 0.0, %v1693
    %1695 = vdwg.mxu0
    %v1696 = vadd.f32 %v1567, %v1634
    %v1697 = vadd.f32 %v1568, %v1654
    %v1698 = vadd.f32 %v1569, %v1674
    %v1699 = vadd.f32 %v1570, %v1694
    %v1700 = vld [vmem:[%s7] sm:$0xf]
    %1702 = vset.pattern.permute.xlu0 0
    %1703 = vperm.xlu0 %1702, %v1700
    %v1704 = vpop.permute.xlu0 %1703
    %v1706 = vadd.f32 %v1696, %v1704
    %v1707 = vadd.f32 %v1697, %v1704
    %v1708 = vadd.f32 %v1698, %v1704
    %v1709 = vadd.f32 %v1699, %v1704
    %v1710 = vmax.f32 %v1706, 0.0
    %v1711 = vmax.f32 %v1707, 0.0
    %v1712 = vmax.f32 %v1708, 0.0
    %v1713 = vmax.f32 %v1709, 0.0
    %v1718 = vrot.slane %v1711, 4
    %v1719 = vrot.slane %v1713, 4
    %v1720 = vsel %vm622, %v1710, %v1718
    %v1721 = vsel %vm622, %v1712, %v1719
    %1724 = vst [vmem:[#allocation7] sm:$0xff] %v1720
    %1725 = vst [vmem:[#allocation7 + $0x8] sm:$0xff] %v1721
    %v1726 = vld [vmem:[%s9] sm:$0xff]
    %v1727 = vld [vmem:[%s9 + $0x8] sm:$0xff]
    %1728 = vrot.lane.b32.xlu0 %v1726, 5
    %v1729 = vpop.permute.xlu0 %1728
    %1730 = vrot.lane.b32.xlu0 %v1727, 5
    %v1731 = vpop.permute.xlu0 %1730
    %v1732 = vld [vmem:[%s15] sm:$0x1]
    %v1734 = vperm.slane %v1732, 0
    %v1736 = vmul.f32 %v1729, %v1734
    %v1737 = vmul.f32 %v1731, %v1734
    %v1738 = vld [vmem:[%s10] sm:$0xf]
    %1739 = vrot.lane.b32.xlu0 %v1726, 4
    %v1740 = vpop.permute.xlu0 %1739
    %1741 = vrot.lane.b32.xlu0 %v1727, 4
    %v1742 = vpop.permute.xlu0 %1741
    %s1743 = scalar_lea.vmem %s15, 1
    %v1744 = vld [vmem:[%s1743] sm:$0x1]
    %v1746 = vperm.slane %v1744, 0
    %v1748 = vmul.f32 %v1740, %v1746
    %v1749 = vmul.f32 %v1742, %v1746
    %s1750 = scalar_lea.vmem %s10, 4
    %v1751 = vld [vmem:[%s1750] sm:$0xf]
    %vm1752 = vcmask 130048
    %v1754 = vsel %vm1752, %v1751, 0
    %1756 = vmatpush.msra.mxu0 0.0
    %1757 = vmatpush.msra.mxu0 0.0
    %1758 = vmatpush.msra.mxu0 0.0
    %1759 = vmatpush.msra.mxu0 0.0
    %1760 = vmatpush.msra.mxu0 0.0
    %1761 = vmatpush.msra.mxu0 0.0
    %1762 = vmatpush.msra.mxu0 0.0
    %1763 = vmatpush.msra.mxu0 0.0
    %1764 = vmatpush.msra.mxu0 0.0
    %1765 = vmatpush.msra.mxu0 0.0
    %1766 = vmatpush.msra.mxu0 0.0
    %1767 = vmatpush.msra.mxu0 0.0
    %1768 = vmatpush.msra.mxu0 0.0
    %1769 = vmatpush.msra.mxu0 0.0
    %1770 = vmatpush.msra.mxu0 %v1749
    %1771 = vmatpush.msra.mxu0 %v1748
    %1772 = vmatmul.f32.gmra.mxu0 %v1754
    %v1773 = vpop.f32.mrf.mxu0
    %v1774 = vadd.f32 0.0, %v1773
    %1775 = vdwg.mxu0
    %v1777 = vsel %vm1752, %v1738, 0
    %1779 = vmatpush.msra.mxu0 0.0
    %1780 = vmatpush.msra.mxu0 0.0
    %1781 = vmatpush.msra.mxu0 0.0
    %1782 = vmatpush.msra.mxu0 0.0
    %1783 = vmatpush.msra.mxu0 0.0
    %1784 = vmatpush.msra.mxu0 0.0
    %1785 = vmatpush.msra.mxu0 0.0
    %1786 = vmatpush.msra.mxu0 0.0
    %1787 = vmatpush.msra.mxu0 0.0
    %1788 = vmatpush.msra.mxu0 0.0
    %1789 = vmatpush.msra.mxu0 0.0
    %1790 = vmatpush.msra.mxu0 0.0
    %1791 = vmatpush.msra.mxu0 0.0
    %1792 = vmatpush.msra.mxu0 0.0
    %1793 = vmatpush.msra.mxu0 %v1737
    %1794 = vmatpush.msra.mxu0 %v1736
    %1795 = vmatmul.f32.gmra.mxu0 %v1777
    %v1796 = vpop.f32.mrf.mxu0
    %v1797 = vadd.f32 %v1774, %v1796
    %1798 = vdwg.mxu0
    %1799 = vrot.lane.b32.xlu0 %v1726, 3
    %v1800 = vpop.permute.xlu0 %1799
    %1801 = vrot.lane.b32.xlu0 %v1727, 3
    %v1802 = vpop.permute.xlu0 %1801
    %s1803 = scalar_lea.vmem %s15, 2
    %v1804 = vld [vmem:[%s1803] sm:$0x1]
    %v1806 = vperm.slane %v1804, 0
    %v1808 = vmul.f32 %v1800, %v1806
    %v1809 = vmul.f32 %v1802, %v1806
    %s1810 = scalar_lea.vmem %s10, 8
    %v1811 = vld [vmem:[%s1810] sm:$0xf]
    %v1813 = vsel %vm1752, %v1811, 0
    %1815 = vmatpush.msra.mxu0 0.0
    %1816 = vmatpush.msra.mxu0 0.0
    %1817 = vmatpush.msra.mxu0 0.0
    %1818 = vmatpush.msra.mxu0 0.0
    %1819 = vmatpush.msra.mxu0 0.0
    %1820 = vmatpush.msra.mxu0 0.0
    %1821 = vmatpush.msra.mxu0 0.0
    %1822 = vmatpush.msra.mxu0 0.0
    %1823 = vmatpush.msra.mxu0 0.0
    %1824 = vmatpush.msra.mxu0 0.0
    %1825 = vmatpush.msra.mxu0 0.0
    %1826 = vmatpush.msra.mxu0 0.0
    %1827 = vmatpush.msra.mxu0 0.0
    %1828 = vmatpush.msra.mxu0 0.0
    %1829 = vmatpush.msra.mxu0 %v1809
    %1830 = vmatpush.msra.mxu0 %v1808
    %1831 = vmatmul.f32.gmra.mxu0 %v1813
    %v1832 = vpop.f32.mrf.mxu0
    %v1833 = vadd.f32 0.0, %v1832
    %1834 = vdwg.mxu0
    %v1835 = vadd.f32 %v1797, %v1833
    %1836 = vrot.lane.b32.xlu0 %v1726, 1
    %v1837 = vpop.permute.xlu0 %1836
    %1838 = vrot.lane.b32.xlu0 %v1727, 1
    %v1839 = vpop.permute.xlu0 %1838
    %s1840 = scalar_lea.vmem %s15, 3
    %v1841 = vld [vmem:[%s1840] sm:$0x1]
    %v1843 = vperm.slane %v1841, 0
    %v1845 = vmul.f32 %v1837, %v1843
    %v1846 = vmul.f32 %v1839, %v1843
    %s1847 = scalar_lea.vmem %s10, 12
    %v1848 = vld [vmem:[%s1847] sm:$0xf]
    %v1850 = vsel %vm1752, %v1848, 0
    %1852 = vmatpush.msra.mxu0 0.0
    %1853 = vmatpush.msra.mxu0 0.0
    %1854 = vmatpush.msra.mxu0 0.0
    %1855 = vmatpush.msra.mxu0 0.0
    %1856 = vmatpush.msra.mxu0 0.0
    %1857 = vmatpush.msra.mxu0 0.0
    %1858 = vmatpush.msra.mxu0 0.0
    %1859 = vmatpush.msra.mxu0 0.0
    %1860 = vmatpush.msra.mxu0 0.0
    %1861 = vmatpush.msra.mxu0 0.0
    %1862 = vmatpush.msra.mxu0 0.0
    %1863 = vmatpush.msra.mxu0 0.0
    %1864 = vmatpush.msra.mxu0 0.0
    %1865 = vmatpush.msra.mxu0 0.0
    %1866 = vmatpush.msra.mxu0 %v1846
    %1867 = vmatpush.msra.mxu0 %v1845
    %1868 = vmatmul.f32.gmra.mxu0 %v1850
    %v1869 = vpop.f32.mrf.mxu0
    %v1870 = vadd.f32 0.0, %v1869
    %1871 = vdwg.mxu0
    %v1872 = vadd.f32 %v1835, %v1870
    %s1873 = scalar_lea.vmem %s15, 4
    %v1874 = vld [vmem:[%s1873] sm:$0x1]
    %v1876 = vperm.slane %v1874, 0
    %v1878 = vmul.f32 %v1726, %v1876
    %v1879 = vmul.f32 %v1727, %v1876
    %s1880 = scalar_lea.vmem %s10, 16
    %v1881 = vld [vmem:[%s1880] sm:$0xf]
    %v1883 = vsel %vm1752, %v1881, 0
    %1885 = vmatpush.msra.mxu0 0.0
    %1886 = vmatpush.msra.mxu0 0.0
    %1887 = vmatpush.msra.mxu0 0.0
    %1888 = vmatpush.msra.mxu0 0.0
    %1889 = vmatpush.msra.mxu0 0.0
    %1890 = vmatpush.msra.mxu0 0.0
    %1891 = vmatpush.msra.mxu0 0.0
    %1892 = vmatpush.msra.mxu0 0.0
    %1893 = vmatpush.msra.mxu0 0.0
    %1894 = vmatpush.msra.mxu0 0.0
    %1895 = vmatpush.msra.mxu0 0.0
    %1896 = vmatpush.msra.mxu0 0.0
    %1897 = vmatpush.msra.mxu0 0.0
    %1898 = vmatpush.msra.mxu0 0.0
    %1899 = vmatpush.msra.mxu0 %v1879
    %1900 = vmatpush.msra.mxu0 %v1878
    %1901 = vmatmul.f32.gmra.mxu0 %v1883
    %v1902 = vpop.f32.mrf.mxu0
    %v1903 = vadd.f32 0.0, %v1902
    %1904 = vdwg.mxu0
    %v1905 = vadd.f32 %v1872, %v1903
    %1906 = vrot.lane.b32.xlu0 %v1726, 127
    %v1907 = vpop.permute.xlu0 %1906
    %1908 = vrot.lane.b32.xlu0 %v1727, 127
    %v1909 = vpop.permute.xlu0 %1908
    %s1910 = scalar_lea.vmem %s15, 5
    %v1911 = vld [vmem:[%s1910] sm:$0x1]
    %v1913 = vperm.slane %v1911, 0
    %v1915 = vmul.f32 %v1907, %v1913
    %v1916 = vmul.f32 %v1909, %v1913
    %s1917 = scalar_lea.vmem %s10, 20
    %v1918 = vld [vmem:[%s1917] sm:$0xf]
    %v1920 = vsel %vm1752, %v1918, 0
    %1922 = vmatpush.msra.mxu0 0.0
    %1923 = vmatpush.msra.mxu0 0.0
    %1924 = vmatpush.msra.mxu0 0.0
    %1925 = vmatpush.msra.mxu0 0.0
    %1926 = vmatpush.msra.mxu0 0.0
    %1927 = vmatpush.msra.mxu0 0.0
    %1928 = vmatpush.msra.mxu0 0.0
    %1929 = vmatpush.msra.mxu0 0.0
    %1930 = vmatpush.msra.mxu0 0.0
    %1931 = vmatpush.msra.mxu0 0.0
    %1932 = vmatpush.msra.mxu0 0.0
    %1933 = vmatpush.msra.mxu0 0.0
    %1934 = vmatpush.msra.mxu0 0.0
    %1935 = vmatpush.msra.mxu0 0.0
    %1936 = vmatpush.msra.mxu0 %v1916
    %1937 = vmatpush.msra.mxu0 %v1915
    %1938 = vmatmul.f32.gmra.mxu0 %v1920
    %v1939 = vpop.f32.mrf.mxu0
    %v1940 = vadd.f32 0.0, %v1939
    %1941 = vdwg.mxu0
    %v1942 = vadd.f32 %v1905, %v1940
    %1943 = vrot.lane.b32.xlu0 %v1726, 125
    %v1944 = vpop.permute.xlu0 %1943
    %1945 = vrot.lane.b32.xlu0 %v1727, 125
    %v1946 = vpop.permute.xlu0 %1945
    %s1947 = scalar_lea.vmem %s15, 6
    %v1948 = vld [vmem:[%s1947] sm:$0x1]
    %v1950 = vperm.slane %v1948, 0
    %v1952 = vmul.f32 %v1944, %v1950
    %v1953 = vmul.f32 %v1946, %v1950
    %s1954 = scalar_lea.vmem %s10, 24
    %v1955 = vld [vmem:[%s1954] sm:$0xf]
    %v1957 = vsel %vm1752, %v1955, 0
    %1959 = vmatpush.msra.mxu0 0.0
    %1960 = vmatpush.msra.mxu0 0.0
    %1961 = vmatpush.msra.mxu0 0.0
    %1962 = vmatpush.msra.mxu0 0.0
    %1963 = vmatpush.msra.mxu0 0.0
    %1964 = vmatpush.msra.mxu0 0.0
    %1965 = vmatpush.msra.mxu0 0.0
    %1966 = vmatpush.msra.mxu0 0.0
    %1967 = vmatpush.msra.mxu0 0.0
    %1968 = vmatpush.msra.mxu0 0.0
    %1969 = vmatpush.msra.mxu0 0.0
    %1970 = vmatpush.msra.mxu0 0.0
    %1971 = vmatpush.msra.mxu0 0.0
    %1972 = vmatpush.msra.mxu0 0.0
    %1973 = vmatpush.msra.mxu0 %v1953
    %1974 = vmatpush.msra.mxu0 %v1952
    %1975 = vmatmul.f32.gmra.mxu0 %v1957
    %v1976 = vpop.f32.mrf.mxu0
    %v1977 = vadd.f32 0.0, %v1976
    %1978 = vdwg.mxu0
    %v1979 = vadd.f32 %v1942, %v1977
    %1980 = vrot.lane.b32.xlu0 %v1726, 124
    %v1981 = vpop.permute.xlu0 %1980
    %1982 = vrot.lane.b32.xlu0 %v1727, 124
    %v1983 = vpop.permute.xlu0 %1982
    %s1984 = scalar_lea.vmem %s15, 7
    %v1985 = vld [vmem:[%s1984] sm:$0x1]
    %v1987 = vperm.slane %v1985, 0
    %v1989 = vmul.f32 %v1981, %v1987
    %v1990 = vmul.f32 %v1983, %v1987
    %s1991 = scalar_lea.vmem %s10, 28
    %v1992 = vld [vmem:[%s1991] sm:$0xf]
    %v1994 = vsel %vm1752, %v1992, 0
    %1996 = vmatpush.msra.mxu0 0.0
    %1997 = vmatpush.msra.mxu0 0.0
    %1998 = vmatpush.msra.mxu0 0.0
    %1999 = vmatpush.msra.mxu0 0.0
    %2000 = vmatpush.msra.mxu0 0.0
    %2001 = vmatpush.msra.mxu0 0.0
    %2002 = vmatpush.msra.mxu0 0.0
    %2003 = vmatpush.msra.mxu0 0.0
    %2004 = vmatpush.msra.mxu0 0.0
    %2005 = vmatpush.msra.mxu0 0.0
    %2006 = vmatpush.msra.mxu0 0.0
    %2007 = vmatpush.msra.mxu0 0.0
    %2008 = vmatpush.msra.mxu0 0.0
    %2009 = vmatpush.msra.mxu0 0.0
    %2010 = vmatpush.msra.mxu0 %v1990
    %2011 = vmatpush.msra.mxu0 %v1989
    %2012 = vmatmul.f32.gmra.mxu0 %v1994
    %v2013 = vpop.f32.mrf.mxu0
    %v2014 = vadd.f32 0.0, %v2013
    %2015 = vdwg.mxu0
    %v2016 = vadd.f32 %v1979, %v2014
    %2017 = vrot.lane.b32.xlu0 %v1726, 123
    %v2018 = vpop.permute.xlu0 %2017
    %2019 = vrot.lane.b32.xlu0 %v1727, 123
    %v2020 = vpop.permute.xlu0 %2019
    %s2021 = scalar_lea.vmem %s15, 8
    %v2022 = vld [vmem:[%s2021] sm:$0x1]
    %v2024 = vperm.slane %v2022, 0
    %v2026 = vmul.f32 %v2018, %v2024
    %v2027 = vmul.f32 %v2020, %v2024
    %s2028 = scalar_lea.vmem %s10, 32
    %v2029 = vld [vmem:[%s2028] sm:$0xf]
    %v2031 = vsel %vm1752, %v2029, 0
    %2033 = vmatpush.msra.mxu0 0.0
    %2034 = vmatpush.msra.mxu0 0.0
    %2035 = vmatpush.msra.mxu0 0.0
    %2036 = vmatpush.msra.mxu0 0.0
    %2037 = vmatpush.msra.mxu0 0.0
    %2038 = vmatpush.msra.mxu0 0.0
    %2039 = vmatpush.msra.mxu0 0.0
    %2040 = vmatpush.msra.mxu0 0.0
    %2041 = vmatpush.msra.mxu0 0.0
    %2042 = vmatpush.msra.mxu0 0.0
    %2043 = vmatpush.msra.mxu0 0.0
    %2044 = vmatpush.msra.mxu0 0.0
    %2045 = vmatpush.msra.mxu0 0.0
    %2046 = vmatpush.msra.mxu0 0.0
    %2047 = vmatpush.msra.mxu0 %v2027
    %2048 = vmatpush.msra.mxu0 %v2026
    %2049 = vmatmul.f32.gmra.mxu0 %v2031
    %v2050 = vpop.f32.mrf.mxu0
    %v2051 = vadd.f32 0.0, %v2050
    %2052 = vdwg.mxu0
    %v2053 = vadd.f32 %v2016, %v2051
    %v2054 = vld [vmem:[%s11] sm:$0xf]
    %2056 = vset.pattern.permute.xlu0 0
    %2057 = vperm.xlu0 %2056, %v2054
    %v2058 = vpop.permute.xlu0 %2057
    %v2060 = vadd.f32 %v2053, %v2058
    %v2061 = vmax.f32 %v2060, 0.0
    %v2062 = vld [vmem:[#allocation5] sm:$0xff]
    %v2063 = vld [vmem:[#allocation5 + $0x8] sm:$0xff]
    %v2064 = vld [vmem:[#allocation5 + $0x10] sm:$0xff]
    %v2065 = vld [vmem:[#allocation5 + $0x18] sm:$0xff]
    %v2066 = vld [vmem:[#allocation5 + $0x20] sm:$0xff]
    %v2067 = vld [vmem:[#allocation5 + $0x28] sm:$0xff]
    %v2068 = vld [vmem:[#allocation5 + $0x30] sm:$0xff]
    %v2069 = vld [vmem:[#allocation5 + $0x38] sm:$0xff]
    %v2070 = vld [vmem:[#allocation5 + $0x40] sm:$0xff]
    %v2071 = vld [vmem:[#allocation5 + $0x48] sm:$0xff]
    %v2072 = vld [vmem:[#allocation5 + $0x50] sm:$0xff]
    %v2073 = vld [vmem:[#allocation5 + $0x58] sm:$0xff]
    %v2074 = vld [vmem:[#allocation5 + $0x60] sm:$0xff]
    %v2075 = vld [vmem:[#allocation5 + $0x68] sm:$0xff]
    %v2076 = vld [vmem:[#allocation5 + $0x70] sm:$0xff]
    %v2077 = vld [vmem:[#allocation5 + $0x78] sm:$0xff]
    %v2078 = vld [vmem:[#allocation5 + $0x80] sm:$0xff]
    %v2079 = vld [vmem:[#allocation5 + $0x88] sm:$0xff]
    %v2080 = vld [vmem:[#allocation5 + $0x90] sm:$0xff]
    %v2081 = vld [vmem:[#allocation5 + $0x98] sm:$0xff]
    %v2082 = vld [vmem:[#allocation5 + $0xa0] sm:$0xff]
    %v2083 = vld [vmem:[#allocation5 + $0xa8] sm:$0xff]
    %v2084 = vld [vmem:[#allocation5 + $0xb0] sm:$0xff]
    %v2085 = vld [vmem:[#allocation5 + $0xb8] sm:$0xff]
    %v2086 = vld [vmem:[#allocation5 + $0xc0] sm:$0xff]
    %v2087 = vld [vmem:[#allocation5 + $0xc8] sm:$0xff]
    %v2088 = vld [vmem:[#allocation5 + $0xd0] sm:$0xff]
    %v2089 = vld [vmem:[#allocation5 + $0xd8] sm:$0xff]
    %v2090 = vld [vmem:[#allocation5 + $0xe0] sm:$0xff]
    %v2091 = vld [vmem:[#allocation5 + $0xe8] sm:$0xff]
    %v2092 = vld [vmem:[#allocation5 + $0xf0] sm:$0xff]
    %v2093 = vld [vmem:[#allocation5 + $0xf8] sm:$0xff]
    %v2094 = vld [vmem:[#allocation5 + $0x100] sm:$0xff]
    %v2095 = vld [vmem:[#allocation5 + $0x108] sm:$0xff]
    %v2096 = vld [vmem:[#allocation5 + $0x110] sm:$0xff]
    %v2097 = vld [vmem:[#allocation5 + $0x118] sm:$0xff]
    %v2098 = vld [vmem:[#allocation5 + $0x120] sm:$0xff]
    %v2099 = vld [vmem:[#allocation5 + $0x128] sm:$0xff]
    %v2100 = vld [vmem:[#allocation5 + $0x130] sm:$0xff]
    %v2101 = vld [vmem:[#allocation5 + $0x138] sm:$0xff]
    %v2102 = vld [vmem:[#allocation5 + $0x140] sm:$0xff]
    %v2103 = vld [vmem:[#allocation5 + $0x148] sm:$0xff]
    %v2104 = vld [vmem:[#allocation5 + $0x150] sm:$0xff]
    %v2105 = vld [vmem:[#allocation5 + $0x158] sm:$0xff]
    %v2106 = vld [vmem:[#allocation5 + $0x160] sm:$0xff]
    %v2107 = vld [vmem:[#allocation5 + $0x168] sm:$0xff]
    %v2108 = vld [vmem:[#allocation5 + $0x170] sm:$0xff]
    %v2109 = vld [vmem:[#allocation5 + $0x178] sm:$0xff]
    %v2110 = vld [vmem:[#allocation5 + $0x180] sm:$0xff]
    %v2111 = vld [vmem:[#allocation5 + $0x188] sm:$0xff]
    %v2112 = vld [vmem:[#allocation5 + $0x190] sm:$0xff]
    %v2113 = vld [vmem:[#allocation5 + $0x198] sm:$0xff]
    %v2114 = vld [vmem:[#allocation5 + $0x1a0] sm:$0xff]
    %v2115 = vld [vmem:[#allocation5 + $0x1a8] sm:$0xff]
    %v2116 = vld [vmem:[#allocation5 + $0x1b0] sm:$0xff]
    %v2117 = vld [vmem:[#allocation5 + $0x1b8] sm:$0xff]
    %v2118 = vld [vmem:[#allocation5 + $0x1c0] sm:$0xff]
    %v2119 = vld [vmem:[#allocation5 + $0x1c8] sm:$0xff]
    %v2120 = vld [vmem:[#allocation5 + $0x1d0] sm:$0xff]
    %v2121 = vld [vmem:[#allocation5 + $0x1d8] sm:$0xff]
    %v2122 = vld [vmem:[#allocation5 + $0x1e0] sm:$0xff]
    %v2123 = vld [vmem:[#allocation5 + $0x1e8] sm:$0xff]
    %v2124 = vld [vmem:[#allocation5 + $0x1f0] sm:$0xff]
    %v2125 = vld [vmem:[#allocation5 + $0x1f8] sm:$0xff]
    %2126 = vmatpush.msra.mxu0 %v2122
    %2127 = vmatpush.msra.mxu0 %v2118
    %2128 = vmatpush.msra.mxu0 %v2114
    %2129 = vmatpush.msra.mxu0 %v2110
    %2130 = vmatpush.msra.mxu0 %v2106
    %2131 = vmatpush.msra.mxu0 %v2102
    %2132 = vmatpush.msra.mxu0 %v2098
    %2133 = vmatpush.msra.mxu0 %v2094
    %2134 = vmatpush.msra.mxu0 %v2090
    %2135 = vmatpush.msra.mxu0 %v2086
    %2136 = vmatpush.msra.mxu0 %v2082
    %2137 = vmatpush.msra.mxu0 %v2078
    %2138 = vmatpush.msra.mxu0 %v2074
    %2139 = vmatpush.msra.mxu0 %v2070
    %2140 = vmatpush.msra.mxu0 %v2066
    %2141 = vmatpush.msra.mxu0 %v2062
    %2142 = vmatmul.f32.gmra.mxu0 %v2061
    %v2143 = vpop.f32.mrf.mxu0
    %v2144 = vadd.f32 %v1710, %v2143
    %2145 = vdwg.mxu0
    %2146 = vmatpush.msra.mxu0 %v2123
    %2147 = vmatpush.msra.mxu0 %v2119
    %2148 = vmatpush.msra.mxu0 %v2115
    %2149 = vmatpush.msra.mxu0 %v2111
    %2150 = vmatpush.msra.mxu0 %v2107
    %2151 = vmatpush.msra.mxu0 %v2103
    %2152 = vmatpush.msra.mxu0 %v2099
    %2153 = vmatpush.msra.mxu0 %v2095
    %2154 = vmatpush.msra.mxu0 %v2091
    %2155 = vmatpush.msra.mxu0 %v2087
    %2156 = vmatpush.msra.mxu0 %v2083
    %2157 = vmatpush.msra.mxu0 %v2079
    %2158 = vmatpush.msra.mxu0 %v2075
    %2159 = vmatpush.msra.mxu0 %v2071
    %2160 = vmatpush.msra.mxu0 %v2067
    %2161 = vmatpush.msra.mxu0 %v2063
    %2162 = vmatmul.f32.gmra.mxu0 %v2061
    %v2163 = vpop.f32.mrf.mxu0
    %v2164 = vadd.f32 %v1711, %v2163
    %2165 = vdwg.mxu0
    %2166 = vmatpush.msra.mxu0 %v2124
    %2167 = vmatpush.msra.mxu0 %v2120
    %2168 = vmatpush.msra.mxu0 %v2116
    %2169 = vmatpush.msra.mxu0 %v2112
    %2170 = vmatpush.msra.mxu0 %v2108
    %2171 = vmatpush.msra.mxu0 %v2104
    %2172 = vmatpush.msra.mxu0 %v2100
    %2173 = vmatpush.msra.mxu0 %v2096
    %2174 = vmatpush.msra.mxu0 %v2092
    %2175 = vmatpush.msra.mxu0 %v2088
    %2176 = vmatpush.msra.mxu0 %v2084
    %2177 = vmatpush.msra.mxu0 %v2080
    %2178 = vmatpush.msra.mxu0 %v2076
    %2179 = vmatpush.msra.mxu0 %v2072
    %2180 = vmatpush.msra.mxu0 %v2068
    %2181 = vmatpush.msra.mxu0 %v2064
    %2182 = vmatmul.f32.gmra.mxu0 %v2061
    %v2183 = vpop.f32.mrf.mxu0
    %v2184 = vadd.f32 %v1712, %v2183
    %2185 = vdwg.mxu0
    %2186 = vmatpush.msra.mxu0 %v2125
    %2187 = vmatpush.msra.mxu0 %v2121
    %2188 = vmatpush.msra.mxu0 %v2117
    %2189 = vmatpush.msra.mxu0 %v2113
    %2190 = vmatpush.msra.mxu0 %v2109
    %2191 = vmatpush.msra.mxu0 %v2105
    %2192 = vmatpush.msra.mxu0 %v2101
    %2193 = vmatpush.msra.mxu0 %v2097
    %2194 = vmatpush.msra.mxu0 %v2093
    %2195 = vmatpush.msra.mxu0 %v2089
    %2196 = vmatpush.msra.mxu0 %v2085
    %2197 = vmatpush.msra.mxu0 %v2081
    %2198 = vmatpush.msra.mxu0 %v2077
    %2199 = vmatpush.msra.mxu0 %v2073
    %2200 = vmatpush.msra.mxu0 %v2069
    %2201 = vmatpush.msra.mxu0 %v2065
    %2202 = vmatmul.f32.gmra.mxu0 %v2061
    %v2203 = vpop.f32.mrf.mxu0
    %v2204 = vadd.f32 %v1713, %v2203
    %2205 = vdwg.mxu0
    %2206 = vrot.lane.b32.xlu0 %v2144, 17
    %v2207 = vpop.permute.xlu0 %2206
    %2208 = vrot.lane.b32.xlu0 %v2164, 17
    %v2209 = vpop.permute.xlu0 %2208
    %2210 = vrot.lane.b32.xlu0 %v2184, 17
    %v2211 = vpop.permute.xlu0 %2210
    %2212 = vrot.lane.b32.xlu0 %v2204, 17
    %v2213 = vpop.permute.xlu0 %2212
    %v2214 = vsel %vm568, %v2211, %v2213
    %v2215 = vsel %vm568, %v2209, %v2211
    %v2216 = vsel %vm568, %v2207, %v2209
    %v2217 = vsel %vm568, %v2213, %v2207
    %v2218 = vld [vmem:[%s1] sm:$0xf]
    %v2220 = vperm.slane %v2218, 0
    %v2221 = vperm.slane %v2218, 1
    %v2222 = vperm.slane %v2218, 2
    %v2223 = vperm.slane %v2218, 3
    %v2228 = vmul.f32 %v2217, %v2220
    %v2229 = vmul.f32 %v2216, %v2221
    %v2230 = vmul.f32 %v2215, %v2222
    %v2231 = vmul.f32 %v2214, %v2223
    %v2232 = vld [vmem:[%s13] sm:$0xf]
    %2233 = vrot.lane.b32.xlu0 %v2144, 16
    %v2234 = vpop.permute.xlu0 %2233
    %2235 = vrot.lane.b32.xlu0 %v2164, 16
    %v2236 = vpop.permute.xlu0 %2235
    %2237 = vrot.lane.b32.xlu0 %v2184, 16
    %v2238 = vpop.permute.xlu0 %2237
    %2239 = vrot.lane.b32.xlu0 %v2204, 16
    %v2240 = vpop.permute.xlu0 %2239
    %v2241 = vsel %vm596, %v2238, %v2240
    %v2242 = vsel %vm596, %v2236, %v2238
    %v2243 = vsel %vm596, %v2234, %v2236
    %v2244 = vsel %vm596, %v2240, %v2234
    %v2245 = vld [vmem:[%s601] sm:$0xf]
    %v2247 = vperm.slane %v2245, 0
    %v2248 = vperm.slane %v2245, 1
    %v2249 = vperm.slane %v2245, 2
    %v2250 = vperm.slane %v2245, 3
    %v2255 = vmul.f32 %v2244, %v2247
    %v2256 = vmul.f32 %v2243, %v2248
    %v2257 = vmul.f32 %v2242, %v2249
    %v2258 = vmul.f32 %v2241, %v2250
    %s2259 = scalar_lea.vmem %s13, 4
    %v2260 = vld [vmem:[%s2259] sm:$0xf]
    %v2262 = vsel %vm618, %v2260, 0
    %v2265 = vsel %vm622, %v2255, 0
    %v2268 = vsel %vm622, %v2256, 0
    %v2271 = vsel %vm622, %v2257, 0
    %v2274 = vsel %vm622, %v2258, 0
    %2276 = vmatpush.msra.mxu0 0.0
    %2277 = vmatpush.msra.mxu0 0.0
    %2278 = vmatpush.msra.mxu0 0.0
    %2279 = vmatpush.msra.mxu0 0.0
    %2280 = vmatpush.msra.mxu0 0.0
    %2281 = vmatpush.msra.mxu0 0.0
    %2282 = vmatpush.msra.mxu0 0.0
    %2283 = vmatpush.msra.mxu0 0.0
    %2284 = vmatpush.msra.mxu0 0.0
    %2285 = vmatpush.msra.mxu0 0.0
    %2286 = vmatpush.msra.mxu0 0.0
    %2287 = vmatpush.msra.mxu0 0.0
    %2288 = vmatpush.msra.mxu0 0.0
    %2289 = vmatpush.msra.mxu0 0.0
    %2290 = vmatpush.msra.mxu0 0.0
    %2291 = vmatpush.msra.mxu0 %v2265
    %2292 = vmatmul.f32.gmra.mxu0 %v2262
    %v2293 = vpop.f32.mrf.mxu0
    %v2294 = vadd.f32 0.0, %v2293
    %2295 = vdwg.mxu0
    %2296 = vmatpush.msra.mxu0 0.0
    %2297 = vmatpush.msra.mxu0 0.0
    %2298 = vmatpush.msra.mxu0 0.0
    %2299 = vmatpush.msra.mxu0 0.0
    %2300 = vmatpush.msra.mxu0 0.0
    %2301 = vmatpush.msra.mxu0 0.0
    %2302 = vmatpush.msra.mxu0 0.0
    %2303 = vmatpush.msra.mxu0 0.0
    %2304 = vmatpush.msra.mxu0 0.0
    %2305 = vmatpush.msra.mxu0 0.0
    %2306 = vmatpush.msra.mxu0 0.0
    %2307 = vmatpush.msra.mxu0 0.0
    %2308 = vmatpush.msra.mxu0 0.0
    %2309 = vmatpush.msra.mxu0 0.0
    %2310 = vmatpush.msra.mxu0 0.0
    %2311 = vmatpush.msra.mxu0 %v2268
    %2312 = vmatmul.f32.gmra.mxu0 %v2262
    %v2313 = vpop.f32.mrf.mxu0
    %v2314 = vadd.f32 0.0, %v2313
    %2315 = vdwg.mxu0
    %2316 = vmatpush.msra.mxu0 0.0
    %2317 = vmatpush.msra.mxu0 0.0
    %2318 = vmatpush.msra.mxu0 0.0
    %2319 = vmatpush.msra.mxu0 0.0
    %2320 = vmatpush.msra.mxu0 0.0
    %2321 = vmatpush.msra.mxu0 0.0
    %2322 = vmatpush.msra.mxu0 0.0
    %2323 = vmatpush.msra.mxu0 0.0
    %2324 = vmatpush.msra.mxu0 0.0
    %2325 = vmatpush.msra.mxu0 0.0
    %2326 = vmatpush.msra.mxu0 0.0
    %2327 = vmatpush.msra.mxu0 0.0
    %2328 = vmatpush.msra.mxu0 0.0
    %2329 = vmatpush.msra.mxu0 0.0
    %2330 = vmatpush.msra.mxu0 0.0
    %2331 = vmatpush.msra.mxu0 %v2271
    %2332 = vmatmul.f32.gmra.mxu0 %v2262
    %v2333 = vpop.f32.mrf.mxu0
    %v2334 = vadd.f32 0.0, %v2333
    %2335 = vdwg.mxu0
    %2336 = vmatpush.msra.mxu0 0.0
    %2337 = vmatpush.msra.mxu0 0.0
    %2338 = vmatpush.msra.mxu0 0.0
    %2339 = vmatpush.msra.mxu0 0.0
    %2340 = vmatpush.msra.mxu0 0.0
    %2341 = vmatpush.msra.mxu0 0.0
    %2342 = vmatpush.msra.mxu0 0.0
    %2343 = vmatpush.msra.mxu0 0.0
    %2344 = vmatpush.msra.mxu0 0.0
    %2345 = vmatpush.msra.mxu0 0.0
    %2346 = vmatpush.msra.mxu0 0.0
    %2347 = vmatpush.msra.mxu0 0.0
    %2348 = vmatpush.msra.mxu0 0.0
    %2349 = vmatpush.msra.mxu0 0.0
    %2350 = vmatpush.msra.mxu0 0.0
    %2351 = vmatpush.msra.mxu0 %v2274
    %2352 = vmatmul.f32.gmra.mxu0 %v2262
    %v2353 = vpop.f32.mrf.mxu0
    %v2354 = vadd.f32 0.0, %v2353
    %2355 = vdwg.mxu0
    %v2357 = vsel %vm618, %v2232, 0
    %v2360 = vsel %vm622, %v2228, 0
    %v2363 = vsel %vm622, %v2229, 0
    %v2366 = vsel %vm622, %v2230, 0
    %v2369 = vsel %vm622, %v2231, 0
    %2371 = vmatpush.msra.mxu0 0.0
    %2372 = vmatpush.msra.mxu0 0.0
    %2373 = vmatpush.msra.mxu0 0.0
    %2374 = vmatpush.msra.mxu0 0.0
    %2375 = vmatpush.msra.mxu0 0.0
    %2376 = vmatpush.msra.mxu0 0.0
    %2377 = vmatpush.msra.mxu0 0.0
    %2378 = vmatpush.msra.mxu0 0.0
    %2379 = vmatpush.msra.mxu0 0.0
    %2380 = vmatpush.msra.mxu0 0.0
    %2381 = vmatpush.msra.mxu0 0.0
    %2382 = vmatpush.msra.mxu0 0.0
    %2383 = vmatpush.msra.mxu0 0.0
    %2384 = vmatpush.msra.mxu0 0.0
    %2385 = vmatpush.msra.mxu0 0.0
    %2386 = vmatpush.msra.mxu0 %v2360
    %2387 = vmatmul.f32.gmra.mxu0 %v2357
    %v2388 = vpop.f32.mrf.mxu0
    %v2389 = vadd.f32 %v2294, %v2388
    %2390 = vdwg.mxu0
    %2391 = vmatpush.msra.mxu0 0.0
    %2392 = vmatpush.msra.mxu0 0.0
    %2393 = vmatpush.msra.mxu0 0.0
    %2394 = vmatpush.msra.mxu0 0.0
    %2395 = vmatpush.msra.mxu0 0.0
    %2396 = vmatpush.msra.mxu0 0.0
    %2397 = vmatpush.msra.mxu0 0.0
    %2398 = vmatpush.msra.mxu0 0.0
    %2399 = vmatpush.msra.mxu0 0.0
    %2400 = vmatpush.msra.mxu0 0.0
    %2401 = vmatpush.msra.mxu0 0.0
    %2402 = vmatpush.msra.mxu0 0.0
    %2403 = vmatpush.msra.mxu0 0.0
    %2404 = vmatpush.msra.mxu0 0.0
    %2405 = vmatpush.msra.mxu0 0.0
    %2406 = vmatpush.msra.mxu0 %v2363
    %2407 = vmatmul.f32.gmra.mxu0 %v2357
    %v2408 = vpop.f32.mrf.mxu0
    %v2409 = vadd.f32 %v2314, %v2408
    %2410 = vdwg.mxu0
    %2411 = vmatpush.msra.mxu0 0.0
    %2412 = vmatpush.msra.mxu0 0.0
    %2413 = vmatpush.msra.mxu0 0.0
    %2414 = vmatpush.msra.mxu0 0.0
    %2415 = vmatpush.msra.mxu0 0.0
    %2416 = vmatpush.msra.mxu0 0.0
    %2417 = vmatpush.msra.mxu0 0.0
    %2418 = vmatpush.msra.mxu0 0.0
    %2419 = vmatpush.msra.mxu0 0.0
    %2420 = vmatpush.msra.mxu0 0.0
    %2421 = vmatpush.msra.mxu0 0.0
    %2422 = vmatpush.msra.mxu0 0.0
    %2423 = vmatpush.msra.mxu0 0.0
    %2424 = vmatpush.msra.mxu0 0.0
    %2425 = vmatpush.msra.mxu0 0.0
    %2426 = vmatpush.msra.mxu0 %v2366
    %2427 = vmatmul.f32.gmra.mxu0 %v2357
    %v2428 = vpop.f32.mrf.mxu0
    %v2429 = vadd.f32 %v2334, %v2428
    %2430 = vdwg.mxu0
    %2431 = vmatpush.msra.mxu0 0.0
    %2432 = vmatpush.msra.mxu0 0.0
    %2433 = vmatpush.msra.mxu0 0.0
    %2434 = vmatpush.msra.mxu0 0.0
    %2435 = vmatpush.msra.mxu0 0.0
    %2436 = vmatpush.msra.mxu0 0.0
    %2437 = vmatpush.msra.mxu0 0.0
    %2438 = vmatpush.msra.mxu0 0.0
    %2439 = vmatpush.msra.mxu0 0.0
    %2440 = vmatpush.msra.mxu0 0.0
    %2441 = vmatpush.msra.mxu0 0.0
    %2442 = vmatpush.msra.mxu0 0.0
    %2443 = vmatpush.msra.mxu0 0.0
    %2444 = vmatpush.msra.mxu0 0.0
    %2445 = vmatpush.msra.mxu0 0.0
    %2446 = vmatpush.msra.mxu0 %v2369
    %2447 = vmatmul.f32.gmra.mxu0 %v2357
    %v2448 = vpop.f32.mrf.mxu0
    %v2449 = vadd.f32 %v2354, %v2448
    %2450 = vdwg.mxu0
    %2451 = vrot.lane.b32.xlu0 %v2144, 15
    %v2452 = vpop.permute.xlu0 %2451
    %2453 = vrot.lane.b32.xlu0 %v2164, 15
    %v2454 = vpop.permute.xlu0 %2453
    %2455 = vrot.lane.b32.xlu0 %v2184, 15
    %v2456 = vpop.permute.xlu0 %2455
    %2457 = vrot.lane.b32.xlu0 %v2204, 15
    %v2458 = vpop.permute.xlu0 %2457
    %v2459 = vsel %vm818, %v2456, %v2458
    %v2460 = vsel %vm818, %v2454, %v2456
    %v2461 = vsel %vm818, %v2452, %v2454
    %v2462 = vsel %vm818, %v2458, %v2452
    %v2463 = vld [vmem:[%s823] sm:$0xf]
    %v2465 = vperm.slane %v2463, 0
    %v2466 = vperm.slane %v2463, 1
    %v2467 = vperm.slane %v2463, 2
    %v2468 = vperm.slane %v2463, 3
    %v2473 = vmul.f32 %v2462, %v2465
    %v2474 = vmul.f32 %v2461, %v2466
    %v2475 = vmul.f32 %v2460, %v2467
    %v2476 = vmul.f32 %v2459, %v2468
    %s2477 = scalar_lea.vmem %s13, 8
    %v2478 = vld [vmem:[%s2477] sm:$0xf]
    %v2480 = vsel %vm618, %v2478, 0
    %v2483 = vsel %vm622, %v2473, 0
    %v2486 = vsel %vm622, %v2474, 0
    %v2489 = vsel %vm622, %v2475, 0
    %v2492 = vsel %vm622, %v2476, 0
    %2494 = vmatpush.msra.mxu0 0.0
    %2495 = vmatpush.msra.mxu0 0.0
    %2496 = vmatpush.msra.mxu0 0.0
    %2497 = vmatpush.msra.mxu0 0.0
    %2498 = vmatpush.msra.mxu0 0.0
    %2499 = vmatpush.msra.mxu0 0.0
    %2500 = vmatpush.msra.mxu0 0.0
    %2501 = vmatpush.msra.mxu0 0.0
    %2502 = vmatpush.msra.mxu0 0.0
    %2503 = vmatpush.msra.mxu0 0.0
    %2504 = vmatpush.msra.mxu0 0.0
    %2505 = vmatpush.msra.mxu0 0.0
    %2506 = vmatpush.msra.mxu0 0.0
    %2507 = vmatpush.msra.mxu0 0.0
    %2508 = vmatpush.msra.mxu0 0.0
    %2509 = vmatpush.msra.mxu0 %v2483
    %2510 = vmatmul.f32.gmra.mxu0 %v2480
    %v2511 = vpop.f32.mrf.mxu0
    %v2512 = vadd.f32 0.0, %v2511
    %2513 = vdwg.mxu0
    %2514 = vmatpush.msra.mxu0 0.0
    %2515 = vmatpush.msra.mxu0 0.0
    %2516 = vmatpush.msra.mxu0 0.0
    %2517 = vmatpush.msra.mxu0 0.0
    %2518 = vmatpush.msra.mxu0 0.0
    %2519 = vmatpush.msra.mxu0 0.0
    %2520 = vmatpush.msra.mxu0 0.0
    %2521 = vmatpush.msra.mxu0 0.0
    %2522 = vmatpush.msra.mxu0 0.0
    %2523 = vmatpush.msra.mxu0 0.0
    %2524 = vmatpush.msra.mxu0 0.0
    %2525 = vmatpush.msra.mxu0 0.0
    %2526 = vmatpush.msra.mxu0 0.0
    %2527 = vmatpush.msra.mxu0 0.0
    %2528 = vmatpush.msra.mxu0 0.0
    %2529 = vmatpush.msra.mxu0 %v2486
    %2530 = vmatmul.f32.gmra.mxu0 %v2480
    %v2531 = vpop.f32.mrf.mxu0
    %v2532 = vadd.f32 0.0, %v2531
    %2533 = vdwg.mxu0
    %2534 = vmatpush.msra.mxu0 0.0
    %2535 = vmatpush.msra.mxu0 0.0
    %2536 = vmatpush.msra.mxu0 0.0
    %2537 = vmatpush.msra.mxu0 0.0
    %2538 = vmatpush.msra.mxu0 0.0
    %2539 = vmatpush.msra.mxu0 0.0
    %2540 = vmatpush.msra.mxu0 0.0
    %2541 = vmatpush.msra.mxu0 0.0
    %2542 = vmatpush.msra.mxu0 0.0
    %2543 = vmatpush.msra.mxu0 0.0
    %2544 = vmatpush.msra.mxu0 0.0
    %2545 = vmatpush.msra.mxu0 0.0
    %2546 = vmatpush.msra.mxu0 0.0
    %2547 = vmatpush.msra.mxu0 0.0
    %2548 = vmatpush.msra.mxu0 0.0
    %2549 = vmatpush.msra.mxu0 %v2489
    %2550 = vmatmul.f32.gmra.mxu0 %v2480
    %v2551 = vpop.f32.mrf.mxu0
    %v2552 = vadd.f32 0.0, %v2551
    %2553 = vdwg.mxu0
    %2554 = vmatpush.msra.mxu0 0.0
    %2555 = vmatpush.msra.mxu0 0.0
    %2556 = vmatpush.msra.mxu0 0.0
    %2557 = vmatpush.msra.mxu0 0.0
    %2558 = vmatpush.msra.mxu0 0.0
    %2559 = vmatpush.msra.mxu0 0.0
    %2560 = vmatpush.msra.mxu0 0.0
    %2561 = vmatpush.msra.mxu0 0.0
    %2562 = vmatpush.msra.mxu0 0.0
    %2563 = vmatpush.msra.mxu0 0.0
    %2564 = vmatpush.msra.mxu0 0.0
    %2565 = vmatpush.msra.mxu0 0.0
    %2566 = vmatpush.msra.mxu0 0.0
    %2567 = vmatpush.msra.mxu0 0.0
    %2568 = vmatpush.msra.mxu0 0.0
    %2569 = vmatpush.msra.mxu0 %v2492
    %2570 = vmatmul.f32.gmra.mxu0 %v2480
    %v2571 = vpop.f32.mrf.mxu0
    %v2572 = vadd.f32 0.0, %v2571
    %2573 = vdwg.mxu0
    %v2574 = vadd.f32 %v2389, %v2512
    %v2575 = vadd.f32 %v2409, %v2532
    %v2576 = vadd.f32 %v2429, %v2552
    %v2577 = vadd.f32 %v2449, %v2572
    %2578 = vrot.lane.b32.xlu0 %v2144, 1
    %v2579 = vpop.permute.xlu0 %2578
    %2580 = vrot.lane.b32.xlu0 %v2164, 1
    %v2581 = vpop.permute.xlu0 %2580
    %2582 = vrot.lane.b32.xlu0 %v2184, 1
    %v2583 = vpop.permute.xlu0 %2582
    %2584 = vrot.lane.b32.xlu0 %v2204, 1
    %v2585 = vpop.permute.xlu0 %2584
    %v2586 = vsel %vm947, %v2583, %v2585
    %v2587 = vsel %vm947, %v2581, %v2583
    %v2588 = vsel %vm947, %v2579, %v2581
    %v2589 = vsel %vm947, %v2585, %v2579
    %v2590 = vld [vmem:[%s952] sm:$0xf]
    %v2592 = vperm.slane %v2590, 0
    %v2593 = vperm.slane %v2590, 1
    %v2594 = vperm.slane %v2590, 2
    %v2595 = vperm.slane %v2590, 3
    %v2600 = vmul.f32 %v2589, %v2592
    %v2601 = vmul.f32 %v2588, %v2593
    %v2602 = vmul.f32 %v2587, %v2594
    %v2603 = vmul.f32 %v2586, %v2595
    %s2604 = scalar_lea.vmem %s13, 12
    %v2605 = vld [vmem:[%s2604] sm:$0xf]
    %v2607 = vsel %vm618, %v2605, 0
    %v2610 = vsel %vm622, %v2600, 0
    %v2613 = vsel %vm622, %v2601, 0
    %v2616 = vsel %vm622, %v2602, 0
    %v2619 = vsel %vm622, %v2603, 0
    %2621 = vmatpush.msra.mxu0 0.0
    %2622 = vmatpush.msra.mxu0 0.0
    %2623 = vmatpush.msra.mxu0 0.0
    %2624 = vmatpush.msra.mxu0 0.0
    %2625 = vmatpush.msra.mxu0 0.0
    %2626 = vmatpush.msra.mxu0 0.0
    %2627 = vmatpush.msra.mxu0 0.0
    %2628 = vmatpush.msra.mxu0 0.0
    %2629 = vmatpush.msra.mxu0 0.0
    %2630 = vmatpush.msra.mxu0 0.0
    %2631 = vmatpush.msra.mxu0 0.0
    %2632 = vmatpush.msra.mxu0 0.0
    %2633 = vmatpush.msra.mxu0 0.0
    %2634 = vmatpush.msra.mxu0 0.0
    %2635 = vmatpush.msra.mxu0 0.0
    %2636 = vmatpush.msra.mxu0 %v2610
    %2637 = vmatmul.f32.gmra.mxu0 %v2607
    %v2638 = vpop.f32.mrf.mxu0
    %v2639 = vadd.f32 0.0, %v2638
    %2640 = vdwg.mxu0
    %2641 = vmatpush.msra.mxu0 0.0
    %2642 = vmatpush.msra.mxu0 0.0
    %2643 = vmatpush.msra.mxu0 0.0
    %2644 = vmatpush.msra.mxu0 0.0
    %2645 = vmatpush.msra.mxu0 0.0
    %2646 = vmatpush.msra.mxu0 0.0
    %2647 = vmatpush.msra.mxu0 0.0
    %2648 = vmatpush.msra.mxu0 0.0
    %2649 = vmatpush.msra.mxu0 0.0
    %2650 = vmatpush.msra.mxu0 0.0
    %2651 = vmatpush.msra.mxu0 0.0
    %2652 = vmatpush.msra.mxu0 0.0
    %2653 = vmatpush.msra.mxu0 0.0
    %2654 = vmatpush.msra.mxu0 0.0
    %2655 = vmatpush.msra.mxu0 0.0
    %2656 = vmatpush.msra.mxu0 %v2613
    %2657 = vmatmul.f32.gmra.mxu0 %v2607
    %v2658 = vpop.f32.mrf.mxu0
    %v2659 = vadd.f32 0.0, %v2658
    %2660 = vdwg.mxu0
    %2661 = vmatpush.msra.mxu0 0.0
    %2662 = vmatpush.msra.mxu0 0.0
    %2663 = vmatpush.msra.mxu0 0.0
    %2664 = vmatpush.msra.mxu0 0.0
    %2665 = vmatpush.msra.mxu0 0.0
    %2666 = vmatpush.msra.mxu0 0.0
    %2667 = vmatpush.msra.mxu0 0.0
    %2668 = vmatpush.msra.mxu0 0.0
    %2669 = vmatpush.msra.mxu0 0.0
    %2670 = vmatpush.msra.mxu0 0.0
    %2671 = vmatpush.msra.mxu0 0.0
    %2672 = vmatpush.msra.mxu0 0.0
    %2673 = vmatpush.msra.mxu0 0.0
    %2674 = vmatpush.msra.mxu0 0.0
    %2675 = vmatpush.msra.mxu0 0.0
    %2676 = vmatpush.msra.mxu0 %v2616
    %2677 = vmatmul.f32.gmra.mxu0 %v2607
    %v2678 = vpop.f32.mrf.mxu0
    %v2679 = vadd.f32 0.0, %v2678
    %2680 = vdwg.mxu0
    %2681 = vmatpush.msra.mxu0 0.0
    %2682 = vmatpush.msra.mxu0 0.0
    %2683 = vmatpush.msra.mxu0 0.0
    %2684 = vmatpush.msra.mxu0 0.0
    %2685 = vmatpush.msra.mxu0 0.0
    %2686 = vmatpush.msra.mxu0 0.0
    %2687 = vmatpush.msra.mxu0 0.0
    %2688 = vmatpush.msra.mxu0 0.0
    %2689 = vmatpush.msra.mxu0 0.0
    %2690 = vmatpush.msra.mxu0 0.0
    %2691 = vmatpush.msra.mxu0 0.0
    %2692 = vmatpush.msra.mxu0 0.0
    %2693 = vmatpush.msra.mxu0 0.0
    %2694 = vmatpush.msra.mxu0 0.0
    %2695 = vmatpush.msra.mxu0 0.0
    %2696 = vmatpush.msra.mxu0 %v2619
    %2697 = vmatmul.f32.gmra.mxu0 %v2607
    %v2698 = vpop.f32.mrf.mxu0
    %v2699 = vadd.f32 0.0, %v2698
    %2700 = vdwg.mxu0
    %v2701 = vadd.f32 %v2574, %v2639
    %v2702 = vadd.f32 %v2575, %v2659
    %v2703 = vadd.f32 %v2576, %v2679
    %v2704 = vadd.f32 %v2577, %v2699
    %v2705 = vld [vmem:[%s1068] sm:$0xf]
    %v2707 = vperm.slane %v2705, 0
    %v2708 = vperm.slane %v2705, 1
    %v2709 = vperm.slane %v2705, 2
    %v2710 = vperm.slane %v2705, 3
    %v2715 = vmul.f32 %v2144, %v2707
    %v2716 = vmul.f32 %v2164, %v2708
    %v2717 = vmul.f32 %v2184, %v2709
    %v2718 = vmul.f32 %v2204, %v2710
    %s2719 = scalar_lea.vmem %s13, 16
    %v2720 = vld [vmem:[%s2719] sm:$0xf]
    %v2722 = vsel %vm618, %v2720, 0
    %v2725 = vsel %vm622, %v2715, 0
    %v2728 = vsel %vm622, %v2716, 0
    %v2731 = vsel %vm622, %v2717, 0
    %v2734 = vsel %vm622, %v2718, 0
    %2736 = vmatpush.msra.mxu0 0.0
    %2737 = vmatpush.msra.mxu0 0.0
    %2738 = vmatpush.msra.mxu0 0.0
    %2739 = vmatpush.msra.mxu0 0.0
    %2740 = vmatpush.msra.mxu0 0.0
    %2741 = vmatpush.msra.mxu0 0.0
    %2742 = vmatpush.msra.mxu0 0.0
    %2743 = vmatpush.msra.mxu0 0.0
    %2744 = vmatpush.msra.mxu0 0.0
    %2745 = vmatpush.msra.mxu0 0.0
    %2746 = vmatpush.msra.mxu0 0.0
    %2747 = vmatpush.msra.mxu0 0.0
    %2748 = vmatpush.msra.mxu0 0.0
    %2749 = vmatpush.msra.mxu0 0.0
    %2750 = vmatpush.msra.mxu0 0.0
    %2751 = vmatpush.msra.mxu0 %v2725
    %2752 = vmatmul.f32.gmra.mxu0 %v2722
    %v2753 = vpop.f32.mrf.mxu0
    %v2754 = vadd.f32 0.0, %v2753
    %2755 = vdwg.mxu0
    %2756 = vmatpush.msra.mxu0 0.0
    %2757 = vmatpush.msra.mxu0 0.0
    %2758 = vmatpush.msra.mxu0 0.0
    %2759 = vmatpush.msra.mxu0 0.0
    %2760 = vmatpush.msra.mxu0 0.0
    %2761 = vmatpush.msra.mxu0 0.0
    %2762 = vmatpush.msra.mxu0 0.0
    %2763 = vmatpush.msra.mxu0 0.0
    %2764 = vmatpush.msra.mxu0 0.0
    %2765 = vmatpush.msra.mxu0 0.0
    %2766 = vmatpush.msra.mxu0 0.0
    %2767 = vmatpush.msra.mxu0 0.0
    %2768 = vmatpush.msra.mxu0 0.0
    %2769 = vmatpush.msra.mxu0 0.0
    %2770 = vmatpush.msra.mxu0 0.0
    %2771 = vmatpush.msra.mxu0 %v2728
    %2772 = vmatmul.f32.gmra.mxu0 %v2722
    %v2773 = vpop.f32.mrf.mxu0
    %v2774 = vadd.f32 0.0, %v2773
    %2775 = vdwg.mxu0
    %2776 = vmatpush.msra.mxu0 0.0
    %2777 = vmatpush.msra.mxu0 0.0
    %2778 = vmatpush.msra.mxu0 0.0
    %2779 = vmatpush.msra.mxu0 0.0
    %2780 = vmatpush.msra.mxu0 0.0
    %2781 = vmatpush.msra.mxu0 0.0
    %2782 = vmatpush.msra.mxu0 0.0
    %2783 = vmatpush.msra.mxu0 0.0
    %2784 = vmatpush.msra.mxu0 0.0
    %2785 = vmatpush.msra.mxu0 0.0
    %2786 = vmatpush.msra.mxu0 0.0
    %2787 = vmatpush.msra.mxu0 0.0
    %2788 = vmatpush.msra.mxu0 0.0
    %2789 = vmatpush.msra.mxu0 0.0
    %2790 = vmatpush.msra.mxu0 0.0
    %2791 = vmatpush.msra.mxu0 %v2731
    %2792 = vmatmul.f32.gmra.mxu0 %v2722
    %v2793 = vpop.f32.mrf.mxu0
    %v2794 = vadd.f32 0.0, %v2793
    %2795 = vdwg.mxu0
    %2796 = vmatpush.msra.mxu0 0.0
    %2797 = vmatpush.msra.mxu0 0.0
    %2798 = vmatpush.msra.mxu0 0.0
    %2799 = vmatpush.msra.mxu0 0.0
    %2800 = vmatpush.msra.mxu0 0.0
    %2801 = vmatpush.msra.mxu0 0.0
    %2802 = vmatpush.msra.mxu0 0.0
    %2803 = vmatpush.msra.mxu0 0.0
    %2804 = vmatpush.msra.mxu0 0.0
    %2805 = vmatpush.msra.mxu0 0.0
    %2806 = vmatpush.msra.mxu0 0.0
    %2807 = vmatpush.msra.mxu0 0.0
    %2808 = vmatpush.msra.mxu0 0.0
    %2809 = vmatpush.msra.mxu0 0.0
    %2810 = vmatpush.msra.mxu0 0.0
    %2811 = vmatpush.msra.mxu0 %v2734
    %2812 = vmatmul.f32.gmra.mxu0 %v2722
    %v2813 = vpop.f32.mrf.mxu0
    %v2814 = vadd.f32 0.0, %v2813
    %2815 = vdwg.mxu0
    %v2816 = vadd.f32 %v2701, %v2754
    %v2817 = vadd.f32 %v2702, %v2774
    %v2818 = vadd.f32 %v2703, %v2794
    %v2819 = vadd.f32 %v2704, %v2814
    %2820 = vrot.lane.b32.xlu0 %v2144, 127
    %v2821 = vpop.permute.xlu0 %2820
    %2822 = vrot.lane.b32.xlu0 %v2164, 127
    %v2823 = vpop.permute.xlu0 %2822
    %2824 = vrot.lane.b32.xlu0 %v2184, 127
    %v2825 = vpop.permute.xlu0 %2824
    %2826 = vrot.lane.b32.xlu0 %v2204, 127
    %v2827 = vpop.permute.xlu0 %2826
    %v2828 = vsel %vm1192, %v2825, %v2827
    %v2829 = vsel %vm1192, %v2823, %v2825
    %v2830 = vsel %vm1192, %v2821, %v2823
    %v2831 = vsel %vm1192, %v2827, %v2821
    %v2832 = vld [vmem:[%s1197] sm:$0xf]
    %v2834 = vperm.slane %v2832, 0
    %v2835 = vperm.slane %v2832, 1
    %v2836 = vperm.slane %v2832, 2
    %v2837 = vperm.slane %v2832, 3
    %v2842 = vmul.f32 %v2830, %v2834
    %v2843 = vmul.f32 %v2829, %v2835
    %v2844 = vmul.f32 %v2828, %v2836
    %v2845 = vmul.f32 %v2831, %v2837
    %s2846 = scalar_lea.vmem %s13, 20
    %v2847 = vld [vmem:[%s2846] sm:$0xf]
    %v2849 = vsel %vm618, %v2847, 0
    %v2852 = vsel %vm622, %v2842, 0
    %v2855 = vsel %vm622, %v2843, 0
    %v2858 = vsel %vm622, %v2844, 0
    %v2861 = vsel %vm622, %v2845, 0
    %2863 = vmatpush.msra.mxu0 0.0
    %2864 = vmatpush.msra.mxu0 0.0
    %2865 = vmatpush.msra.mxu0 0.0
    %2866 = vmatpush.msra.mxu0 0.0
    %2867 = vmatpush.msra.mxu0 0.0
    %2868 = vmatpush.msra.mxu0 0.0
    %2869 = vmatpush.msra.mxu0 0.0
    %2870 = vmatpush.msra.mxu0 0.0
    %2871 = vmatpush.msra.mxu0 0.0
    %2872 = vmatpush.msra.mxu0 0.0
    %2873 = vmatpush.msra.mxu0 0.0
    %2874 = vmatpush.msra.mxu0 0.0
    %2875 = vmatpush.msra.mxu0 0.0
    %2876 = vmatpush.msra.mxu0 0.0
    %2877 = vmatpush.msra.mxu0 0.0
    %2878 = vmatpush.msra.mxu0 %v2852
    %2879 = vmatmul.f32.gmra.mxu0 %v2849
    %v2880 = vpop.f32.mrf.mxu0
    %v2881 = vadd.f32 0.0, %v2880
    %2882 = vdwg.mxu0
    %2883 = vmatpush.msra.mxu0 0.0
    %2884 = vmatpush.msra.mxu0 0.0
    %2885 = vmatpush.msra.mxu0 0.0
    %2886 = vmatpush.msra.mxu0 0.0
    %2887 = vmatpush.msra.mxu0 0.0
    %2888 = vmatpush.msra.mxu0 0.0
    %2889 = vmatpush.msra.mxu0 0.0
    %2890 = vmatpush.msra.mxu0 0.0
    %2891 = vmatpush.msra.mxu0 0.0
    %2892 = vmatpush.msra.mxu0 0.0
    %2893 = vmatpush.msra.mxu0 0.0
    %2894 = vmatpush.msra.mxu0 0.0
    %2895 = vmatpush.msra.mxu0 0.0
    %2896 = vmatpush.msra.mxu0 0.0
    %2897 = vmatpush.msra.mxu0 0.0
    %2898 = vmatpush.msra.mxu0 %v2855
    %2899 = vmatmul.f32.gmra.mxu0 %v2849
    %v2900 = vpop.f32.mrf.mxu0
    %v2901 = vadd.f32 0.0, %v2900
    %2902 = vdwg.mxu0
    %2903 = vmatpush.msra.mxu0 0.0
    %2904 = vmatpush.msra.mxu0 0.0
    %2905 = vmatpush.msra.mxu0 0.0
    %2906 = vmatpush.msra.mxu0 0.0
    %2907 = vmatpush.msra.mxu0 0.0
    %2908 = vmatpush.msra.mxu0 0.0
    %2909 = vmatpush.msra.mxu0 0.0
    %2910 = vmatpush.msra.mxu0 0.0
    %2911 = vmatpush.msra.mxu0 0.0
    %2912 = vmatpush.msra.mxu0 0.0
    %2913 = vmatpush.msra.mxu0 0.0
    %2914 = vmatpush.msra.mxu0 0.0
    %2915 = vmatpush.msra.mxu0 0.0
    %2916 = vmatpush.msra.mxu0 0.0
    %2917 = vmatpush.msra.mxu0 0.0
    %2918 = vmatpush.msra.mxu0 %v2858
    %2919 = vmatmul.f32.gmra.mxu0 %v2849
    %v2920 = vpop.f32.mrf.mxu0
    %v2921 = vadd.f32 0.0, %v2920
    %2922 = vdwg.mxu0
    %2923 = vmatpush.msra.mxu0 0.0
    %2924 = vmatpush.msra.mxu0 0.0
    %2925 = vmatpush.msra.mxu0 0.0
    %2926 = vmatpush.msra.mxu0 0.0
    %2927 = vmatpush.msra.mxu0 0.0
    %2928 = vmatpush.msra.mxu0 0.0
    %2929 = vmatpush.msra.mxu0 0.0
    %2930 = vmatpush.msra.mxu0 0.0
    %2931 = vmatpush.msra.mxu0 0.0
    %2932 = vmatpush.msra.mxu0 0.0
    %2933 = vmatpush.msra.mxu0 0.0
    %2934 = vmatpush.msra.mxu0 0.0
    %2935 = vmatpush.msra.mxu0 0.0
    %2936 = vmatpush.msra.mxu0 0.0
    %2937 = vmatpush.msra.mxu0 0.0
    %2938 = vmatpush.msra.mxu0 %v2861
    %2939 = vmatmul.f32.gmra.mxu0 %v2849
    %v2940 = vpop.f32.mrf.mxu0
    %v2941 = vadd.f32 0.0, %v2940
    %2942 = vdwg.mxu0
    %v2943 = vadd.f32 %v2816, %v2881
    %v2944 = vadd.f32 %v2817, %v2901
    %v2945 = vadd.f32 %v2818, %v2921
    %v2946 = vadd.f32 %v2819, %v2941
    %2947 = vrot.lane.b32.xlu0 %v2144, 113
    %v2948 = vpop.permute.xlu0 %2947
    %2949 = vrot.lane.b32.xlu0 %v2164, 113
    %v2950 = vpop.permute.xlu0 %2949
    %2951 = vrot.lane.b32.xlu0 %v2184, 113
    %v2952 = vpop.permute.xlu0 %2951
    %2953 = vrot.lane.b32.xlu0 %v2204, 113
    %v2954 = vpop.permute.xlu0 %2953
    %v2955 = vsel %vm1321, %v2952, %v2954
    %v2956 = vsel %vm1321, %v2950, %v2952
    %v2957 = vsel %vm1321, %v2948, %v2950
    %v2958 = vsel %vm1321, %v2954, %v2948
    %v2959 = vld [vmem:[%s1326] sm:$0xf]
    %v2961 = vperm.slane %v2959, 0
    %v2962 = vperm.slane %v2959, 1
    %v2963 = vperm.slane %v2959, 2
    %v2964 = vperm.slane %v2959, 3
    %v2969 = vmul.f32 %v2957, %v2961
    %v2970 = vmul.f32 %v2956, %v2962
    %v2971 = vmul.f32 %v2955, %v2963
    %v2972 = vmul.f32 %v2958, %v2964
    %s2973 = scalar_lea.vmem %s13, 24
    %v2974 = vld [vmem:[%s2973] sm:$0xf]
    %v2976 = vsel %vm618, %v2974, 0
    %v2979 = vsel %vm622, %v2969, 0
    %v2982 = vsel %vm622, %v2970, 0
    %v2985 = vsel %vm622, %v2971, 0
    %v2988 = vsel %vm622, %v2972, 0
    %2990 = vmatpush.msra.mxu0 0.0
    %2991 = vmatpush.msra.mxu0 0.0
    %2992 = vmatpush.msra.mxu0 0.0
    %2993 = vmatpush.msra.mxu0 0.0
    %2994 = vmatpush.msra.mxu0 0.0
    %2995 = vmatpush.msra.mxu0 0.0
    %2996 = vmatpush.msra.mxu0 0.0
    %2997 = vmatpush.msra.mxu0 0.0
    %2998 = vmatpush.msra.mxu0 0.0
    %2999 = vmatpush.msra.mxu0 0.0
    %3000 = vmatpush.msra.mxu0 0.0
    %3001 = vmatpush.msra.mxu0 0.0
    %3002 = vmatpush.msra.mxu0 0.0
    %3003 = vmatpush.msra.mxu0 0.0
    %3004 = vmatpush.msra.mxu0 0.0
    %3005 = vmatpush.msra.mxu0 %v2979
    %3006 = vmatmul.f32.gmra.mxu0 %v2976
    %v3007 = vpop.f32.mrf.mxu0
    %v3008 = vadd.f32 0.0, %v3007
    %3009 = vdwg.mxu0
    %3010 = vmatpush.msra.mxu0 0.0
    %3011 = vmatpush.msra.mxu0 0.0
    %3012 = vmatpush.msra.mxu0 0.0
    %3013 = vmatpush.msra.mxu0 0.0
    %3014 = vmatpush.msra.mxu0 0.0
    %3015 = vmatpush.msra.mxu0 0.0
    %3016 = vmatpush.msra.mxu0 0.0
    %3017 = vmatpush.msra.mxu0 0.0
    %3018 = vmatpush.msra.mxu0 0.0
    %3019 = vmatpush.msra.mxu0 0.0
    %3020 = vmatpush.msra.mxu0 0.0
    %3021 = vmatpush.msra.mxu0 0.0
    %3022 = vmatpush.msra.mxu0 0.0
    %3023 = vmatpush.msra.mxu0 0.0
    %3024 = vmatpush.msra.mxu0 0.0
    %3025 = vmatpush.msra.mxu0 %v2982
    %3026 = vmatmul.f32.gmra.mxu0 %v2976
    %v3027 = vpop.f32.mrf.mxu0
    %v3028 = vadd.f32 0.0, %v3027
    %3029 = vdwg.mxu0
    %3030 = vmatpush.msra.mxu0 0.0
    %3031 = vmatpush.msra.mxu0 0.0
    %3032 = vmatpush.msra.mxu0 0.0
    %3033 = vmatpush.msra.mxu0 0.0
    %3034 = vmatpush.msra.mxu0 0.0
    %3035 = vmatpush.msra.mxu0 0.0
    %3036 = vmatpush.msra.mxu0 0.0
    %3037 = vmatpush.msra.mxu0 0.0
    %3038 = vmatpush.msra.mxu0 0.0
    %3039 = vmatpush.msra.mxu0 0.0
    %3040 = vmatpush.msra.mxu0 0.0
    %3041 = vmatpush.msra.mxu0 0.0
    %3042 = vmatpush.msra.mxu0 0.0
    %3043 = vmatpush.msra.mxu0 0.0
    %3044 = vmatpush.msra.mxu0 0.0
    %3045 = vmatpush.msra.mxu0 %v2985
    %3046 = vmatmul.f32.gmra.mxu0 %v2976
    %v3047 = vpop.f32.mrf.mxu0
    %v3048 = vadd.f32 0.0, %v3047
    %3049 = vdwg.mxu0
    %3050 = vmatpush.msra.mxu0 0.0
    %3051 = vmatpush.msra.mxu0 0.0
    %3052 = vmatpush.msra.mxu0 0.0
    %3053 = vmatpush.msra.mxu0 0.0
    %3054 = vmatpush.msra.mxu0 0.0
    %3055 = vmatpush.msra.mxu0 0.0
    %3056 = vmatpush.msra.mxu0 0.0
    %3057 = vmatpush.msra.mxu0 0.0
    %3058 = vmatpush.msra.mxu0 0.0
    %3059 = vmatpush.msra.mxu0 0.0
    %3060 = vmatpush.msra.mxu0 0.0
    %3061 = vmatpush.msra.mxu0 0.0
    %3062 = vmatpush.msra.mxu0 0.0
    %3063 = vmatpush.msra.mxu0 0.0
    %3064 = vmatpush.msra.mxu0 0.0
    %3065 = vmatpush.msra.mxu0 %v2988
    %3066 = vmatmul.f32.gmra.mxu0 %v2976
    %v3067 = vpop.f32.mrf.mxu0
    %v3068 = vadd.f32 0.0, %v3067
    %3069 = vdwg.mxu0
    %v3070 = vadd.f32 %v2943, %v3008
    %v3071 = vadd.f32 %v2944, %v3028
    %v3072 = vadd.f32 %v2945, %v3048
    %v3073 = vadd.f32 %v2946, %v3068
    %3074 = vrot.lane.b32.xlu0 %v2144, 112
    %v3075 = vpop.permute.xlu0 %3074
    %3076 = vrot.lane.b32.xlu0 %v2164, 112
    %v3077 = vpop.permute.xlu0 %3076
    %3078 = vrot.lane.b32.xlu0 %v2184, 112
    %v3079 = vpop.permute.xlu0 %3078
    %3080 = vrot.lane.b32.xlu0 %v2204, 112
    %v3081 = vpop.permute.xlu0 %3080
    %v3082 = vsel %vm1450, %v3079, %v3081
    %v3083 = vsel %vm1450, %v3077, %v3079
    %v3084 = vsel %vm1450, %v3075, %v3077
    %v3085 = vsel %vm1450, %v3081, %v3075
    %v3086 = vld [vmem:[%s1455] sm:$0xf]
    %v3088 = vperm.slane %v3086, 0
    %v3089 = vperm.slane %v3086, 1
    %v3090 = vperm.slane %v3086, 2
    %v3091 = vperm.slane %v3086, 3
    %v3096 = vmul.f32 %v3084, %v3088
    %v3097 = vmul.f32 %v3083, %v3089
    %v3098 = vmul.f32 %v3082, %v3090
    %v3099 = vmul.f32 %v3085, %v3091
    %s3100 = scalar_lea.vmem %s13, 28
    %v3101 = vld [vmem:[%s3100] sm:$0xf]
    %v3103 = vsel %vm618, %v3101, 0
    %v3106 = vsel %vm622, %v3096, 0
    %v3109 = vsel %vm622, %v3097, 0
    %v3112 = vsel %vm622, %v3098, 0
    %v3115 = vsel %vm622, %v3099, 0
    %3117 = vmatpush.msra.mxu0 0.0
    %3118 = vmatpush.msra.mxu0 0.0
    %3119 = vmatpush.msra.mxu0 0.0
    %3120 = vmatpush.msra.mxu0 0.0
    %3121 = vmatpush.msra.mxu0 0.0
    %3122 = vmatpush.msra.mxu0 0.0
    %3123 = vmatpush.msra.mxu0 0.0
    %3124 = vmatpush.msra.mxu0 0.0
    %3125 = vmatpush.msra.mxu0 0.0
    %3126 = vmatpush.msra.mxu0 0.0
    %3127 = vmatpush.msra.mxu0 0.0
    %3128 = vmatpush.msra.mxu0 0.0
    %3129 = vmatpush.msra.mxu0 0.0
    %3130 = vmatpush.msra.mxu0 0.0
    %3131 = vmatpush.msra.mxu0 0.0
    %3132 = vmatpush.msra.mxu0 %v3106
    %3133 = vmatmul.f32.gmra.mxu0 %v3103
    %v3134 = vpop.f32.mrf.mxu0
    %v3135 = vadd.f32 0.0, %v3134
    %3136 = vdwg.mxu0
    %3137 = vmatpush.msra.mxu0 0.0
    %3138 = vmatpush.msra.mxu0 0.0
    %3139 = vmatpush.msra.mxu0 0.0
    %3140 = vmatpush.msra.mxu0 0.0
    %3141 = vmatpush.msra.mxu0 0.0
    %3142 = vmatpush.msra.mxu0 0.0
    %3143 = vmatpush.msra.mxu0 0.0
    %3144 = vmatpush.msra.mxu0 0.0
    %3145 = vmatpush.msra.mxu0 0.0
    %3146 = vmatpush.msra.mxu0 0.0
    %3147 = vmatpush.msra.mxu0 0.0
    %3148 = vmatpush.msra.mxu0 0.0
    %3149 = vmatpush.msra.mxu0 0.0
    %3150 = vmatpush.msra.mxu0 0.0
    %3151 = vmatpush.msra.mxu0 0.0
    %3152 = vmatpush.msra.mxu0 %v3109
    %3153 = vmatmul.f32.gmra.mxu0 %v3103
    %v3154 = vpop.f32.mrf.mxu0
    %v3155 = vadd.f32 0.0, %v3154
    %3156 = vdwg.mxu0
    %3157 = vmatpush.msra.mxu0 0.0
    %3158 = vmatpush.msra.mxu0 0.0
    %3159 = vmatpush.msra.mxu0 0.0
    %3160 = vmatpush.msra.mxu0 0.0
    %3161 = vmatpush.msra.mxu0 0.0
    %3162 = vmatpush.msra.mxu0 0.0
    %3163 = vmatpush.msra.mxu0 0.0
    %3164 = vmatpush.msra.mxu0 0.0
    %3165 = vmatpush.msra.mxu0 0.0
    %3166 = vmatpush.msra.mxu0 0.0
    %3167 = vmatpush.msra.mxu0 0.0
    %3168 = vmatpush.msra.mxu0 0.0
    %3169 = vmatpush.msra.mxu0 0.0
    %3170 = vmatpush.msra.mxu0 0.0
    %3171 = vmatpush.msra.mxu0 0.0
    %3172 = vmatpush.msra.mxu0 %v3112
    %3173 = vmatmul.f32.gmra.mxu0 %v3103
    %v3174 = vpop.f32.mrf.mxu0
    %v3175 = vadd.f32 0.0, %v3174
    %3176 = vdwg.mxu0
    %3177 = vmatpush.msra.mxu0 0.0
    %3178 = vmatpush.msra.mxu0 0.0
    %3179 = vmatpush.msra.mxu0 0.0
    %3180 = vmatpush.msra.mxu0 0.0
    %3181 = vmatpush.msra.mxu0 0.0
    %3182 = vmatpush.msra.mxu0 0.0
    %3183 = vmatpush.msra.mxu0 0.0
    %3184 = vmatpush.msra.mxu0 0.0
    %3185 = vmatpush.msra.mxu0 0.0
    %3186 = vmatpush.msra.mxu0 0.0
    %3187 = vmatpush.msra.mxu0 0.0
    %3188 = vmatpush.msra.mxu0 0.0
    %3189 = vmatpush.msra.mxu0 0.0
    %3190 = vmatpush.msra.mxu0 0.0
    %3191 = vmatpush.msra.mxu0 0.0
    %3192 = vmatpush.msra.mxu0 %v3115
    %3193 = vmatmul.f32.gmra.mxu0 %v3103
    %v3194 = vpop.f32.mrf.mxu0
    %v3195 = vadd.f32 0.0, %v3194
    %3196 = vdwg.mxu0
    %v3197 = vadd.f32 %v3070, %v3135
    %v3198 = vadd.f32 %v3071, %v3155
    %v3199 = vadd.f32 %v3072, %v3175
    %v3200 = vadd.f32 %v3073, %v3195
    %3201 = vrot.lane.b32.xlu0 %v2144, 111
    %v3202 = vpop.permute.xlu0 %3201
    %3203 = vrot.lane.b32.xlu0 %v2164, 111
    %v3204 = vpop.permute.xlu0 %3203
    %3205 = vrot.lane.b32.xlu0 %v2184, 111
    %v3206 = vpop.permute.xlu0 %3205
    %3207 = vrot.lane.b32.xlu0 %v2204, 111
    %v3208 = vpop.permute.xlu0 %3207
    %v3209 = vsel %vm1579, %v3206, %v3208
    %v3210 = vsel %vm1579, %v3204, %v3206
    %v3211 = vsel %vm1579, %v3202, %v3204
    %v3212 = vsel %vm1579, %v3208, %v3202
    %v3213 = vld [vmem:[%s1584] sm:$0xf]
    %v3215 = vperm.slane %v3213, 0
    %v3216 = vperm.slane %v3213, 1
    %v3217 = vperm.slane %v3213, 2
    %v3218 = vperm.slane %v3213, 3
    %v3223 = vmul.f32 %v3211, %v3215
    %v3224 = vmul.f32 %v3210, %v3216
    %v3225 = vmul.f32 %v3209, %v3217
    %v3226 = vmul.f32 %v3212, %v3218
    %s3227 = scalar_lea.vmem %s13, 32
    %v3228 = vld [vmem:[%s3227] sm:$0xf]
    %v3230 = vsel %vm618, %v3228, 0
    %v3233 = vsel %vm622, %v3223, 0
    %v3236 = vsel %vm622, %v3224, 0
    %v3239 = vsel %vm622, %v3225, 0
    %v3242 = vsel %vm622, %v3226, 0
    %3244 = vmatpush.msra.mxu0 0.0
    %3245 = vmatpush.msra.mxu0 0.0
    %3246 = vmatpush.msra.mxu0 0.0
    %3247 = vmatpush.msra.mxu0 0.0
    %3248 = vmatpush.msra.mxu0 0.0
    %3249 = vmatpush.msra.mxu0 0.0
    %3250 = vmatpush.msra.mxu0 0.0
    %3251 = vmatpush.msra.mxu0 0.0
    %3252 = vmatpush.msra.mxu0 0.0
    %3253 = vmatpush.msra.mxu0 0.0
    %3254 = vmatpush.msra.mxu0 0.0
    %3255 = vmatpush.msra.mxu0 0.0
    %3256 = vmatpush.msra.mxu0 0.0
    %3257 = vmatpush.msra.mxu0 0.0
    %3258 = vmatpush.msra.mxu0 0.0
    %3259 = vmatpush.msra.mxu0 %v3233
    %3260 = vmatmul.f32.gmra.mxu0 %v3230
    %v3261 = vpop.f32.mrf.mxu0
    %v3262 = vadd.f32 0.0, %v3261
    %3263 = vdwg.mxu0
    %3264 = vmatpush.msra.mxu0 0.0
    %3265 = vmatpush.msra.mxu0 0.0
    %3266 = vmatpush.msra.mxu0 0.0
    %3267 = vmatpush.msra.mxu0 0.0
    %3268 = vmatpush.msra.mxu0 0.0
    %3269 = vmatpush.msra.mxu0 0.0
    %3270 = vmatpush.msra.mxu0 0.0
    %3271 = vmatpush.msra.mxu0 0.0
    %3272 = vmatpush.msra.mxu0 0.0
    %3273 = vmatpush.msra.mxu0 0.0
    %3274 = vmatpush.msra.mxu0 0.0
    %3275 = vmatpush.msra.mxu0 0.0
    %3276 = vmatpush.msra.mxu0 0.0
    %3277 = vmatpush.msra.mxu0 0.0
    %3278 = vmatpush.msra.mxu0 0.0
    %3279 = vmatpush.msra.mxu0 %v3236
    %3280 = vmatmul.f32.gmra.mxu0 %v3230
    %v3281 = vpop.f32.mrf.mxu0
    %v3282 = vadd.f32 0.0, %v3281
    %3283 = vdwg.mxu0
    %3284 = vmatpush.msra.mxu0 0.0
    %3285 = vmatpush.msra.mxu0 0.0
    %3286 = vmatpush.msra.mxu0 0.0
    %3287 = vmatpush.msra.mxu0 0.0
    %3288 = vmatpush.msra.mxu0 0.0
    %3289 = vmatpush.msra.mxu0 0.0
    %3290 = vmatpush.msra.mxu0 0.0
    %3291 = vmatpush.msra.mxu0 0.0
    %3292 = vmatpush.msra.mxu0 0.0
    %3293 = vmatpush.msra.mxu0 0.0
    %3294 = vmatpush.msra.mxu0 0.0
    %3295 = vmatpush.msra.mxu0 0.0
    %3296 = vmatpush.msra.mxu0 0.0
    %3297 = vmatpush.msra.mxu0 0.0
    %3298 = vmatpush.msra.mxu0 0.0
    %3299 = vmatpush.msra.mxu0 %v3239
    %3300 = vmatmul.f32.gmra.mxu0 %v3230
    %v3301 = vpop.f32.mrf.mxu0
    %v3302 = vadd.f32 0.0, %v3301
    %3303 = vdwg.mxu0
    %3304 = vmatpush.msra.mxu0 0.0
    %3305 = vmatpush.msra.mxu0 0.0
    %3306 = vmatpush.msra.mxu0 0.0
    %3307 = vmatpush.msra.mxu0 0.0
    %3308 = vmatpush.msra.mxu0 0.0
    %3309 = vmatpush.msra.mxu0 0.0
    %3310 = vmatpush.msra.mxu0 0.0
    %3311 = vmatpush.msra.mxu0 0.0
    %3312 = vmatpush.msra.mxu0 0.0
    %3313 = vmatpush.msra.mxu0 0.0
    %3314 = vmatpush.msra.mxu0 0.0
    %3315 = vmatpush.msra.mxu0 0.0
    %3316 = vmatpush.msra.mxu0 0.0
    %3317 = vmatpush.msra.mxu0 0.0
    %3318 = vmatpush.msra.mxu0 0.0
    %3319 = vmatpush.msra.mxu0 %v3242
    %3320 = vmatmul.f32.gmra.mxu0 %v3230
    %v3321 = vpop.f32.mrf.mxu0
    %v3322 = vadd.f32 0.0, %v3321
    %3323 = vdwg.mxu0
    %v3324 = vadd.f32 %v3197, %v3262
    %v3325 = vadd.f32 %v3198, %v3282
    %v3326 = vadd.f32 %v3199, %v3302
    %v3327 = vadd.f32 %v3200, %v3322
    %v3328 = vld [vmem:[%s14] sm:$0xf]
    %3330 = vset.pattern.permute.xlu0 0
    %3331 = vperm.xlu0 %3330, %v3328
    %v3332 = vpop.permute.xlu0 %3331
    %v3334 = vadd.f32 %v3324, %v3332
    %v3335 = vadd.f32 %v3325, %v3332
    %v3336 = vadd.f32 %v3326, %v3332
    %v3337 = vadd.f32 %v3327, %v3332
    %v3338 = vmax.f32 %v3334, 0.0
    %v3339 = vmax.f32 %v3335, 0.0
    %v3340 = vmax.f32 %v3336, 0.0
    %v3341 = vmax.f32 %v3337, 0.0
    %v3346 = vrot.slane %v3339, 4
    %v3347 = vrot.slane %v3341, 4
    %v3348 = vsel %vm622, %v3338, %v3346
    %v3349 = vsel %vm622, %v3340, %v3347
    %3352 = vst [vmem:[#allocation8] sm:$0xff] %v3348
    %3353 = vst [vmem:[#allocation8 + $0x8] sm:$0xff] %v3349
    // Predicated region
    $region74: #{tpu_custom_call.1} parent=1 // pred_check
      _
    $region75: #{tpu_custom_call.1} parent=1 // pred_check_branch
      %3355 = sbr.rel (0) target = $region77
    $region76: #{tpu_custom_call.1} parent=1 // pred_region
      %3357 = vsyncadd [#allocation4], 0
      %s3359 = sshll.u32 [#allocation7], 4
      %s3360 = int_to_ptr.vmem [resolvable:$true] %s3359
      %s3361 = sshll.u32 %s16, 4
      %s3362 = int_to_ptr.hbm [resolvable:$true] %s3361
      %3364 = dma.vmem_to_hbm [thread:$0]  %s3360, 256, %s3362, [#allocation4]
    $region77: #{tpu_custom_call.1} parent=1 // pred_fallthru
      _
    // Predicated region
    $region78: #{tpu_custom_call.1} parent=1 // pred_check
      _
    $region79: #{tpu_custom_call.1} parent=1 // pred_check_branch
      %3366 = sbr.rel (0) target = $region81
    $region80: #{tpu_custom_call.1} parent=1 // pred_region
      %3368 = vsyncadd [#allocation9], 0
      %s3370 = sshll.u32 [#allocation8], 4
      %s3371 = int_to_ptr.vmem [resolvable:$true] %s3370
      %s3372 = sshll.u32 %s17, 4
      %s3373 = int_to_ptr.hbm [resolvable:$true] %s3372
      %3375 = dma.vmem_to_hbm [thread:$0]  %s3371, 256, %s3373, [#allocation9]
    $region81: #{tpu_custom_call.1} parent=1 // pred_fallthru
      _
    // Predicated region
    $region82: #{tpu_custom_call.1} parent=1 // pred_check
      _
    $region83: #{tpu_custom_call.1} parent=1 // pred_check_branch
      %3377 = sbr.rel (0) target = $region85
    $region84: #{tpu_custom_call.1} parent=1 // pred_region
      %3379 = dma.done [#allocation4], 256
    $region85: #{tpu_custom_call.1} parent=1 // pred_fallthru
      _
    // Predicated region
    $region86: #{tpu_custom_call.1} parent=1 // pred_check
      _
    $region87: #{tpu_custom_call.1} parent=1 // pred_check_branch
      %3381 = sbr.rel (0) target = $region89
    $region88: #{tpu_custom_call.1} parent=1 // pred_region
      %3383 = dma.done [#allocation9], 256
    $region89: #{tpu_custom_call.1} parent=1 // pred_fallthru
      _
    %3384 = vsyncpa [#allocation3], 1
    %3385 = vsyncpa [#allocation6], 1
    %3386 = vsyncpa [#allocation4], 1
    %3387 = vsyncpa [#allocation9], 1

</llo_original>
